<compile_context>
chip_gen: v6e
topology: v6e:2x2x1
jax: 0.10.0
libtpu: 0.0.40
codegen_flags: <defaults>
</compile_context>

<pallas_src>
import functools

import numpy as np
import jax
import jax.numpy as jnp
from jax.experimental import pallas as pl
from jax.experimental.pallas import tpu as pltpu


# ----------------------------------------------------------------------------
# Kernel
# ----------------------------------------------------------------------------
def _gmm_min_nll_kernel(pose_ref, pall_ref, out_ref, xaug_ref, *, dim, consts):
    """out[b] = min_m ( 0.5*(pose_b - mu_m)^T P_m (pose_b - mu_m) - log w_m )."""
    tb, d_pad = xaug_ref.shape
    num_g = pall_ref.shape[0]

    # Build x_aug = [pose, 1, 0...0] entirely in VMEM (no HBM materialization).
    lane = jax.lax.broadcasted_iota(jnp.int32, (tb, d_pad), 1)
    xaug_ref[...] = (lane == dim).astype(jnp.float32)   # zeros + the '1' lane
    xaug_ref[:, :dim] = pose_ref[...]                   # masked store of the pose
    x_aug = xaug_ref[...]

    # One lane-aligned (TB,128)x(128,128) dot per component, consumed
    # immediately so the (TB, M*128) intermediate never materializes.
    vals = []
    for g in range(num_g):
        y = jnp.dot(x_aug, pall_ref[g],
                    preferred_element_type=jnp.float32,
                    precision=jax.lax.Precision.HIGHEST)
        s = jnp.sum(y * x_aug, axis=-1, keepdims=True)   # (TB, 1) f32
        # Exact (host-f64) constant 0.5*mu^T P mu - log(w), added on the VPU so
        # the large-magnitude term never rides through the MXU operand path.
        vals.append(0.5 * s + consts[g])

    # Balanced pairwise minimum tree (short epilogue dependency chain).
    while len(vals) > 1:
        nxt = [jnp.minimum(vals[i], vals[i + 1])
               for i in range(0, len(vals) - 1, 2)]
        if len(vals) % 2:
            nxt.append(vals[-1])
        vals = nxt

    # (TB, 1) narrow store; total output is only 4*B bytes so lane-density of
    # the out block is not worth restructuring for.
    out_ref[...] = vals[0]


# ----------------------------------------------------------------------------
# One-time (per-model) host-side preprocessing — hoisted off the hot path.
# ----------------------------------------------------------------------------
def prepare_max_mixture_prior(means, precisions, nll_weights, d_pad=128):
    """Pack per-component quadratic forms (host-side, float64) into one slab.

    Returns (p_all: (M, d_pad, d_pad) f32, consts: tuple[float], dim).
    """
    means = np.asarray(means, dtype=np.float64)
    precisions = np.asarray(precisions, dtype=np.float64)
    log_w = np.log(np.asarray(nll_weights, dtype=np.float64)).reshape(-1)
    num_g, dim = means.shape
    assert dim + 1 <= d_pad, "d_pad must leave room for the augmented '1' lane"

    p_all = np.zeros((num_g, d_pad, d_pad), dtype=np.float32)
    consts = []
    for m in range(num_g):
        prec, mu = precisions[m], means[m]
        p_all[m, :dim, :dim] = prec
        p_all[m, dim, :dim] = -(prec + prec.T) @ mu
        # Large constant kept OUT of the matmul; added in f32 on the VPU.
        consts.append(float(0.5 * (mu @ prec @ mu) - log_w[m]))
    return jnp.asarray(p_all), tuple(consts), dim


def _round_up(x, m):
    return ((x + m - 1) // m) * m


# ----------------------------------------------------------------------------
# Forward factory (returns a jitted callable; per-call work is one pallas_call
# plus at most a tiny (B,69) row pad).
# ----------------------------------------------------------------------------
def make_max_mixture_prior(means, precisions, nll_weights, d_pad=128):
    """Build a jitted Pallas-backed equivalent of MaxMixturePrior.forward."""
    p_all, consts, dim = prepare_max_mixture_prior(
        means, precisions, nll_weights, d_pad=d_pad)
    num_g = p_all.shape[0]
    kernel = functools.partial(_gmm_min_nll_kernel, dim=dim, consts=consts)

    @jax.jit
    def forward(pose, betas):
        del betas  # unused in the merged path, same as the reference module
        assert pose.shape[1] == dim
        batch = pose.shape[0]
        x = pose.astype(jnp.float32)

        # Batch tiling: sublane-align to 8, cap the tile at 512 rows, and for
        # batch >= 16 pick the tile so the 'parallel' grid axis has >= 2 steps
        # (so both TensorCores on v7x get work).
        b8 = _round_up(batch, 8)
        if b8 <= 8:
            tb = b8
        else:
            tb = min(512, _round_up(-(-b8 // 2), 8))
        b_pad = _round_up(b8, tb)
        if b_pad != batch:
            # Only the raw (B,69) rows are padded; the 128-lane augmented pose
            # is built in-kernel, so no (B,128) HBM materialization.
            x = jnp.pad(x, ((0, b_pad - batch), (0, 0)))

        out = pl.pallas_call(
            kernel,
            out_shape=jax.ShapeDtypeStruct((b_pad, 1), jnp.float32),
            grid_spec=pltpu.PrefetchScalarGridSpec(
                num_scalar_prefetch=0,
                grid=(b_pad // tb,),
                in_specs=[
                    # Raw pose tile; full last dim (=69) is a legal block dim.
                    pl.BlockSpec((tb, dim), lambda i: (i, 0)),
                    # Resident packed-Q slab; constant index_map -> one buffer.
                    pl.BlockSpec((num_g, d_pad, d_pad), lambda i: (0, 0, 0),
                                 pipeline_mode=pl.Buffered(1)),
                ],
                out_specs=pl.BlockSpec((tb, 1), lambda i: (i, 0)),
                scratch_shapes=[pltpu.VMEM((tb, d_pad), jnp.float32)],
            ),
            compiler_params=pltpu.CompilerParams(
                dimension_semantics=("parallel",)),
        )(x, p_all)
        return out[:batch, 0]   # (B,), matches torch.min(..., dim=1).values

    return forward


# ----------------------------------------------------------------------------
# Synthetic GMM parameters (deterministic stand-in for the pickled prior).
# ----------------------------------------------------------------------------
def build_synthetic_gmm_params(num_gaussians=8, dim=69, seed=0):
    rng = np.random.RandomState(seed)

    means = rng.randn(num_gaussians, dim).astype(np.float32)

    # Symmetric positive-definite covariances: I + 0.1 * A A^T / dim
    A = rng.randn(num_gaussians, dim, dim).astype(np.float32)
    covs = np.stack([np.eye(dim, dtype=np.float32) + 0.1 * (A[m] @ A[m].T) / dim
                     for m in range(num_gaussians)]).astype(np.float32)
    precisions = np.stack([np.linalg.inv(c) for c in covs]).astype(np.float32)

    raw_w = rng.rand(num_gaussians).astype(np.float64) + 0.1
    weights = raw_w / raw_w.sum()

    sqrdets = np.array([np.sqrt(np.linalg.det(c.astype(np.float64))) for c in covs])
    const = (2 * np.pi) ** (69 / 2.0)  # hardcoded 69, as in the reference module
    nll_weights = (weights / (const * (sqrdets / sqrdets.min()))).astype(np.float32)

    return means, covs, precisions, nll_weights


def reference_forward_np(pose, means, precisions, nll_weights):
    """float64 numpy replica of merged_log_likelihood for validation."""
    pose = np.asarray(pose, np.float64)
    means = np.asarray(means, np.float64)
    precisions = np.asarray(precisions, np.float64)
    nll_weights = np.asarray(nll_weights, np.float64)
    diff = pose[:, None, :] - means[None, :, :]                  # (B, M, D)
    pd = np.einsum('mij,bmj->bmi', precisions, diff)             # (B, M, D)
    quad = np.sum(pd * diff, axis=-1)                            # (B, M)
    ll = 0.5 * quad - np.log(nll_weights)[None, :]               # (B, M)
    return ll.min(axis=1)                                        # (B,)


if __name__ == "__main__":
    NUM_GAUSSIANS = 8
    DIM = 69          # random_var_dim (SMPL body pose)
    BATCH = 8
    NUM_BETAS = 10

    means, covs, precisions, nll_weights = build_synthetic_gmm_params(
        num_gaussians=NUM_GAUSSIANS, dim=DIM, seed=0)

    # One-time packing of the prior (equivalent to the module's buffers).
    forward = make_max_mixture_prior(means, precisions, nll_weights, d_pad=128)

    key = jax.random.PRNGKey(0)
    k_pose, k_betas = jax.random.split(key)
    pose = jax.random.normal(k_pose, (BATCH, DIM), dtype=jnp.float32)
    betas = jax.random.normal(k_betas, (BATCH, NUM_BETAS), dtype=jnp.float32)

    out = forward(pose, betas)
    out = jax.block_until_ready(out)

    ref = reference_forward_np(np.asarray(pose), means, precisions, nll_weights)
    np.testing.assert_allclose(np.asarray(out), ref, rtol=1e-4, atol=1e-3)

    print("KERNEL_OK")
</pallas_src>

<mosaic_0001>
module attributes {stable_mosaic.version = 11 : i64} {
  func.func @_gmm_min_nll_kernel(%arg0: i32, %arg1: memref<8x69xf32, #tpu.memory_space<vmem>>, %arg2: memref<8x128x128xf32, #tpu.memory_space<vmem>>, %arg3: memref<8x1xf32, #tpu.memory_space<vmem>>, %arg4: memref<8x128xf32, #tpu.memory_space<vmem>>) attributes {dimension_semantics = [#tpu.dimension_semantics<parallel>], iteration_bounds = array<i64: 1>, scalar_prefetch = 0 : i64, scratch_operands = 1 : i64, tpu.core_type = #tpu.core_type<tc>, window_params = [{transform_indices = @transform_0, window_bounds = array<i64: 8, 69>}, {pipeline_mode = #tpu.pipeline_mode<synchronous>, transform_indices = @transform_1, window_bounds = array<i64: 8, 128, 128>}, {transform_indices = @transform_2, window_bounds = array<i64: 8, 1>}]} {
    %0 = tpu.iota {dimensions = array<i32: 1>} : vector<8x128xi32>
    %c69_i32 = arith.constant 69 : i32
    %1 = vector.broadcast %c69_i32 : i32 to vector<8x128xi32>
    %2 = arith.cmpi eq, %0, %1 : vector<8x128xi32>
    %3 = arith.extui %2 : vector<8x128xi1> to vector<8x128xi32>
    %4 = arith.sitofp %3 : vector<8x128xi32> to vector<8x128xf32>
    %c0 = arith.constant 0 : index
    %c0_0 = arith.constant 0 : index
    %5 = vector.load %arg4[%c0, %c0_0] : memref<8x128xf32, #tpu.memory_space<vmem>>, vector<8x128xf32>
    tpu.vector_store %arg4[%c0, %c0_0], %4 {strides = array<i32>} : memref<8x128xf32, #tpu.memory_space<vmem>>, vector<8x128xf32>,
    %c0_1 = arith.constant 0 : index
    %c0_2 = arith.constant 0 : index
    %6 = vector.load %arg1[%c0_1, %c0_2] : memref<8x69xf32, #tpu.memory_space<vmem>>, vector<8x69xf32>
    %c0_3 = arith.constant 0 : index
    %c0_4 = arith.constant 0 : index
    %7 = vector.load %arg4[%c0_3, %c0_4] : memref<8x128xf32, #tpu.memory_space<vmem>>, vector<8x69xf32>
    tpu.vector_store %arg4[%c0_3, %c0_4], %6 {strides = array<i32>} : memref<8x128xf32, #tpu.memory_space<vmem>>, vector<8x69xf32>,
    %c0_5 = arith.constant 0 : index
    %c0_6 = arith.constant 0 : index
    %8 = vector.load %arg4[%c0_5, %c0_6] : memref<8x128xf32, #tpu.memory_space<vmem>>, vector<8x128xf32>
    %c0_7 = arith.constant 0 : index
    %c0_8 = arith.constant 0 : index
    %c0_9 = arith.constant 0 : index
    %9 = vector.load %arg2[%c0_7, %c0_8, %c0_9] : memref<8x128x128xf32, #tpu.memory_space<vmem>>, vector<1x128x128xf32>
    %10 = vector.shape_cast %9 : vector<1x128x128xf32> to vector<128x128xf32>
    %cst = arith.constant dense<0.000000e+00> : vector<8x128xf32>
    %11 = tpu.matmul %8, %10, %cst {dimension_numbers = #tpu.dot_dimension_numbers<[1], [0], [0], [1], [0, 0, 1, 1], [], []>, precision = #tpu.contract_precision<fp32>} : vector<8x128xf32>, vector<128x128xf32>, vector<8x128xf32> -> vector<8x128xf32>
    %12 = arith.mulf %11, %8 : vector<8x128xf32>
    %cst_10 = arith.constant dense<0.000000e+00> : vector<8xf32>
    %13 = vector.multi_reduction <add>, %12, %cst_10 [1] : vector<8x128xf32> to vector<8xf32>
    %14 = vector.shape_cast %13 : vector<8xf32> to vector<8x1xf32>
    %cst_11 = arith.constant 5.000000e-01 : f32
    %15 = vector.broadcast %cst_11 : f32 to vector<8x1xf32>
    %16 = arith.mulf %15, %14 : vector<8x1xf32>
    %cst_12 = arith.constant 100.647766 : f32
    %17 = vector.broadcast %cst_12 : f32 to vector<8x1xf32>
    %18 = arith.addf %16, %17 : vector<8x1xf32>
    %c1 = arith.constant 1 : index
    %c0_13 = arith.constant 0 : index
    %c0_14 = arith.constant 0 : index
    %19 = vector.load %arg2[%c1, %c0_13, %c0_14] : memref<8x128x128xf32, #tpu.memory_space<vmem>>, vector<1x128x128xf32>
    %20 = vector.shape_cast %19 : vector<1x128x128xf32> to vector<128x128xf32>
    %cst_15 = arith.constant dense<0.000000e+00> : vector<8x128xf32>
    %21 = tpu.matmul %8, %20, %cst_15 {dimension_numbers = #tpu.dot_dimension_numbers<[1], [0], [0], [1], [0, 0, 1, 1], [], []>, precision = #tpu.contract_precision<fp32>} : vector<8x128xf32>, vector<128x128xf32>, vector<8x128xf32> -> vector<8x128xf32>
    %22 = arith.mulf %21, %8 : vector<8x128xf32>
    %cst_16 = arith.constant dense<0.000000e+00> : vector<8xf32>
    %23 = vector.multi_reduction <add>, %22, %cst_16 [1] : vector<8x128xf32> to vector<8xf32>
    %24 = vector.shape_cast %23 : vector<8xf32> to vector<8x1xf32>
    %cst_17 = arith.constant 5.000000e-01 : f32
    %25 = vector.broadcast %cst_17 : f32 to vector<8x1xf32>
    %26 = arith.mulf %25, %24 : vector<8x1xf32>
    %cst_18 = arith.constant 96.2857437 : f32
    %27 = vector.broadcast %cst_18 : f32 to vector<8x1xf32>
    %28 = arith.addf %26, %27 : vector<8x1xf32>
    %c2 = arith.constant 2 : index
    %c0_19 = arith.constant 0 : index
    %c0_20 = arith.constant 0 : index
    %29 = vector.load %arg2[%c2, %c0_19, %c0_20] : memref<8x128x128xf32, #tpu.memory_space<vmem>>, vector<1x128x128xf32>
    %30 = vector.shape_cast %29 : vector<1x128x128xf32> to vector<128x128xf32>
    %cst_21 = arith.constant dense<0.000000e+00> : vector<8x128xf32>
    %31 = tpu.matmul %8, %30, %cst_21 {dimension_numbers = #tpu.dot_dimension_numbers<[1], [0], [0], [1], [0, 0, 1, 1], [], []>, precision = #tpu.contract_precision<fp32>} : vector<8x128xf32>, vector<128x128xf32>, vector<8x128xf32> -> vector<8x128xf32>
    %32 = arith.mulf %31, %8 : vector<8x128xf32>
    %cst_22 = arith.constant dense<0.000000e+00> : vector<8xf32>
    %33 = vector.multi_reduction <add>, %32, %cst_22 [1] : vector<8x128xf32> to vector<8xf32>
    %34 = vector.shape_cast %33 : vector<8xf32> to vector<8x1xf32>
    %cst_23 = arith.constant 5.000000e-01 : f32
    %35 = vector.broadcast %cst_23 : f32 to vector<8x1xf32>
    %36 = arith.mulf %35, %34 : vector<8x1xf32>
    %cst_24 = arith.constant 98.0354309 : f32
    %37 = vector.broadcast %cst_24 : f32 to vector<8x1xf32>
    %38 = arith.addf %36, %37 : vector<8x1xf32>
    %c3 = arith.constant 3 : index
    %c0_25 = arith.constant 0 : index
    %c0_26 = arith.constant 0 : index
    %39 = vector.load %arg2[%c3, %c0_25, %c0_26] : memref<8x128x128xf32, #tpu.memory_space<vmem>>, vector<1x128x128xf32>
    %40 = vector.shape_cast %39 : vector<1x128x128xf32> to vector<128x128xf32>
    %cst_27 = arith.constant dense<0.000000e+00> : vector<8x128xf32>
    %41 = tpu.matmul %8, %40, %cst_27 {dimension_numbers = #tpu.dot_dimension_numbers<[1], [0], [0], [1], [0, 0, 1, 1], [], []>, precision = #tpu.contract_precision<fp32>} : vector<8x128xf32>, vector<128x128xf32>, vector<8x128xf32> -> vector<8x128xf32>
    %42 = arith.mulf %41, %8 : vector<8x128xf32>
    %cst_28 = arith.constant dense<0.000000e+00> : vector<8xf32>
    %43 = vector.multi_reduction <add>, %42, %cst_28 [1] : vector<8x128xf32> to vector<8xf32>
    %44 = vector.shape_cast %43 : vector<8xf32> to vector<8x1xf32>
    %cst_29 = arith.constant 5.000000e-01 : f32
    %45 = vector.broadcast %cst_29 : f32 to vector<8x1xf32>
    %46 = arith.mulf %45, %44 : vector<8x1xf32>
    %cst_30 = arith.constant 92.4731826 : f32
    %47 = vector.broadcast %cst_30 : f32 to vector<8x1xf32>
    %48 = arith.addf %46, %47 : vector<8x1xf32>
    %c4 = arith.constant 4 : index
    %c0_31 = arith.constant 0 : index
    %c0_32 = arith.constant 0 : index
    %49 = vector.load %arg2[%c4, %c0_31, %c0_32] : memref<8x128x128xf32, #tpu.memory_space<vmem>>, vector<1x128x128xf32>
    %50 = vector.shape_cast %49 : vector<1x128x128xf32> to vector<128x128xf32>
    %cst_33 = arith.constant dense<0.000000e+00> : vector<8x128xf32>
    %51 = tpu.matmul %8, %50, %cst_33 {dimension_numbers = #tpu.dot_dimension_numbers<[1], [0], [0], [1], [0, 0, 1, 1], [], []>, precision = #tpu.contract_precision<fp32>} : vector<8x128xf32>, vector<128x128xf32>, vector<8x128xf32> -> vector<8x128xf32>
    %52 = arith.mulf %51, %8 : vector<8x128xf32>
    %cst_34 = arith.constant dense<0.000000e+00> : vector<8xf32>
    %53 = vector.multi_reduction <add>, %52, %cst_34 [1] : vector<8x128xf32> to vector<8xf32>
    %54 = vector.shape_cast %53 : vector<8xf32> to vector<8x1xf32>
    %cst_35 = arith.constant 5.000000e-01 : f32
    %55 = vector.broadcast %cst_35 : f32 to vector<8x1xf32>
    %56 = arith.mulf %55, %54 : vector<8x1xf32>
    %cst_36 = arith.constant 98.5934448 : f32
    %57 = vector.broadcast %cst_36 : f32 to vector<8x1xf32>
    %58 = arith.addf %56, %57 : vector<8x1xf32>
    %c5 = arith.constant 5 : index
    %c0_37 = arith.constant 0 : index
    %c0_38 = arith.constant 0 : index
    %59 = vector.load %arg2[%c5, %c0_37, %c0_38] : memref<8x128x128xf32, #tpu.memory_space<vmem>>, vector<1x128x128xf32>
    %60 = vector.shape_cast %59 : vector<1x128x128xf32> to vector<128x128xf32>
    %cst_39 = arith.constant dense<0.000000e+00> : vector<8x128xf32>
    %61 = tpu.matmul %8, %60, %cst_39 {dimension_numbers = #tpu.dot_dimension_numbers<[1], [0], [0], [1], [0, 0, 1, 1], [], []>, precision = #tpu.contract_precision<fp32>} : vector<8x128xf32>, vector<128x128xf32>, vector<8x128xf32> -> vector<8x128xf32>
    %62 = arith.mulf %61, %8 : vector<8x128xf32>
    %cst_40 = arith.constant dense<0.000000e+00> : vector<8xf32>
    %63 = vector.multi_reduction <add>, %62, %cst_40 [1] : vector<8x128xf32> to vector<8xf32>
    %64 = vector.shape_cast %63 : vector<8xf32> to vector<8x1xf32>
    %cst_41 = arith.constant 5.000000e-01 : f32
    %65 = vector.broadcast %cst_41 : f32 to vector<8x1xf32>
    %66 = arith.mulf %65, %64 : vector<8x1xf32>
    %cst_42 = arith.constant 90.714447 : f32
    %67 = vector.broadcast %cst_42 : f32 to vector<8x1xf32>
    %68 = arith.addf %66, %67 : vector<8x1xf32>
    %c6 = arith.constant 6 : index
    %c0_43 = arith.constant 0 : index
    %c0_44 = arith.constant 0 : index
    %69 = vector.load %arg2[%c6, %c0_43, %c0_44] : memref<8x128x128xf32, #tpu.memory_space<vmem>>, vector<1x128x128xf32>
    %70 = vector.shape_cast %69 : vector<1x128x128xf32> to vector<128x128xf32>
    %cst_45 = arith.constant dense<0.000000e+00> : vector<8x128xf32>
    %71 = tpu.matmul %8, %70, %cst_45 {dimension_numbers = #tpu.dot_dimension_numbers<[1], [0], [0], [1], [0, 0, 1, 1], [], []>, precision = #tpu.contract_precision<fp32>} : vector<8x128xf32>, vector<128x128xf32>, vector<8x128xf32> -> vector<8x128xf32>
    %72 = arith.mulf %71, %8 : vector<8x128xf32>
    %cst_46 = arith.constant dense<0.000000e+00> : vector<8xf32>
    %73 = vector.multi_reduction <add>, %72, %cst_46 [1] : vector<8x128xf32> to vector<8xf32>
    %74 = vector.shape_cast %73 : vector<8xf32> to vector<8x1xf32>
    %cst_47 = arith.constant 5.000000e-01 : f32
    %75 = vector.broadcast %cst_47 : f32 to vector<8x1xf32>
    %76 = arith.mulf %75, %74 : vector<8x1xf32>
    %cst_48 = arith.constant 98.5580215 : f32
    %77 = vector.broadcast %cst_48 : f32 to vector<8x1xf32>
    %78 = arith.addf %76, %77 : vector<8x1xf32>
    %c7 = arith.constant 7 : index
    %c0_49 = arith.constant 0 : index
    %c0_50 = arith.constant 0 : index
    %79 = vector.load %arg2[%c7, %c0_49, %c0_50] : memref<8x128x128xf32, #tpu.memory_space<vmem>>, vector<1x128x128xf32>
    %80 = vector.shape_cast %79 : vector<1x128x128xf32> to vector<128x128xf32>
    %cst_51 = arith.constant dense<0.000000e+00> : vector<8x128xf32>
    %81 = tpu.matmul %8, %80, %cst_51 {dimension_numbers = #tpu.dot_dimension_numbers<[1], [0], [0], [1], [0, 0, 1, 1], [], []>, precision = #tpu.contract_precision<fp32>} : vector<8x128xf32>, vector<128x128xf32>, vector<8x128xf32> -> vector<8x128xf32>
    %82 = arith.mulf %81, %8 : vector<8x128xf32>
    %cst_52 = arith.constant dense<0.000000e+00> : vector<8xf32>
    %83 = vector.multi_reduction <add>, %82, %cst_52 [1] : vector<8x128xf32> to vector<8xf32>
    %84 = vector.shape_cast %83 : vector<8xf32> to vector<8x1xf32>
    %cst_53 = arith.constant 5.000000e-01 : f32
    %85 = vector.broadcast %cst_53 : f32 to vector<8x1xf32>
    %86 = arith.mulf %85, %84 : vector<8x1xf32>
    %cst_54 = arith.constant 103.849152 : f32
    %87 = vector.broadcast %cst_54 : f32 to vector<8x1xf32>
    %88 = arith.addf %86, %87 : vector<8x1xf32>
    %89 = arith.minimumf %18, %28 : vector<8x1xf32>
    %90 = arith.minimumf %38, %48 : vector<8x1xf32>
    %91 = arith.minimumf %58, %68 : vector<8x1xf32>
    %92 = arith.minimumf %78, %88 : vector<8x1xf32>
    %93 = arith.minimumf %89, %90 : vector<8x1xf32>
    %94 = arith.minimumf %91, %92 : vector<8x1xf32>
    %95 = arith.minimumf %93, %94 : vector<8x1xf32>
    %c0_55 = arith.constant 0 : index
    %c0_56 = arith.constant 0 : index
    %96 = vector.load %arg3[%c0_55, %c0_56] : memref<8x1xf32, #tpu.memory_space<vmem>>, vector<8x1xf32>
    tpu.vector_store %arg3[%c0_55, %c0_56], %95 {strides = array<i32>} : memref<8x1xf32, #tpu.memory_space<vmem>>, vector<8x1xf32>,
    return
  }
  func.func @transform_0(%arg0: i32) -> (i32, i32) {
    %c0_i32 = arith.constant 0 : i32
    %c0_i32_0 = arith.constant 0 : i32
    return %arg0, %c0_i32 : i32, i32
  }
  func.func @transform_1(%arg0: i32) -> (i32, i32, i32) {
    %c0_i32 = arith.constant 0 : i32
    %c0_i32_0 = arith.constant 0 : i32
    %c0_i32_1 = arith.constant 0 : i32
    %c0_i32_2 = arith.constant 0 : i32
    return %c0_i32, %c0_i32_0, %c0_i32_1 : i32, i32, i32
  }
  func.func @transform_2(%arg0: i32) -> (i32, i32) {
    %c0_i32 = arith.constant 0 : i32
    %c0_i32_0 = arith.constant 0 : i32
    return %arg0, %c0_i32 : i32, i32
  }
}

</mosaic_0001>

<llo_original>
// kernel: forward.1
$region0: #{forward.1}
  #allocation0 [shape = 'u32[]', space=smem, size = 0x4, offset = 0x4, fixed_abs, tag = 'smem constant byte address 0x4 - core index']
  #allocation1 [shape = 'u32[144,128]{1,0:T(1,128)}', space=vmem, size = 0x12000, scoped, tag = 'internal scratch']
  #allocation2 [shape = 'f32[8,128]{1,0:T(8,128)}', space=vmem, size = 0x1000, scoped, tag = 'scratch operand']
  %s0 = inlined_call_operand.hbm [shape: f32[8,69], index: 0, kind: input, shape index: {}]
  %s1 = inlined_call_operand.hbm [shape: f32[8,128,128], index: 1, kind: input, shape index: {}]
  %s2 = inlined_call_operand.vmem [shape: f32[8,1], index: 2, kind: output, shape index: {}]
  %s3 = sld [smem:[#allocation0]]
  $region26: #{forward.1} parent=0
    _
  %s5 = ssub.s32 1, %s3
  %s6 = scalar_select 0, %s5, %s3
  $region1: #{forward.1} parent=0
    #allocation3 [shape = 'u8[4096]{0}', space=vmem, size = 0x1000, scoped, tag = 'input window, operand 0, single buffered']
    #allocation4 [shape = 's32[1]{0}', space=sflag, size = 0x4, scoped, tag = 'scoped memory for forward.1']
    #allocation5 [shape = 'u8[524288]{0}', space=vmem, size = 0x80000, scoped, tag = 'input window, operand 1, single buffered']
    #allocation6 [shape = 's32[1]{0}', space=sflag, size = 0x4, scoped, tag = 'scoped memory for forward.1']
    %7 = vsyncpa [#allocation4], 0
    %8 = vsyncpa [#allocation6], 0
    // Predicated region
    $region2: #{forward.1} parent=1 // pred_check
      _
    $region3: #{forward.1} parent=1 // pred_check_branch
      %10 = sbr.rel (0) target = $region5
    $region4: #{forward.1} parent=1 // pred_region
      %s12 = ssub.s32 128, 128
      %13 = vsyncadd [#allocation4], %s12
      %s15 = sshll.u32 [#allocation3], 4
      %s16 = int_to_ptr.vmem [resolvable:$true] %s15
      %18 = dma.hbm_to_vmem [thread:$0]  %s0, 128, %s16, [#allocation4]
    $region5: #{forward.1} parent=1 // pred_fallthru
      _
    // Predicated region
    $region6: #{forward.1} parent=1 // pred_check
      _
    $region7: #{forward.1} parent=1 // pred_check_branch
      %20 = sbr.rel (0) target = $region9
    $region8: #{forward.1} parent=1 // pred_region
      %s22 = ssub.s32 16384, 16384
      %23 = vsyncadd [#allocation6], %s22
      %s24 = sshll.u32 [#allocation5], 4
      %s25 = int_to_ptr.vmem [resolvable:$true] %s24
      %30 = dma.hbm_to_vmem [thread:$0]  %s1, 16384, %s25, [#allocation6], 128, 128, 8
    $region9: #{forward.1} parent=1 // pred_fallthru
      _
    // Predicated region
    $region10: #{forward.1} parent=1 // pred_check
      _
    $region11: #{forward.1} parent=1 // pred_check_branch
      %32 = sbr.rel (0) target = $region13
    $region12: #{forward.1} parent=1 // pred_region
      %33 = dma.done [#allocation4], 128
    $region13: #{forward.1} parent=1 // pred_fallthru
      _
    // Predicated region
    $region14: #{forward.1} parent=1 // pred_check
      _
    $region15: #{forward.1} parent=1 // pred_check_branch
      %35 = sbr.rel (0) target = $region17
    $region16: #{forward.1} parent=1 // pred_region
      %36 = dma.done [#allocation6], 16384
    $region17: #{forward.1} parent=1 // pred_fallthru
      _
    %v37 = vlaneseq
    %v38 = vand.u32 %v37, 127
    %vm39 = vcmp.eq.s32.totalorder %v38, 69
    %v40 = vsel %vm39, 1, 0
    %v41 = vcvt.s32.f32 %v40
    %42 = vst [vmem:[#allocation2] sm:$0xff] %v41
    %v43 = vld [vmem:[#allocation3] sm:$0xff]
    %vm44 = vcmask 564224
    %45 = vst.msk [vmem:[#allocation2] sm:$0xff] %vm44, %v43
    %v46 = vld [vmem:[#allocation2] sm:$0xff]
    %v47 = vld [vmem:[#allocation5] sm:$0xff]
    %v48 = vld [vmem:[#allocation5 + $0x8] sm:$0xff]
    %v49 = vld [vmem:[#allocation5 + $0x10] sm:$0xff]
    %v50 = vld [vmem:[#allocation5 + $0x18] sm:$0xff]
    %v51 = vld [vmem:[#allocation5 + $0x20] sm:$0xff]
    %v52 = vld [vmem:[#allocation5 + $0x28] sm:$0xff]
    %v53 = vld [vmem:[#allocation5 + $0x30] sm:$0xff]
    %v54 = vld [vmem:[#allocation5 + $0x38] sm:$0xff]
    %v55 = vld [vmem:[#allocation5 + $0x40] sm:$0xff]
    %v56 = vld [vmem:[#allocation5 + $0x48] sm:$0xff]
    %v57 = vld [vmem:[#allocation5 + $0x50] sm:$0xff]
    %v58 = vld [vmem:[#allocation5 + $0x58] sm:$0xff]
    %v59 = vld [vmem:[#allocation5 + $0x60] sm:$0xff]
    %v60 = vld [vmem:[#allocation5 + $0x68] sm:$0xff]
    %v61 = vld [vmem:[#allocation5 + $0x70] sm:$0xff]
    %v62 = vld [vmem:[#allocation5 + $0x78] sm:$0xff]
    %63 = vmatprep.subr.mxu0 0.0
    %v64 = vand.u32 %v62, 4294901760
    %65 = vmatpush1.msra.mxu0 %v64
    %66 = vmatprep.subr.mxu0 0.0
    %v67 = vand.u32 %v61, 4294901760
    %68 = vmatpush1.msra.mxu0 %v67
    %69 = vmatprep.subr.mxu0 0.0
    %v70 = vand.u32 %v60, 4294901760
    %71 = vmatpush1.msra.mxu0 %v70
    %72 = vmatprep.subr.mxu0 0.0
    %v73 = vand.u32 %v59, 4294901760
    %74 = vmatpush1.msra.mxu0 %v73
    %75 = vmatprep.subr.mxu0 0.0
    %v76 = vand.u32 %v58, 4294901760
    %77 = vmatpush1.msra.mxu0 %v76
    %78 = vmatprep.subr.mxu0 0.0
    %v79 = vand.u32 %v57, 4294901760
    %80 = vmatpush1.msra.mxu0 %v79
    %81 = vmatprep.subr.mxu0 0.0
    %v82 = vand.u32 %v56, 4294901760
    %83 = vmatpush1.msra.mxu0 %v82
    %84 = vmatprep.subr.mxu0 0.0
    %v85 = vand.u32 %v55, 4294901760
    %86 = vmatpush1.msra.mxu0 %v85
    %87 = vmatprep.subr.mxu0 0.0
    %v88 = vand.u32 %v54, 4294901760
    %89 = vmatpush1.msra.mxu0 %v88
    %90 = vmatprep.subr.mxu0 0.0
    %v91 = vand.u32 %v53, 4294901760
    %92 = vmatpush1.msra.mxu0 %v91
    %93 = vmatprep.subr.mxu0 0.0
    %v94 = vand.u32 %v52, 4294901760
    %95 = vmatpush1.msra.mxu0 %v94
    %96 = vmatprep.subr.mxu0 0.0
    %v97 = vand.u32 %v51, 4294901760
    %98 = vmatpush1.msra.mxu0 %v97
    %99 = vmatprep.subr.mxu0 0.0
    %v100 = vand.u32 %v50, 4294901760
    %101 = vmatpush1.msra.mxu0 %v100
    %102 = vmatprep.subr.mxu0 0.0
    %v103 = vand.u32 %v49, 4294901760
    %104 = vmatpush1.msra.mxu0 %v103
    %105 = vmatprep.subr.mxu0 0.0
    %v106 = vand.u32 %v48, 4294901760
    %107 = vmatpush1.msra.mxu0 %v106
    %108 = vmatprep.subr.mxu0 0.0
    %v109 = vand.u32 %v47, 4294901760
    %110 = vmatpush1.msra.mxu0 %v109
    %111 = vmatprep.subr.mxu0 0.0
    %112 = vmatpush2.msra.mxu0 0.0
    %113 = vmatprep.subr.mxu0 0.0
    %114 = vmatpush2.msra.mxu0 0.0
    %115 = vmatprep.subr.mxu0 0.0
    %116 = vmatpush2.msra.mxu0 0.0
    %117 = vmatprep.subr.mxu0 0.0
    %118 = vmatpush2.msra.mxu0 0.0
    %119 = vmatprep.subr.mxu0 0.0
    %120 = vmatpush2.msra.mxu0 0.0
    %121 = vmatprep.subr.mxu0 0.0
    %122 = vmatpush2.msra.mxu0 0.0
    %123 = vmatprep.subr.mxu0 0.0
    %124 = vmatpush2.msra.mxu0 0.0
    %125 = vmatprep.subr.mxu0 0.0
    %126 = vmatpush2.msra.mxu0 0.0
    %127 = vmatprep.subr.mxu0 0.0
    %128 = vmatpush2.msra.mxu0 0.0
    %129 = vmatprep.subr.mxu0 0.0
    %130 = vmatpush2.msra.mxu0 0.0
    %131 = vmatprep.subr.mxu0 0.0
    %132 = vmatpush2.msra.mxu0 0.0
    %133 = vmatprep.subr.mxu0 0.0
    %134 = vmatpush2.msra.mxu0 0.0
    %135 = vmatprep.subr.mxu0 0.0
    %136 = vmatpush2.msra.mxu0 0.0
    %137 = vmatprep.subr.mxu0 0.0
    %138 = vmatpush2.msra.mxu0 0.0
    %139 = vmatprep.subr.mxu0 0.0
    %140 = vmatpush2.msra.mxu0 0.0
    %141 = vmatprep.subr.mxu0 0.0
    %142 = vmatpush2.msra.mxu0 0.0
    %143 = vmatprep.mubr.f32.mxu0 0.0
    %v144 = vand.u32 %v46, 4294901760
    %v145 = vsub.f32 %v46, %v144
    %v146 = vand.u32 %v145, 4294901760
    %v147 = vsub.f32 %v145, %v146
    %v148 = vand.u32 %v147, 4294901760
    %149 = vmatmul.mubr.f32.gmra.mxu0 %v148
    %v150 = vpop.f32.mrf.mxu0
    %v151 = vadd.f32 0.0, %v150
    %v152 = vpop.f32.mrf.mxu0
    %153 = vdwg.mxu0
    %154 = vmatprep.subr.mxu0 0.0
    %v155 = vand.u32 %v62, 4294901760
    %v156 = vsub.f32 %v62, %v155
    %v157 = vand.u32 %v156, 4294901760
    %v158 = vsub.f32 %v156, %v157
    %v159 = vand.u32 %v158, 4294901760
    %160 = vmatpush1.msra.mxu0 %v159
    %161 = vmatprep.subr.mxu0 0.0
    %v162 = vand.u32 %v61, 4294901760
    %v163 = vsub.f32 %v61, %v162
    %v164 = vand.u32 %v163, 4294901760
    %v165 = vsub.f32 %v163, %v164
    %v166 = vand.u32 %v165, 4294901760
    %167 = vmatpush1.msra.mxu0 %v166
    %168 = vmatprep.subr.mxu0 0.0
    %v169 = vand.u32 %v60, 4294901760
    %v170 = vsub.f32 %v60, %v169
    %v171 = vand.u32 %v170, 4294901760
    %v172 = vsub.f32 %v170, %v171
    %v173 = vand.u32 %v172, 4294901760
    %174 = vmatpush1.msra.mxu0 %v173
    %175 = vmatprep.subr.mxu0 0.0
    %v176 = vand.u32 %v59, 4294901760
    %v177 = vsub.f32 %v59, %v176
    %v178 = vand.u32 %v177, 4294901760
    %v179 = vsub.f32 %v177, %v178
    %v180 = vand.u32 %v179, 4294901760
    %181 = vmatpush1.msra.mxu0 %v180
    %182 = vmatprep.subr.mxu0 0.0
    %v183 = vand.u32 %v58, 4294901760
    %v184 = vsub.f32 %v58, %v183
    %v185 = vand.u32 %v184, 4294901760
    %v186 = vsub.f32 %v184, %v185
    %v187 = vand.u32 %v186, 4294901760
    %188 = vmatpush1.msra.mxu0 %v187
    %189 = vmatprep.subr.mxu0 0.0
    %v190 = vand.u32 %v57, 4294901760
    %v191 = vsub.f32 %v57, %v190
    %v192 = vand.u32 %v191, 4294901760
    %v193 = vsub.f32 %v191, %v192
    %v194 = vand.u32 %v193, 4294901760
    %195 = vmatpush1.msra.mxu0 %v194
    %196 = vmatprep.subr.mxu0 0.0
    %v197 = vand.u32 %v56, 4294901760
    %v198 = vsub.f32 %v56, %v197
    %v199 = vand.u32 %v198, 4294901760
    %v200 = vsub.f32 %v198, %v199
    %v201 = vand.u32 %v200, 4294901760
    %202 = vmatpush1.msra.mxu0 %v201
    %203 = vmatprep.subr.mxu0 0.0
    %v204 = vand.u32 %v55, 4294901760
    %v205 = vsub.f32 %v55, %v204
    %v206 = vand.u32 %v205, 4294901760
    %v207 = vsub.f32 %v205, %v206
    %v208 = vand.u32 %v207, 4294901760
    %209 = vmatpush1.msra.mxu0 %v208
    %210 = vmatprep.subr.mxu0 0.0
    %v211 = vand.u32 %v54, 4294901760
    %v212 = vsub.f32 %v54, %v211
    %v213 = vand.u32 %v212, 4294901760
    %v214 = vsub.f32 %v212, %v213
    %v215 = vand.u32 %v214, 4294901760
    %216 = vmatpush1.msra.mxu0 %v215
    %217 = vmatprep.subr.mxu0 0.0
    %v218 = vand.u32 %v53, 4294901760
    %v219 = vsub.f32 %v53, %v218
    %v220 = vand.u32 %v219, 4294901760
    %v221 = vsub.f32 %v219, %v220
    %v222 = vand.u32 %v221, 4294901760
    %223 = vmatpush1.msra.mxu0 %v222
    %224 = vmatprep.subr.mxu0 0.0
    %v225 = vand.u32 %v52, 4294901760
    %v226 = vsub.f32 %v52, %v225
    %v227 = vand.u32 %v226, 4294901760
    %v228 = vsub.f32 %v226, %v227
    %v229 = vand.u32 %v228, 4294901760
    %230 = vmatpush1.msra.mxu0 %v229
    %231 = vmatprep.subr.mxu0 0.0
    %v232 = vand.u32 %v51, 4294901760
    %v233 = vsub.f32 %v51, %v232
    %v234 = vand.u32 %v233, 4294901760
    %v235 = vsub.f32 %v233, %v234
    %v236 = vand.u32 %v235, 4294901760
    %237 = vmatpush1.msra.mxu0 %v236
    %238 = vmatprep.subr.mxu0 0.0
    %v239 = vand.u32 %v50, 4294901760
    %v240 = vsub.f32 %v50, %v239
    %v241 = vand.u32 %v240, 4294901760
    %v242 = vsub.f32 %v240, %v241
    %v243 = vand.u32 %v242, 4294901760
    %244 = vmatpush1.msra.mxu0 %v243
    %245 = vmatprep.subr.mxu0 0.0
    %v246 = vand.u32 %v49, 4294901760
    %v247 = vsub.f32 %v49, %v246
    %v248 = vand.u32 %v247, 4294901760
    %v249 = vsub.f32 %v247, %v248
    %v250 = vand.u32 %v249, 4294901760
    %251 = vmatpush1.msra.mxu0 %v250
    %252 = vmatprep.subr.mxu0 0.0
    %v253 = vand.u32 %v48, 4294901760
    %v254 = vsub.f32 %v48, %v253
    %v255 = vand.u32 %v254, 4294901760
    %v256 = vsub.f32 %v254, %v255
    %v257 = vand.u32 %v256, 4294901760
    %258 = vmatpush1.msra.mxu0 %v257
    %259 = vmatprep.subr.mxu0 0.0
    %v260 = vand.u32 %v47, 4294901760
    %v261 = vsub.f32 %v47, %v260
    %v262 = vand.u32 %v261, 4294901760
    %v263 = vsub.f32 %v261, %v262
    %v264 = vand.u32 %v263, 4294901760
    %265 = vmatpush1.msra.mxu0 %v264
    %266 = vmatprep.subr.mxu0 0.0
    %267 = vmatpush2.msra.mxu0 0.0
    %268 = vmatprep.subr.mxu0 0.0
    %269 = vmatpush2.msra.mxu0 0.0
    %270 = vmatprep.subr.mxu0 0.0
    %271 = vmatpush2.msra.mxu0 0.0
    %272 = vmatprep.subr.mxu0 0.0
    %273 = vmatpush2.msra.mxu0 0.0
    %274 = vmatprep.subr.mxu0 0.0
    %275 = vmatpush2.msra.mxu0 0.0
    %276 = vmatprep.subr.mxu0 0.0
    %277 = vmatpush2.msra.mxu0 0.0
    %278 = vmatprep.subr.mxu0 0.0
    %279 = vmatpush2.msra.mxu0 0.0
    %280 = vmatprep.subr.mxu0 0.0
    %281 = vmatpush2.msra.mxu0 0.0
    %282 = vmatprep.subr.mxu0 0.0
    %283 = vmatpush2.msra.mxu0 0.0
    %284 = vmatprep.subr.mxu0 0.0
    %285 = vmatpush2.msra.mxu0 0.0
    %286 = vmatprep.subr.mxu0 0.0
    %287 = vmatpush2.msra.mxu0 0.0
    %288 = vmatprep.subr.mxu0 0.0
    %289 = vmatpush2.msra.mxu0 0.0
    %290 = vmatprep.subr.mxu0 0.0
    %291 = vmatpush2.msra.mxu0 0.0
    %292 = vmatprep.subr.mxu0 0.0
    %293 = vmatpush2.msra.mxu0 0.0
    %294 = vmatprep.subr.mxu0 0.0
    %295 = vmatpush2.msra.mxu0 0.0
    %296 = vmatprep.subr.mxu0 0.0
    %297 = vmatpush2.msra.mxu0 0.0
    %298 = vmatprep.mubr.f32.mxu0 0.0
    %v299 = vand.u32 %v46, 4294901760
    %300 = vmatmul.mubr.f32.gmra.mxu0 %v299
    %v301 = vpop.f32.mrf.mxu0
    %v302 = vadd.f32 %v151, %v301
    %v303 = vpop.f32.mrf.mxu0
    %304 = vdwg.mxu0
    %305 = vmatprep.subr.mxu0 0.0
    %v306 = vand.u32 %v62, 4294901760
    %v307 = vsub.f32 %v62, %v306
    %308 = vmatpush1.msra.mxu0 %v307
    %309 = vmatprep.subr.mxu0 0.0
    %v310 = vand.u32 %v61, 4294901760
    %v311 = vsub.f32 %v61, %v310
    %312 = vmatpush1.msra.mxu0 %v311
    %313 = vmatprep.subr.mxu0 0.0
    %v314 = vand.u32 %v60, 4294901760
    %v315 = vsub.f32 %v60, %v314
    %316 = vmatpush1.msra.mxu0 %v315
    %317 = vmatprep.subr.mxu0 0.0
    %v318 = vand.u32 %v59, 4294901760
    %v319 = vsub.f32 %v59, %v318
    %320 = vmatpush1.msra.mxu0 %v319
    %321 = vmatprep.subr.mxu0 0.0
    %v322 = vand.u32 %v58, 4294901760
    %v323 = vsub.f32 %v58, %v322
    %324 = vmatpush1.msra.mxu0 %v323
    %325 = vmatprep.subr.mxu0 0.0
    %v326 = vand.u32 %v57, 4294901760
    %v327 = vsub.f32 %v57, %v326
    %328 = vmatpush1.msra.mxu0 %v327
    %329 = vmatprep.subr.mxu0 0.0
    %v330 = vand.u32 %v56, 4294901760
    %v331 = vsub.f32 %v56, %v330
    %332 = vmatpush1.msra.mxu0 %v331
    %333 = vmatprep.subr.mxu0 0.0
    %v334 = vand.u32 %v55, 4294901760
    %v335 = vsub.f32 %v55, %v334
    %336 = vmatpush1.msra.mxu0 %v335
    %337 = vmatprep.subr.mxu0 0.0
    %v338 = vand.u32 %v54, 4294901760
    %v339 = vsub.f32 %v54, %v338
    %340 = vmatpush1.msra.mxu0 %v339
    %341 = vmatprep.subr.mxu0 0.0
    %v342 = vand.u32 %v53, 4294901760
    %v343 = vsub.f32 %v53, %v342
    %344 = vmatpush1.msra.mxu0 %v343
    %345 = vmatprep.subr.mxu0 0.0
    %v346 = vand.u32 %v52, 4294901760
    %v347 = vsub.f32 %v52, %v346
    %348 = vmatpush1.msra.mxu0 %v347
    %349 = vmatprep.subr.mxu0 0.0
    %v350 = vand.u32 %v51, 4294901760
    %v351 = vsub.f32 %v51, %v350
    %352 = vmatpush1.msra.mxu0 %v351
    %353 = vmatprep.subr.mxu0 0.0
    %v354 = vand.u32 %v50, 4294901760
    %v355 = vsub.f32 %v50, %v354
    %356 = vmatpush1.msra.mxu0 %v355
    %357 = vmatprep.subr.mxu0 0.0
    %v358 = vand.u32 %v49, 4294901760
    %v359 = vsub.f32 %v49, %v358
    %360 = vmatpush1.msra.mxu0 %v359
    %361 = vmatprep.subr.mxu0 0.0
    %v362 = vand.u32 %v48, 4294901760
    %v363 = vsub.f32 %v48, %v362
    %364 = vmatpush1.msra.mxu0 %v363
    %365 = vmatprep.subr.mxu0 0.0
    %v366 = vand.u32 %v47, 4294901760
    %v367 = vsub.f32 %v47, %v366
    %368 = vmatpush1.msra.mxu0 %v367
    %369 = vmatprep.subr.mxu0 0.0
    %370 = vmatpush2.msra.mxu0 0.0
    %371 = vmatprep.subr.mxu0 0.0
    %372 = vmatpush2.msra.mxu0 0.0
    %373 = vmatprep.subr.mxu0 0.0
    %374 = vmatpush2.msra.mxu0 0.0
    %375 = vmatprep.subr.mxu0 0.0
    %376 = vmatpush2.msra.mxu0 0.0
    %377 = vmatprep.subr.mxu0 0.0
    %378 = vmatpush2.msra.mxu0 0.0
    %379 = vmatprep.subr.mxu0 0.0
    %380 = vmatpush2.msra.mxu0 0.0
    %381 = vmatprep.subr.mxu0 0.0
    %382 = vmatpush2.msra.mxu0 0.0
    %383 = vmatprep.subr.mxu0 0.0
    %384 = vmatpush2.msra.mxu0 0.0
    %385 = vmatprep.subr.mxu0 0.0
    %386 = vmatpush2.msra.mxu0 0.0
    %387 = vmatprep.subr.mxu0 0.0
    %388 = vmatpush2.msra.mxu0 0.0
    %389 = vmatprep.subr.mxu0 0.0
    %390 = vmatpush2.msra.mxu0 0.0
    %391 = vmatprep.subr.mxu0 0.0
    %392 = vmatpush2.msra.mxu0 0.0
    %393 = vmatprep.subr.mxu0 0.0
    %394 = vmatpush2.msra.mxu0 0.0
    %395 = vmatprep.subr.mxu0 0.0
    %396 = vmatpush2.msra.mxu0 0.0
    %397 = vmatprep.subr.mxu0 0.0
    %398 = vmatpush2.msra.mxu0 0.0
    %399 = vmatprep.subr.mxu0 0.0
    %400 = vmatpush2.msra.mxu0 0.0
    %401 = vmatprep.mubr.f32.mxu0 0.0
    %v402 = vand.u32 %v46, 4294901760
    %v403 = vsub.f32 %v46, %v402
    %404 = vmatmul.mubr.f32.gmra.mxu0 %v403
    %v405 = vpop.f32.mrf.mxu0
    %v406 = vadd.f32 %v302, %v405
    %v407 = vpop.f32.mrf.mxu0
    %408 = vdwg.mxu0
    %409 = vmatprep.subr.mxu0 0.0
    %v410 = vand.u32 %v62, 4294901760
    %411 = vmatpush1.msra.mxu0 %v410
    %412 = vmatprep.subr.mxu0 0.0
    %v413 = vand.u32 %v61, 4294901760
    %414 = vmatpush1.msra.mxu0 %v413
    %415 = vmatprep.subr.mxu0 0.0
    %v416 = vand.u32 %v60, 4294901760
    %417 = vmatpush1.msra.mxu0 %v416
    %418 = vmatprep.subr.mxu0 0.0
    %v419 = vand.u32 %v59, 4294901760
    %420 = vmatpush1.msra.mxu0 %v419
    %421 = vmatprep.subr.mxu0 0.0
    %v422 = vand.u32 %v58, 4294901760
    %423 = vmatpush1.msra.mxu0 %v422
    %424 = vmatprep.subr.mxu0 0.0
    %v425 = vand.u32 %v57, 4294901760
    %426 = vmatpush1.msra.mxu0 %v425
    %427 = vmatprep.subr.mxu0 0.0
    %v428 = vand.u32 %v56, 4294901760
    %429 = vmatpush1.msra.mxu0 %v428
    %430 = vmatprep.subr.mxu0 0.0
    %v431 = vand.u32 %v55, 4294901760
    %432 = vmatpush1.msra.mxu0 %v431
    %433 = vmatprep.subr.mxu0 0.0
    %v434 = vand.u32 %v54, 4294901760
    %435 = vmatpush1.msra.mxu0 %v434
    %436 = vmatprep.subr.mxu0 0.0
    %v437 = vand.u32 %v53, 4294901760
    %438 = vmatpush1.msra.mxu0 %v437
    %439 = vmatprep.subr.mxu0 0.0
    %v440 = vand.u32 %v52, 4294901760
    %441 = vmatpush1.msra.mxu0 %v440
    %442 = vmatprep.subr.mxu0 0.0
    %v443 = vand.u32 %v51, 4294901760
    %444 = vmatpush1.msra.mxu0 %v443
    %445 = vmatprep.subr.mxu0 0.0
    %v446 = vand.u32 %v50, 4294901760
    %447 = vmatpush1.msra.mxu0 %v446
    %448 = vmatprep.subr.mxu0 0.0
    %v449 = vand.u32 %v49, 4294901760
    %450 = vmatpush1.msra.mxu0 %v449
    %451 = vmatprep.subr.mxu0 0.0
    %v452 = vand.u32 %v48, 4294901760
    %453 = vmatpush1.msra.mxu0 %v452
    %454 = vmatprep.subr.mxu0 0.0
    %v455 = vand.u32 %v47, 4294901760
    %456 = vmatpush1.msra.mxu0 %v455
    %457 = vmatprep.subr.mxu0 0.0
    %458 = vmatpush2.msra.mxu0 0.0
    %459 = vmatprep.subr.mxu0 0.0
    %460 = vmatpush2.msra.mxu0 0.0
    %461 = vmatprep.subr.mxu0 0.0
    %462 = vmatpush2.msra.mxu0 0.0
    %463 = vmatprep.subr.mxu0 0.0
    %464 = vmatpush2.msra.mxu0 0.0
    %465 = vmatprep.subr.mxu0 0.0
    %466 = vmatpush2.msra.mxu0 0.0
    %467 = vmatprep.subr.mxu0 0.0
    %468 = vmatpush2.msra.mxu0 0.0
    %469 = vmatprep.subr.mxu0 0.0
    %470 = vmatpush2.msra.mxu0 0.0
    %471 = vmatprep.subr.mxu0 0.0
    %472 = vmatpush2.msra.mxu0 0.0
    %473 = vmatprep.subr.mxu0 0.0
    %474 = vmatpush2.msra.mxu0 0.0
    %475 = vmatprep.subr.mxu0 0.0
    %476 = vmatpush2.msra.mxu0 0.0
    %477 = vmatprep.subr.mxu0 0.0
    %478 = vmatpush2.msra.mxu0 0.0
    %479 = vmatprep.subr.mxu0 0.0
    %480 = vmatpush2.msra.mxu0 0.0
    %481 = vmatprep.subr.mxu0 0.0
    %482 = vmatpush2.msra.mxu0 0.0
    %483 = vmatprep.subr.mxu0 0.0
    %484 = vmatpush2.msra.mxu0 0.0
    %485 = vmatprep.subr.mxu0 0.0
    %486 = vmatpush2.msra.mxu0 0.0
    %487 = vmatprep.subr.mxu0 0.0
    %488 = vmatpush2.msra.mxu0 0.0
    %489 = vmatprep.mubr.f32.mxu0 0.0
    %v490 = vand.u32 %v46, 4294901760
    %v491 = vsub.f32 %v46, %v490
    %v492 = vand.u32 %v491, 4294901760
    %493 = vmatmul.mubr.f32.gmra.mxu0 %v492
    %v494 = vpop.f32.mrf.mxu0
    %v495 = vadd.f32 %v406, %v494
    %v496 = vpop.f32.mrf.mxu0
    %497 = vdwg.mxu0
    %498 = vmatprep.subr.mxu0 0.0
    %v499 = vand.u32 %v62, 4294901760
    %v500 = vsub.f32 %v62, %v499
    %v501 = vand.u32 %v500, 4294901760
    %502 = vmatpush1.msra.mxu0 %v501
    %503 = vmatprep.subr.mxu0 0.0
    %v504 = vand.u32 %v61, 4294901760
    %v505 = vsub.f32 %v61, %v504
    %v506 = vand.u32 %v505, 4294901760
    %507 = vmatpush1.msra.mxu0 %v506
    %508 = vmatprep.subr.mxu0 0.0
    %v509 = vand.u32 %v60, 4294901760
    %v510 = vsub.f32 %v60, %v509
    %v511 = vand.u32 %v510, 4294901760
    %512 = vmatpush1.msra.mxu0 %v511
    %513 = vmatprep.subr.mxu0 0.0
    %v514 = vand.u32 %v59, 4294901760
    %v515 = vsub.f32 %v59, %v514
    %v516 = vand.u32 %v515, 4294901760
    %517 = vmatpush1.msra.mxu0 %v516
    %518 = vmatprep.subr.mxu0 0.0
    %v519 = vand.u32 %v58, 4294901760
    %v520 = vsub.f32 %v58, %v519
    %v521 = vand.u32 %v520, 4294901760
    %522 = vmatpush1.msra.mxu0 %v521
    %523 = vmatprep.subr.mxu0 0.0
    %v524 = vand.u32 %v57, 4294901760
    %v525 = vsub.f32 %v57, %v524
    %v526 = vand.u32 %v525, 4294901760
    %527 = vmatpush1.msra.mxu0 %v526
    %528 = vmatprep.subr.mxu0 0.0
    %v529 = vand.u32 %v56, 4294901760
    %v530 = vsub.f32 %v56, %v529
    %v531 = vand.u32 %v530, 4294901760
    %532 = vmatpush1.msra.mxu0 %v531
    %533 = vmatprep.subr.mxu0 0.0
    %v534 = vand.u32 %v55, 4294901760
    %v535 = vsub.f32 %v55, %v534
    %v536 = vand.u32 %v535, 4294901760
    %537 = vmatpush1.msra.mxu0 %v536
    %538 = vmatprep.subr.mxu0 0.0
    %v539 = vand.u32 %v54, 4294901760
    %v540 = vsub.f32 %v54, %v539
    %v541 = vand.u32 %v540, 4294901760
    %542 = vmatpush1.msra.mxu0 %v541
    %543 = vmatprep.subr.mxu0 0.0
    %v544 = vand.u32 %v53, 4294901760
    %v545 = vsub.f32 %v53, %v544
    %v546 = vand.u32 %v545, 4294901760
    %547 = vmatpush1.msra.mxu0 %v546
    %548 = vmatprep.subr.mxu0 0.0
    %v549 = vand.u32 %v52, 4294901760
    %v550 = vsub.f32 %v52, %v549
    %v551 = vand.u32 %v550, 4294901760
    %552 = vmatpush1.msra.mxu0 %v551
    %553 = vmatprep.subr.mxu0 0.0
    %v554 = vand.u32 %v51, 4294901760
    %v555 = vsub.f32 %v51, %v554
    %v556 = vand.u32 %v555, 4294901760
    %557 = vmatpush1.msra.mxu0 %v556
    %558 = vmatprep.subr.mxu0 0.0
    %v559 = vand.u32 %v50, 4294901760
    %v560 = vsub.f32 %v50, %v559
    %v561 = vand.u32 %v560, 4294901760
    %562 = vmatpush1.msra.mxu0 %v561
    %563 = vmatprep.subr.mxu0 0.0
    %v564 = vand.u32 %v49, 4294901760
    %v565 = vsub.f32 %v49, %v564
    %v566 = vand.u32 %v565, 4294901760
    %567 = vmatpush1.msra.mxu0 %v566
    %568 = vmatprep.subr.mxu0 0.0
    %v569 = vand.u32 %v48, 4294901760
    %v570 = vsub.f32 %v48, %v569
    %v571 = vand.u32 %v570, 4294901760
    %572 = vmatpush1.msra.mxu0 %v571
    %573 = vmatprep.subr.mxu0 0.0
    %v574 = vand.u32 %v47, 4294901760
    %v575 = vsub.f32 %v47, %v574
    %v576 = vand.u32 %v575, 4294901760
    %577 = vmatpush1.msra.mxu0 %v576
    %578 = vmatprep.subr.mxu0 0.0
    %579 = vmatpush2.msra.mxu0 0.0
    %580 = vmatprep.subr.mxu0 0.0
    %581 = vmatpush2.msra.mxu0 0.0
    %582 = vmatprep.subr.mxu0 0.0
    %583 = vmatpush2.msra.mxu0 0.0
    %584 = vmatprep.subr.mxu0 0.0
    %585 = vmatpush2.msra.mxu0 0.0
    %586 = vmatprep.subr.mxu0 0.0
    %587 = vmatpush2.msra.mxu0 0.0
    %588 = vmatprep.subr.mxu0 0.0
    %589 = vmatpush2.msra.mxu0 0.0
    %590 = vmatprep.subr.mxu0 0.0
    %591 = vmatpush2.msra.mxu0 0.0
    %592 = vmatprep.subr.mxu0 0.0
    %593 = vmatpush2.msra.mxu0 0.0
    %594 = vmatprep.subr.mxu0 0.0
    %595 = vmatpush2.msra.mxu0 0.0
    %596 = vmatprep.subr.mxu0 0.0
    %597 = vmatpush2.msra.mxu0 0.0
    %598 = vmatprep.subr.mxu0 0.0
    %599 = vmatpush2.msra.mxu0 0.0
    %600 = vmatprep.subr.mxu0 0.0
    %601 = vmatpush2.msra.mxu0 0.0
    %602 = vmatprep.subr.mxu0 0.0
    %603 = vmatpush2.msra.mxu0 0.0
    %604 = vmatprep.subr.mxu0 0.0
    %605 = vmatpush2.msra.mxu0 0.0
    %606 = vmatprep.subr.mxu0 0.0
    %607 = vmatpush2.msra.mxu0 0.0
    %608 = vmatprep.subr.mxu0 0.0
    %609 = vmatpush2.msra.mxu0 0.0
    %610 = vmatprep.mubr.f32.mxu0 0.0
    %v611 = vand.u32 %v46, 4294901760
    %612 = vmatmul.mubr.f32.gmra.mxu0 %v611
    %v613 = vpop.f32.mrf.mxu0
    %v614 = vadd.f32 %v495, %v613
    %v615 = vpop.f32.mrf.mxu0
    %616 = vdwg.mxu0
    %617 = vmatprep.subr.mxu0 0.0
    %v618 = vand.u32 %v62, 4294901760
    %619 = vmatpush1.msra.mxu0 %v618
    %620 = vmatprep.subr.mxu0 0.0
    %v621 = vand.u32 %v61, 4294901760
    %622 = vmatpush1.msra.mxu0 %v621
    %623 = vmatprep.subr.mxu0 0.0
    %v624 = vand.u32 %v60, 4294901760
    %625 = vmatpush1.msra.mxu0 %v624
    %626 = vmatprep.subr.mxu0 0.0
    %v627 = vand.u32 %v59, 4294901760
    %628 = vmatpush1.msra.mxu0 %v627
    %629 = vmatprep.subr.mxu0 0.0
    %v630 = vand.u32 %v58, 4294901760
    %631 = vmatpush1.msra.mxu0 %v630
    %632 = vmatprep.subr.mxu0 0.0
    %v633 = vand.u32 %v57, 4294901760
    %634 = vmatpush1.msra.mxu0 %v633
    %635 = vmatprep.subr.mxu0 0.0
    %v636 = vand.u32 %v56, 4294901760
    %637 = vmatpush1.msra.mxu0 %v636
    %638 = vmatprep.subr.mxu0 0.0
    %v639 = vand.u32 %v55, 4294901760
    %640 = vmatpush1.msra.mxu0 %v639
    %641 = vmatprep.subr.mxu0 0.0
    %v642 = vand.u32 %v54, 4294901760
    %643 = vmatpush1.msra.mxu0 %v642
    %644 = vmatprep.subr.mxu0 0.0
    %v645 = vand.u32 %v53, 4294901760
    %646 = vmatpush1.msra.mxu0 %v645
    %647 = vmatprep.subr.mxu0 0.0
    %v648 = vand.u32 %v52, 4294901760
    %649 = vmatpush1.msra.mxu0 %v648
    %650 = vmatprep.subr.mxu0 0.0
    %v651 = vand.u32 %v51, 4294901760
    %652 = vmatpush1.msra.mxu0 %v651
    %653 = vmatprep.subr.mxu0 0.0
    %v654 = vand.u32 %v50, 4294901760
    %655 = vmatpush1.msra.mxu0 %v654
    %656 = vmatprep.subr.mxu0 0.0
    %v657 = vand.u32 %v49, 4294901760
    %658 = vmatpush1.msra.mxu0 %v657
    %659 = vmatprep.subr.mxu0 0.0
    %v660 = vand.u32 %v48, 4294901760
    %661 = vmatpush1.msra.mxu0 %v660
    %662 = vmatprep.subr.mxu0 0.0
    %v663 = vand.u32 %v47, 4294901760
    %664 = vmatpush1.msra.mxu0 %v663
    %665 = vmatprep.subr.mxu0 0.0
    %666 = vmatpush2.msra.mxu0 0.0
    %667 = vmatprep.subr.mxu0 0.0
    %668 = vmatpush2.msra.mxu0 0.0
    %669 = vmatprep.subr.mxu0 0.0
    %670 = vmatpush2.msra.mxu0 0.0
    %671 = vmatprep.subr.mxu0 0.0
    %672 = vmatpush2.msra.mxu0 0.0
    %673 = vmatprep.subr.mxu0 0.0
    %674 = vmatpush2.msra.mxu0 0.0
    %675 = vmatprep.subr.mxu0 0.0
    %676 = vmatpush2.msra.mxu0 0.0
    %677 = vmatprep.subr.mxu0 0.0
    %678 = vmatpush2.msra.mxu0 0.0
    %679 = vmatprep.subr.mxu0 0.0
    %680 = vmatpush2.msra.mxu0 0.0
    %681 = vmatprep.subr.mxu0 0.0
    %682 = vmatpush2.msra.mxu0 0.0
    %683 = vmatprep.subr.mxu0 0.0
    %684 = vmatpush2.msra.mxu0 0.0
    %685 = vmatprep.subr.mxu0 0.0
    %686 = vmatpush2.msra.mxu0 0.0
    %687 = vmatprep.subr.mxu0 0.0
    %688 = vmatpush2.msra.mxu0 0.0
    %689 = vmatprep.subr.mxu0 0.0
    %690 = vmatpush2.msra.mxu0 0.0
    %691 = vmatprep.subr.mxu0 0.0
    %692 = vmatpush2.msra.mxu0 0.0
    %693 = vmatprep.subr.mxu0 0.0
    %694 = vmatpush2.msra.mxu0 0.0
    %695 = vmatprep.subr.mxu0 0.0
    %696 = vmatpush2.msra.mxu0 0.0
    %697 = vmatprep.mubr.f32.mxu0 0.0
    %v698 = vand.u32 %v46, 4294901760
    %699 = vmatmul.mubr.f32.gmra.mxu0 %v698
    %v700 = vpop.f32.mrf.mxu0
    %v701 = vadd.f32 %v614, %v700
    %v702 = vpop.f32.mrf.mxu0
    %703 = vdwg.mxu0
    %v704 = vmul.f32 %v701, %v46
    %705 = vadd.xlane.f32.xlu0 %v704
    %v706 = vpop.xlane.xlu0 %705
    %v707 = vmul.f32 %v706, 0.5
    %v708 = vadd.f32 %v707, 100.647766
    %s709 = scalar_lea.vmem [#allocation5], 128
    %v710 = vld [vmem:[%s709] sm:$0xff]
    %v711 = vld [vmem:[%s709 + $0x8] sm:$0xff]
    %v712 = vld [vmem:[%s709 + $0x10] sm:$0xff]
    %v713 = vld [vmem:[%s709 + $0x18] sm:$0xff]
    %v714 = vld [vmem:[%s709 + $0x20] sm:$0xff]
    %v715 = vld [vmem:[%s709 + $0x28] sm:$0xff]
    %v716 = vld [vmem:[%s709 + $0x30] sm:$0xff]
    %v717 = vld [vmem:[%s709 + $0x38] sm:$0xff]
    %v718 = vld [vmem:[%s709 + $0x40] sm:$0xff]
    %v719 = vld [vmem:[%s709 + $0x48] sm:$0xff]
    %v720 = vld [vmem:[%s709 + $0x50] sm:$0xff]
    %v721 = vld [vmem:[%s709 + $0x58] sm:$0xff]
    %v722 = vld [vmem:[%s709 + $0x60] sm:$0xff]
    %v723 = vld [vmem:[%s709 + $0x68] sm:$0xff]
    %v724 = vld [vmem:[%s709 + $0x70] sm:$0xff]
    %v725 = vld [vmem:[%s709 + $0x78] sm:$0xff]
    %726 = vmatprep.subr.mxu0 0.0
    %v727 = vand.u32 %v725, 4294901760
    %728 = vmatpush1.msra.mxu0 %v727
    %729 = vmatprep.subr.mxu0 0.0
    %v730 = vand.u32 %v724, 4294901760
    %731 = vmatpush1.msra.mxu0 %v730
    %732 = vmatprep.subr.mxu0 0.0
    %v733 = vand.u32 %v723, 4294901760
    %734 = vmatpush1.msra.mxu0 %v733
    %735 = vmatprep.subr.mxu0 0.0
    %v736 = vand.u32 %v722, 4294901760
    %737 = vmatpush1.msra.mxu0 %v736
    %738 = vmatprep.subr.mxu0 0.0
    %v739 = vand.u32 %v721, 4294901760
    %740 = vmatpush1.msra.mxu0 %v739
    %741 = vmatprep.subr.mxu0 0.0
    %v742 = vand.u32 %v720, 4294901760
    %743 = vmatpush1.msra.mxu0 %v742
    %744 = vmatprep.subr.mxu0 0.0
    %v745 = vand.u32 %v719, 4294901760
    %746 = vmatpush1.msra.mxu0 %v745
    %747 = vmatprep.subr.mxu0 0.0
    %v748 = vand.u32 %v718, 4294901760
    %749 = vmatpush1.msra.mxu0 %v748
    %750 = vmatprep.subr.mxu0 0.0
    %v751 = vand.u32 %v717, 4294901760
    %752 = vmatpush1.msra.mxu0 %v751
    %753 = vmatprep.subr.mxu0 0.0
    %v754 = vand.u32 %v716, 4294901760
    %755 = vmatpush1.msra.mxu0 %v754
    %756 = vmatprep.subr.mxu0 0.0
    %v757 = vand.u32 %v715, 4294901760
    %758 = vmatpush1.msra.mxu0 %v757
    %759 = vmatprep.subr.mxu0 0.0
    %v760 = vand.u32 %v714, 4294901760
    %761 = vmatpush1.msra.mxu0 %v760
    %762 = vmatprep.subr.mxu0 0.0
    %v763 = vand.u32 %v713, 4294901760
    %764 = vmatpush1.msra.mxu0 %v763
    %765 = vmatprep.subr.mxu0 0.0
    %v766 = vand.u32 %v712, 4294901760
    %767 = vmatpush1.msra.mxu0 %v766
    %768 = vmatprep.subr.mxu0 0.0
    %v769 = vand.u32 %v711, 4294901760
    %770 = vmatpush1.msra.mxu0 %v769
    %771 = vmatprep.subr.mxu0 0.0
    %v772 = vand.u32 %v710, 4294901760
    %773 = vmatpush1.msra.mxu0 %v772
    %774 = vmatprep.subr.mxu0 0.0
    %775 = vmatpush2.msra.mxu0 0.0
    %776 = vmatprep.subr.mxu0 0.0
    %777 = vmatpush2.msra.mxu0 0.0
    %778 = vmatprep.subr.mxu0 0.0
    %779 = vmatpush2.msra.mxu0 0.0
    %780 = vmatprep.subr.mxu0 0.0
    %781 = vmatpush2.msra.mxu0 0.0
    %782 = vmatprep.subr.mxu0 0.0
    %783 = vmatpush2.msra.mxu0 0.0
    %784 = vmatprep.subr.mxu0 0.0
    %785 = vmatpush2.msra.mxu0 0.0
    %786 = vmatprep.subr.mxu0 0.0
    %787 = vmatpush2.msra.mxu0 0.0
    %788 = vmatprep.subr.mxu0 0.0
    %789 = vmatpush2.msra.mxu0 0.0
    %790 = vmatprep.subr.mxu0 0.0
    %791 = vmatpush2.msra.mxu0 0.0
    %792 = vmatprep.subr.mxu0 0.0
    %793 = vmatpush2.msra.mxu0 0.0
    %794 = vmatprep.subr.mxu0 0.0
    %795 = vmatpush2.msra.mxu0 0.0
    %796 = vmatprep.subr.mxu0 0.0
    %797 = vmatpush2.msra.mxu0 0.0
    %798 = vmatprep.subr.mxu0 0.0
    %799 = vmatpush2.msra.mxu0 0.0
    %800 = vmatprep.subr.mxu0 0.0
    %801 = vmatpush2.msra.mxu0 0.0
    %802 = vmatprep.subr.mxu0 0.0
    %803 = vmatpush2.msra.mxu0 0.0
    %804 = vmatprep.subr.mxu0 0.0
    %805 = vmatpush2.msra.mxu0 0.0
    %806 = vmatprep.mubr.f32.mxu0 0.0
    %v807 = vand.u32 %v46, 4294901760
    %v808 = vsub.f32 %v46, %v807
    %v809 = vand.u32 %v808, 4294901760
    %v810 = vsub.f32 %v808, %v809
    %v811 = vand.u32 %v810, 4294901760
    %812 = vmatmul.mubr.f32.gmra.mxu0 %v811
    %v813 = vpop.f32.mrf.mxu0
    %v814 = vadd.f32 0.0, %v813
    %v815 = vpop.f32.mrf.mxu0
    %816 = vdwg.mxu0
    %817 = vmatprep.subr.mxu0 0.0
    %v818 = vand.u32 %v725, 4294901760
    %v819 = vsub.f32 %v725, %v818
    %v820 = vand.u32 %v819, 4294901760
    %v821 = vsub.f32 %v819, %v820
    %v822 = vand.u32 %v821, 4294901760
    %823 = vmatpush1.msra.mxu0 %v822
    %824 = vmatprep.subr.mxu0 0.0
    %v825 = vand.u32 %v724, 4294901760
    %v826 = vsub.f32 %v724, %v825
    %v827 = vand.u32 %v826, 4294901760
    %v828 = vsub.f32 %v826, %v827
    %v829 = vand.u32 %v828, 4294901760
    %830 = vmatpush1.msra.mxu0 %v829
    %831 = vmatprep.subr.mxu0 0.0
    %v832 = vand.u32 %v723, 4294901760
    %v833 = vsub.f32 %v723, %v832
    %v834 = vand.u32 %v833, 4294901760
    %v835 = vsub.f32 %v833, %v834
    %v836 = vand.u32 %v835, 4294901760
    %837 = vmatpush1.msra.mxu0 %v836
    %838 = vmatprep.subr.mxu0 0.0
    %v839 = vand.u32 %v722, 4294901760
    %v840 = vsub.f32 %v722, %v839
    %v841 = vand.u32 %v840, 4294901760
    %v842 = vsub.f32 %v840, %v841
    %v843 = vand.u32 %v842, 4294901760
    %844 = vmatpush1.msra.mxu0 %v843
    %845 = vmatprep.subr.mxu0 0.0
    %v846 = vand.u32 %v721, 4294901760
    %v847 = vsub.f32 %v721, %v846
    %v848 = vand.u32 %v847, 4294901760
    %v849 = vsub.f32 %v847, %v848
    %v850 = vand.u32 %v849, 4294901760
    %851 = vmatpush1.msra.mxu0 %v850
    %852 = vmatprep.subr.mxu0 0.0
    %v853 = vand.u32 %v720, 4294901760
    %v854 = vsub.f32 %v720, %v853
    %v855 = vand.u32 %v854, 4294901760
    %v856 = vsub.f32 %v854, %v855
    %v857 = vand.u32 %v856, 4294901760
    %858 = vmatpush1.msra.mxu0 %v857
    %859 = vmatprep.subr.mxu0 0.0
    %v860 = vand.u32 %v719, 4294901760
    %v861 = vsub.f32 %v719, %v860
    %v862 = vand.u32 %v861, 4294901760
    %v863 = vsub.f32 %v861, %v862
    %v864 = vand.u32 %v863, 4294901760
    %865 = vmatpush1.msra.mxu0 %v864
    %866 = vmatprep.subr.mxu0 0.0
    %v867 = vand.u32 %v718, 4294901760
    %v868 = vsub.f32 %v718, %v867
    %v869 = vand.u32 %v868, 4294901760
    %v870 = vsub.f32 %v868, %v869
    %v871 = vand.u32 %v870, 4294901760
    %872 = vmatpush1.msra.mxu0 %v871
    %873 = vmatprep.subr.mxu0 0.0
    %v874 = vand.u32 %v717, 4294901760
    %v875 = vsub.f32 %v717, %v874
    %v876 = vand.u32 %v875, 4294901760
    %v877 = vsub.f32 %v875, %v876
    %v878 = vand.u32 %v877, 4294901760
    %879 = vmatpush1.msra.mxu0 %v878
    %880 = vmatprep.subr.mxu0 0.0
    %v881 = vand.u32 %v716, 4294901760
    %v882 = vsub.f32 %v716, %v881
    %v883 = vand.u32 %v882, 4294901760
    %v884 = vsub.f32 %v882, %v883
    %v885 = vand.u32 %v884, 4294901760
    %886 = vmatpush1.msra.mxu0 %v885
    %887 = vmatprep.subr.mxu0 0.0
    %v888 = vand.u32 %v715, 4294901760
    %v889 = vsub.f32 %v715, %v888
    %v890 = vand.u32 %v889, 4294901760
    %v891 = vsub.f32 %v889, %v890
    %v892 = vand.u32 %v891, 4294901760
    %893 = vmatpush1.msra.mxu0 %v892
    %894 = vmatprep.subr.mxu0 0.0
    %v895 = vand.u32 %v714, 4294901760
    %v896 = vsub.f32 %v714, %v895
    %v897 = vand.u32 %v896, 4294901760
    %v898 = vsub.f32 %v896, %v897
    %v899 = vand.u32 %v898, 4294901760
    %900 = vmatpush1.msra.mxu0 %v899
    %901 = vmatprep.subr.mxu0 0.0
    %v902 = vand.u32 %v713, 4294901760
    %v903 = vsub.f32 %v713, %v902
    %v904 = vand.u32 %v903, 4294901760
    %v905 = vsub.f32 %v903, %v904
    %v906 = vand.u32 %v905, 4294901760
    %907 = vmatpush1.msra.mxu0 %v906
    %908 = vmatprep.subr.mxu0 0.0
    %v909 = vand.u32 %v712, 4294901760
    %v910 = vsub.f32 %v712, %v909
    %v911 = vand.u32 %v910, 4294901760
    %v912 = vsub.f32 %v910, %v911
    %v913 = vand.u32 %v912, 4294901760
    %914 = vmatpush1.msra.mxu0 %v913
    %915 = vmatprep.subr.mxu0 0.0
    %v916 = vand.u32 %v711, 4294901760
    %v917 = vsub.f32 %v711, %v916
    %v918 = vand.u32 %v917, 4294901760
    %v919 = vsub.f32 %v917, %v918
    %v920 = vand.u32 %v919, 4294901760
    %921 = vmatpush1.msra.mxu0 %v920
    %922 = vmatprep.subr.mxu0 0.0
    %v923 = vand.u32 %v710, 4294901760
    %v924 = vsub.f32 %v710, %v923
    %v925 = vand.u32 %v924, 4294901760
    %v926 = vsub.f32 %v924, %v925
    %v927 = vand.u32 %v926, 4294901760
    %928 = vmatpush1.msra.mxu0 %v927
    %929 = vmatprep.subr.mxu0 0.0
    %930 = vmatpush2.msra.mxu0 0.0
    %931 = vmatprep.subr.mxu0 0.0
    %932 = vmatpush2.msra.mxu0 0.0
    %933 = vmatprep.subr.mxu0 0.0
    %934 = vmatpush2.msra.mxu0 0.0
    %935 = vmatprep.subr.mxu0 0.0
    %936 = vmatpush2.msra.mxu0 0.0
    %937 = vmatprep.subr.mxu0 0.0
    %938 = vmatpush2.msra.mxu0 0.0
    %939 = vmatprep.subr.mxu0 0.0
    %940 = vmatpush2.msra.mxu0 0.0
    %941 = vmatprep.subr.mxu0 0.0
    %942 = vmatpush2.msra.mxu0 0.0
    %943 = vmatprep.subr.mxu0 0.0
    %944 = vmatpush2.msra.mxu0 0.0
    %945 = vmatprep.subr.mxu0 0.0
    %946 = vmatpush2.msra.mxu0 0.0
    %947 = vmatprep.subr.mxu0 0.0
    %948 = vmatpush2.msra.mxu0 0.0
    %949 = vmatprep.subr.mxu0 0.0
    %950 = vmatpush2.msra.mxu0 0.0
    %951 = vmatprep.subr.mxu0 0.0
    %952 = vmatpush2.msra.mxu0 0.0
    %953 = vmatprep.subr.mxu0 0.0
    %954 = vmatpush2.msra.mxu0 0.0
    %955 = vmatprep.subr.mxu0 0.0
    %956 = vmatpush2.msra.mxu0 0.0
    %957 = vmatprep.subr.mxu0 0.0
    %958 = vmatpush2.msra.mxu0 0.0
    %959 = vmatprep.subr.mxu0 0.0
    %960 = vmatpush2.msra.mxu0 0.0
    %961 = vmatprep.mubr.f32.mxu0 0.0
    %v962 = vand.u32 %v46, 4294901760
    %963 = vmatmul.mubr.f32.gmra.mxu0 %v962
    %v964 = vpop.f32.mrf.mxu0
    %v965 = vadd.f32 %v814, %v964
    %v966 = vpop.f32.mrf.mxu0
    %967 = vdwg.mxu0
    %968 = vmatprep.subr.mxu0 0.0
    %v969 = vand.u32 %v725, 4294901760
    %v970 = vsub.f32 %v725, %v969
    %971 = vmatpush1.msra.mxu0 %v970
    %972 = vmatprep.subr.mxu0 0.0
    %v973 = vand.u32 %v724, 4294901760
    %v974 = vsub.f32 %v724, %v973
    %975 = vmatpush1.msra.mxu0 %v974
    %976 = vmatprep.subr.mxu0 0.0
    %v977 = vand.u32 %v723, 4294901760
    %v978 = vsub.f32 %v723, %v977
    %979 = vmatpush1.msra.mxu0 %v978
    %980 = vmatprep.subr.mxu0 0.0
    %v981 = vand.u32 %v722, 4294901760
    %v982 = vsub.f32 %v722, %v981
    %983 = vmatpush1.msra.mxu0 %v982
    %984 = vmatprep.subr.mxu0 0.0
    %v985 = vand.u32 %v721, 4294901760
    %v986 = vsub.f32 %v721, %v985
    %987 = vmatpush1.msra.mxu0 %v986
    %988 = vmatprep.subr.mxu0 0.0
    %v989 = vand.u32 %v720, 4294901760
    %v990 = vsub.f32 %v720, %v989
    %991 = vmatpush1.msra.mxu0 %v990
    %992 = vmatprep.subr.mxu0 0.0
    %v993 = vand.u32 %v719, 4294901760
    %v994 = vsub.f32 %v719, %v993
    %995 = vmatpush1.msra.mxu0 %v994
    %996 = vmatprep.subr.mxu0 0.0
    %v997 = vand.u32 %v718, 4294901760
    %v998 = vsub.f32 %v718, %v997
    %999 = vmatpush1.msra.mxu0 %v998
    %1000 = vmatprep.subr.mxu0 0.0
    %v1001 = vand.u32 %v717, 4294901760
    %v1002 = vsub.f32 %v717, %v1001
    %1003 = vmatpush1.msra.mxu0 %v1002
    %1004 = vmatprep.subr.mxu0 0.0
    %v1005 = vand.u32 %v716, 4294901760
    %v1006 = vsub.f32 %v716, %v1005
    %1007 = vmatpush1.msra.mxu0 %v1006
    %1008 = vmatprep.subr.mxu0 0.0
    %v1009 = vand.u32 %v715, 4294901760
    %v1010 = vsub.f32 %v715, %v1009
    %1011 = vmatpush1.msra.mxu0 %v1010
    %1012 = vmatprep.subr.mxu0 0.0
    %v1013 = vand.u32 %v714, 4294901760
    %v1014 = vsub.f32 %v714, %v1013
    %1015 = vmatpush1.msra.mxu0 %v1014
    %1016 = vmatprep.subr.mxu0 0.0
    %v1017 = vand.u32 %v713, 4294901760
    %v1018 = vsub.f32 %v713, %v1017
    %1019 = vmatpush1.msra.mxu0 %v1018
    %1020 = vmatprep.subr.mxu0 0.0
    %v1021 = vand.u32 %v712, 4294901760
    %v1022 = vsub.f32 %v712, %v1021
    %1023 = vmatpush1.msra.mxu0 %v1022
    %1024 = vmatprep.subr.mxu0 0.0
    %v1025 = vand.u32 %v711, 4294901760
    %v1026 = vsub.f32 %v711, %v1025
    %1027 = vmatpush1.msra.mxu0 %v1026
    %1028 = vmatprep.subr.mxu0 0.0
    %v1029 = vand.u32 %v710, 4294901760
    %v1030 = vsub.f32 %v710, %v1029
    %1031 = vmatpush1.msra.mxu0 %v1030
    %1032 = vmatprep.subr.mxu0 0.0
    %1033 = vmatpush2.msra.mxu0 0.0
    %1034 = vmatprep.subr.mxu0 0.0
    %1035 = vmatpush2.msra.mxu0 0.0
    %1036 = vmatprep.subr.mxu0 0.0
    %1037 = vmatpush2.msra.mxu0 0.0
    %1038 = vmatprep.subr.mxu0 0.0
    %1039 = vmatpush2.msra.mxu0 0.0
    %1040 = vmatprep.subr.mxu0 0.0
    %1041 = vmatpush2.msra.mxu0 0.0
    %1042 = vmatprep.subr.mxu0 0.0
    %1043 = vmatpush2.msra.mxu0 0.0
    %1044 = vmatprep.subr.mxu0 0.0
    %1045 = vmatpush2.msra.mxu0 0.0
    %1046 = vmatprep.subr.mxu0 0.0
    %1047 = vmatpush2.msra.mxu0 0.0
    %1048 = vmatprep.subr.mxu0 0.0
    %1049 = vmatpush2.msra.mxu0 0.0
    %1050 = vmatprep.subr.mxu0 0.0
    %1051 = vmatpush2.msra.mxu0 0.0
    %1052 = vmatprep.subr.mxu0 0.0
    %1053 = vmatpush2.msra.mxu0 0.0
    %1054 = vmatprep.subr.mxu0 0.0
    %1055 = vmatpush2.msra.mxu0 0.0
    %1056 = vmatprep.subr.mxu0 0.0
    %1057 = vmatpush2.msra.mxu0 0.0
    %1058 = vmatprep.subr.mxu0 0.0
    %1059 = vmatpush2.msra.mxu0 0.0
    %1060 = vmatprep.subr.mxu0 0.0
    %1061 = vmatpush2.msra.mxu0 0.0
    %1062 = vmatprep.subr.mxu0 0.0
    %1063 = vmatpush2.msra.mxu0 0.0
    %1064 = vmatprep.mubr.f32.mxu0 0.0
    %v1065 = vand.u32 %v46, 4294901760
    %v1066 = vsub.f32 %v46, %v1065
    %1067 = vmatmul.mubr.f32.gmra.mxu0 %v1066
    %v1068 = vpop.f32.mrf.mxu0
    %v1069 = vadd.f32 %v965, %v1068
    %v1070 = vpop.f32.mrf.mxu0
    %1071 = vdwg.mxu0
    %1072 = vmatprep.subr.mxu0 0.0
    %v1073 = vand.u32 %v725, 4294901760
    %1074 = vmatpush1.msra.mxu0 %v1073
    %1075 = vmatprep.subr.mxu0 0.0
    %v1076 = vand.u32 %v724, 4294901760
    %1077 = vmatpush1.msra.mxu0 %v1076
    %1078 = vmatprep.subr.mxu0 0.0
    %v1079 = vand.u32 %v723, 4294901760
    %1080 = vmatpush1.msra.mxu0 %v1079
    %1081 = vmatprep.subr.mxu0 0.0
    %v1082 = vand.u32 %v722, 4294901760
    %1083 = vmatpush1.msra.mxu0 %v1082
    %1084 = vmatprep.subr.mxu0 0.0
    %v1085 = vand.u32 %v721, 4294901760
    %1086 = vmatpush1.msra.mxu0 %v1085
    %1087 = vmatprep.subr.mxu0 0.0
    %v1088 = vand.u32 %v720, 4294901760
    %1089 = vmatpush1.msra.mxu0 %v1088
    %1090 = vmatprep.subr.mxu0 0.0
    %v1091 = vand.u32 %v719, 4294901760
    %1092 = vmatpush1.msra.mxu0 %v1091
    %1093 = vmatprep.subr.mxu0 0.0
    %v1094 = vand.u32 %v718, 4294901760
    %1095 = vmatpush1.msra.mxu0 %v1094
    %1096 = vmatprep.subr.mxu0 0.0
    %v1097 = vand.u32 %v717, 4294901760
    %1098 = vmatpush1.msra.mxu0 %v1097
    %1099 = vmatprep.subr.mxu0 0.0
    %v1100 = vand.u32 %v716, 4294901760
    %1101 = vmatpush1.msra.mxu0 %v1100
    %1102 = vmatprep.subr.mxu0 0.0
    %v1103 = vand.u32 %v715, 4294901760
    %1104 = vmatpush1.msra.mxu0 %v1103
    %1105 = vmatprep.subr.mxu0 0.0
    %v1106 = vand.u32 %v714, 4294901760
    %1107 = vmatpush1.msra.mxu0 %v1106
    %1108 = vmatprep.subr.mxu0 0.0
    %v1109 = vand.u32 %v713, 4294901760
    %1110 = vmatpush1.msra.mxu0 %v1109
    %1111 = vmatprep.subr.mxu0 0.0
    %v1112 = vand.u32 %v712, 4294901760
    %1113 = vmatpush1.msra.mxu0 %v1112
    %1114 = vmatprep.subr.mxu0 0.0
    %v1115 = vand.u32 %v711, 4294901760
    %1116 = vmatpush1.msra.mxu0 %v1115
    %1117 = vmatprep.subr.mxu0 0.0
    %v1118 = vand.u32 %v710, 4294901760
    %1119 = vmatpush1.msra.mxu0 %v1118
    %1120 = vmatprep.subr.mxu0 0.0
    %1121 = vmatpush2.msra.mxu0 0.0
    %1122 = vmatprep.subr.mxu0 0.0
    %1123 = vmatpush2.msra.mxu0 0.0
    %1124 = vmatprep.subr.mxu0 0.0
    %1125 = vmatpush2.msra.mxu0 0.0
    %1126 = vmatprep.subr.mxu0 0.0
    %1127 = vmatpush2.msra.mxu0 0.0
    %1128 = vmatprep.subr.mxu0 0.0
    %1129 = vmatpush2.msra.mxu0 0.0
    %1130 = vmatprep.subr.mxu0 0.0
    %1131 = vmatpush2.msra.mxu0 0.0
    %1132 = vmatprep.subr.mxu0 0.0
    %1133 = vmatpush2.msra.mxu0 0.0
    %1134 = vmatprep.subr.mxu0 0.0
    %1135 = vmatpush2.msra.mxu0 0.0
    %1136 = vmatprep.subr.mxu0 0.0
    %1137 = vmatpush2.msra.mxu0 0.0
    %1138 = vmatprep.subr.mxu0 0.0
    %1139 = vmatpush2.msra.mxu0 0.0
    %1140 = vmatprep.subr.mxu0 0.0
    %1141 = vmatpush2.msra.mxu0 0.0
    %1142 = vmatprep.subr.mxu0 0.0
    %1143 = vmatpush2.msra.mxu0 0.0
    %1144 = vmatprep.subr.mxu0 0.0
    %1145 = vmatpush2.msra.mxu0 0.0
    %1146 = vmatprep.subr.mxu0 0.0
    %1147 = vmatpush2.msra.mxu0 0.0
    %1148 = vmatprep.subr.mxu0 0.0
    %1149 = vmatpush2.msra.mxu0 0.0
    %1150 = vmatprep.subr.mxu0 0.0
    %1151 = vmatpush2.msra.mxu0 0.0
    %1152 = vmatprep.mubr.f32.mxu0 0.0
    %v1153 = vand.u32 %v46, 4294901760
    %v1154 = vsub.f32 %v46, %v1153
    %v1155 = vand.u32 %v1154, 4294901760
    %1156 = vmatmul.mubr.f32.gmra.mxu0 %v1155
    %v1157 = vpop.f32.mrf.mxu0
    %v1158 = vadd.f32 %v1069, %v1157
    %v1159 = vpop.f32.mrf.mxu0
    %1160 = vdwg.mxu0
    %1161 = vmatprep.subr.mxu0 0.0
    %v1162 = vand.u32 %v725, 4294901760
    %v1163 = vsub.f32 %v725, %v1162
    %v1164 = vand.u32 %v1163, 4294901760
    %1165 = vmatpush1.msra.mxu0 %v1164
    %1166 = vmatprep.subr.mxu0 0.0
    %v1167 = vand.u32 %v724, 4294901760
    %v1168 = vsub.f32 %v724, %v1167
    %v1169 = vand.u32 %v1168, 4294901760
    %1170 = vmatpush1.msra.mxu0 %v1169
    %1171 = vmatprep.subr.mxu0 0.0
    %v1172 = vand.u32 %v723, 4294901760
    %v1173 = vsub.f32 %v723, %v1172
    %v1174 = vand.u32 %v1173, 4294901760
    %1175 = vmatpush1.msra.mxu0 %v1174
    %1176 = vmatprep.subr.mxu0 0.0
    %v1177 = vand.u32 %v722, 4294901760
    %v1178 = vsub.f32 %v722, %v1177
    %v1179 = vand.u32 %v1178, 4294901760
    %1180 = vmatpush1.msra.mxu0 %v1179
    %1181 = vmatprep.subr.mxu0 0.0
    %v1182 = vand.u32 %v721, 4294901760
    %v1183 = vsub.f32 %v721, %v1182
    %v1184 = vand.u32 %v1183, 4294901760
    %1185 = vmatpush1.msra.mxu0 %v1184
    %1186 = vmatprep.subr.mxu0 0.0
    %v1187 = vand.u32 %v720, 4294901760
    %v1188 = vsub.f32 %v720, %v1187
    %v1189 = vand.u32 %v1188, 4294901760
    %1190 = vmatpush1.msra.mxu0 %v1189
    %1191 = vmatprep.subr.mxu0 0.0
    %v1192 = vand.u32 %v719, 4294901760
    %v1193 = vsub.f32 %v719, %v1192
    %v1194 = vand.u32 %v1193, 4294901760
    %1195 = vmatpush1.msra.mxu0 %v1194
    %1196 = vmatprep.subr.mxu0 0.0
    %v1197 = vand.u32 %v718, 4294901760
    %v1198 = vsub.f32 %v718, %v1197
    %v1199 = vand.u32 %v1198, 4294901760
    %1200 = vmatpush1.msra.mxu0 %v1199
    %1201 = vmatprep.subr.mxu0 0.0
    %v1202 = vand.u32 %v717, 4294901760
    %v1203 = vsub.f32 %v717, %v1202
    %v1204 = vand.u32 %v1203, 4294901760
    %1205 = vmatpush1.msra.mxu0 %v1204
    %1206 = vmatprep.subr.mxu0 0.0
    %v1207 = vand.u32 %v716, 4294901760
    %v1208 = vsub.f32 %v716, %v1207
    %v1209 = vand.u32 %v1208, 4294901760
    %1210 = vmatpush1.msra.mxu0 %v1209
    %1211 = vmatprep.subr.mxu0 0.0
    %v1212 = vand.u32 %v715, 4294901760
    %v1213 = vsub.f32 %v715, %v1212
    %v1214 = vand.u32 %v1213, 4294901760
    %1215 = vmatpush1.msra.mxu0 %v1214
    %1216 = vmatprep.subr.mxu0 0.0
    %v1217 = vand.u32 %v714, 4294901760
    %v1218 = vsub.f32 %v714, %v1217
    %v1219 = vand.u32 %v1218, 4294901760
    %1220 = vmatpush1.msra.mxu0 %v1219
    %1221 = vmatprep.subr.mxu0 0.0
    %v1222 = vand.u32 %v713, 4294901760
    %v1223 = vsub.f32 %v713, %v1222
    %v1224 = vand.u32 %v1223, 4294901760
    %1225 = vmatpush1.msra.mxu0 %v1224
    %1226 = vmatprep.subr.mxu0 0.0
    %v1227 = vand.u32 %v712, 4294901760
    %v1228 = vsub.f32 %v712, %v1227
    %v1229 = vand.u32 %v1228, 4294901760
    %1230 = vmatpush1.msra.mxu0 %v1229
    %1231 = vmatprep.subr.mxu0 0.0
    %v1232 = vand.u32 %v711, 4294901760
    %v1233 = vsub.f32 %v711, %v1232
    %v1234 = vand.u32 %v1233, 4294901760
    %1235 = vmatpush1.msra.mxu0 %v1234
    %1236 = vmatprep.subr.mxu0 0.0
    %v1237 = vand.u32 %v710, 4294901760
    %v1238 = vsub.f32 %v710, %v1237
    %v1239 = vand.u32 %v1238, 4294901760
    %1240 = vmatpush1.msra.mxu0 %v1239
    %1241 = vmatprep.subr.mxu0 0.0
    %1242 = vmatpush2.msra.mxu0 0.0
    %1243 = vmatprep.subr.mxu0 0.0
    %1244 = vmatpush2.msra.mxu0 0.0
    %1245 = vmatprep.subr.mxu0 0.0
    %1246 = vmatpush2.msra.mxu0 0.0
    %1247 = vmatprep.subr.mxu0 0.0
    %1248 = vmatpush2.msra.mxu0 0.0
    %1249 = vmatprep.subr.mxu0 0.0
    %1250 = vmatpush2.msra.mxu0 0.0
    %1251 = vmatprep.subr.mxu0 0.0
    %1252 = vmatpush2.msra.mxu0 0.0
    %1253 = vmatprep.subr.mxu0 0.0
    %1254 = vmatpush2.msra.mxu0 0.0
    %1255 = vmatprep.subr.mxu0 0.0
    %1256 = vmatpush2.msra.mxu0 0.0
    %1257 = vmatprep.subr.mxu0 0.0
    %1258 = vmatpush2.msra.mxu0 0.0
    %1259 = vmatprep.subr.mxu0 0.0
    %1260 = vmatpush2.msra.mxu0 0.0
    %1261 = vmatprep.subr.mxu0 0.0
    %1262 = vmatpush2.msra.mxu0 0.0
    %1263 = vmatprep.subr.mxu0 0.0
    %1264 = vmatpush2.msra.mxu0 0.0
    %1265 = vmatprep.subr.mxu0 0.0
    %1266 = vmatpush2.msra.mxu0 0.0
    %1267 = vmatprep.subr.mxu0 0.0
    %1268 = vmatpush2.msra.mxu0 0.0
    %1269 = vmatprep.subr.mxu0 0.0
    %1270 = vmatpush2.msra.mxu0 0.0
    %1271 = vmatprep.subr.mxu0 0.0
    %1272 = vmatpush2.msra.mxu0 0.0
    %1273 = vmatprep.mubr.f32.mxu0 0.0
    %v1274 = vand.u32 %v46, 4294901760
    %1275 = vmatmul.mubr.f32.gmra.mxu0 %v1274
    %v1276 = vpop.f32.mrf.mxu0
    %v1277 = vadd.f32 %v1158, %v1276
    %v1278 = vpop.f32.mrf.mxu0
    %1279 = vdwg.mxu0
    %1280 = vmatprep.subr.mxu0 0.0
    %v1281 = vand.u32 %v725, 4294901760
    %1282 = vmatpush1.msra.mxu0 %v1281
    %1283 = vmatprep.subr.mxu0 0.0
    %v1284 = vand.u32 %v724, 4294901760
    %1285 = vmatpush1.msra.mxu0 %v1284
    %1286 = vmatprep.subr.mxu0 0.0
    %v1287 = vand.u32 %v723, 4294901760
    %1288 = vmatpush1.msra.mxu0 %v1287
    %1289 = vmatprep.subr.mxu0 0.0
    %v1290 = vand.u32 %v722, 4294901760
    %1291 = vmatpush1.msra.mxu0 %v1290
    %1292 = vmatprep.subr.mxu0 0.0
    %v1293 = vand.u32 %v721, 4294901760
    %1294 = vmatpush1.msra.mxu0 %v1293
    %1295 = vmatprep.subr.mxu0 0.0
    %v1296 = vand.u32 %v720, 4294901760
    %1297 = vmatpush1.msra.mxu0 %v1296
    %1298 = vmatprep.subr.mxu0 0.0
    %v1299 = vand.u32 %v719, 4294901760
    %1300 = vmatpush1.msra.mxu0 %v1299
    %1301 = vmatprep.subr.mxu0 0.0
    %v1302 = vand.u32 %v718, 4294901760
    %1303 = vmatpush1.msra.mxu0 %v1302
    %1304 = vmatprep.subr.mxu0 0.0
    %v1305 = vand.u32 %v717, 4294901760
    %1306 = vmatpush1.msra.mxu0 %v1305
    %1307 = vmatprep.subr.mxu0 0.0
    %v1308 = vand.u32 %v716, 4294901760
    %1309 = vmatpush1.msra.mxu0 %v1308
    %1310 = vmatprep.subr.mxu0 0.0
    %v1311 = vand.u32 %v715, 4294901760
    %1312 = vmatpush1.msra.mxu0 %v1311
    %1313 = vmatprep.subr.mxu0 0.0
    %v1314 = vand.u32 %v714, 4294901760
    %1315 = vmatpush1.msra.mxu0 %v1314
    %1316 = vmatprep.subr.mxu0 0.0
    %v1317 = vand.u32 %v713, 4294901760
    %1318 = vmatpush1.msra.mxu0 %v1317
    %1319 = vmatprep.subr.mxu0 0.0
    %v1320 = vand.u32 %v712, 4294901760
    %1321 = vmatpush1.msra.mxu0 %v1320
    %1322 = vmatprep.subr.mxu0 0.0
    %v1323 = vand.u32 %v711, 4294901760
    %1324 = vmatpush1.msra.mxu0 %v1323
    %1325 = vmatprep.subr.mxu0 0.0
    %v1326 = vand.u32 %v710, 4294901760
    %1327 = vmatpush1.msra.mxu0 %v1326
    %1328 = vmatprep.subr.mxu0 0.0
    %1329 = vmatpush2.msra.mxu0 0.0
    %1330 = vmatprep.subr.mxu0 0.0
    %1331 = vmatpush2.msra.mxu0 0.0
    %1332 = vmatprep.subr.mxu0 0.0
    %1333 = vmatpush2.msra.mxu0 0.0
    %1334 = vmatprep.subr.mxu0 0.0
    %1335 = vmatpush2.msra.mxu0 0.0
    %1336 = vmatprep.subr.mxu0 0.0
    %1337 = vmatpush2.msra.mxu0 0.0
    %1338 = vmatprep.subr.mxu0 0.0
    %1339 = vmatpush2.msra.mxu0 0.0
    %1340 = vmatprep.subr.mxu0 0.0
    %1341 = vmatpush2.msra.mxu0 0.0
    %1342 = vmatprep.subr.mxu0 0.0
    %1343 = vmatpush2.msra.mxu0 0.0
    %1344 = vmatprep.subr.mxu0 0.0
    %1345 = vmatpush2.msra.mxu0 0.0
    %1346 = vmatprep.subr.mxu0 0.0
    %1347 = vmatpush2.msra.mxu0 0.0
    %1348 = vmatprep.subr.mxu0 0.0
    %1349 = vmatpush2.msra.mxu0 0.0
    %1350 = vmatprep.subr.mxu0 0.0
    %1351 = vmatpush2.msra.mxu0 0.0
    %1352 = vmatprep.subr.mxu0 0.0
    %1353 = vmatpush2.msra.mxu0 0.0
    %1354 = vmatprep.subr.mxu0 0.0
    %1355 = vmatpush2.msra.mxu0 0.0
    %1356 = vmatprep.subr.mxu0 0.0
    %1357 = vmatpush2.msra.mxu0 0.0
    %1358 = vmatprep.subr.mxu0 0.0
    %1359 = vmatpush2.msra.mxu0 0.0
    %1360 = vmatprep.mubr.f32.mxu0 0.0
    %v1361 = vand.u32 %v46, 4294901760
    %1362 = vmatmul.mubr.f32.gmra.mxu0 %v1361
    %v1363 = vpop.f32.mrf.mxu0
    %v1364 = vadd.f32 %v1277, %v1363
    %v1365 = vpop.f32.mrf.mxu0
    %1366 = vdwg.mxu0
    %v1367 = vmul.f32 %v1364, %v46
    %1368 = vadd.xlane.f32.xlu0 %v1367
    %v1369 = vpop.xlane.xlu0 %1368
    %v1370 = vmul.f32 %v1369, 0.5
    %v1371 = vadd.f32 %v1370, 96.28574
    %s1372 = scalar_lea.vmem [#allocation5], 256
    %v1373 = vld [vmem:[%s1372] sm:$0xff]
    %v1374 = vld [vmem:[%s1372 + $0x8] sm:$0xff]
    %v1375 = vld [vmem:[%s1372 + $0x10] sm:$0xff]
    %v1376 = vld [vmem:[%s1372 + $0x18] sm:$0xff]
    %v1377 = vld [vmem:[%s1372 + $0x20] sm:$0xff]
    %v1378 = vld [vmem:[%s1372 + $0x28] sm:$0xff]
    %v1379 = vld [vmem:[%s1372 + $0x30] sm:$0xff]
    %v1380 = vld [vmem:[%s1372 + $0x38] sm:$0xff]
    %v1381 = vld [vmem:[%s1372 + $0x40] sm:$0xff]
    %v1382 = vld [vmem:[%s1372 + $0x48] sm:$0xff]
    %v1383 = vld [vmem:[%s1372 + $0x50] sm:$0xff]
    %v1384 = vld [vmem:[%s1372 + $0x58] sm:$0xff]
    %v1385 = vld [vmem:[%s1372 + $0x60] sm:$0xff]
    %v1386 = vld [vmem:[%s1372 + $0x68] sm:$0xff]
    %v1387 = vld [vmem:[%s1372 + $0x70] sm:$0xff]
    %v1388 = vld [vmem:[%s1372 + $0x78] sm:$0xff]
    %1389 = vmatprep.subr.mxu0 0.0
    %v1390 = vand.u32 %v1388, 4294901760
    %1391 = vmatpush1.msra.mxu0 %v1390
    %1392 = vmatprep.subr.mxu0 0.0
    %v1393 = vand.u32 %v1387, 4294901760
    %1394 = vmatpush1.msra.mxu0 %v1393
    %1395 = vmatprep.subr.mxu0 0.0
    %v1396 = vand.u32 %v1386, 4294901760
    %1397 = vmatpush1.msra.mxu0 %v1396
    %1398 = vmatprep.subr.mxu0 0.0
    %v1399 = vand.u32 %v1385, 4294901760
    %1400 = vmatpush1.msra.mxu0 %v1399
    %1401 = vmatprep.subr.mxu0 0.0
    %v1402 = vand.u32 %v1384, 4294901760
    %1403 = vmatpush1.msra.mxu0 %v1402
    %1404 = vmatprep.subr.mxu0 0.0
    %v1405 = vand.u32 %v1383, 4294901760
    %1406 = vmatpush1.msra.mxu0 %v1405
    %1407 = vmatprep.subr.mxu0 0.0
    %v1408 = vand.u32 %v1382, 4294901760
    %1409 = vmatpush1.msra.mxu0 %v1408
    %1410 = vmatprep.subr.mxu0 0.0
    %v1411 = vand.u32 %v1381, 4294901760
    %1412 = vmatpush1.msra.mxu0 %v1411
    %1413 = vmatprep.subr.mxu0 0.0
    %v1414 = vand.u32 %v1380, 4294901760
    %1415 = vmatpush1.msra.mxu0 %v1414
    %1416 = vmatprep.subr.mxu0 0.0
    %v1417 = vand.u32 %v1379, 4294901760
    %1418 = vmatpush1.msra.mxu0 %v1417
    %1419 = vmatprep.subr.mxu0 0.0
    %v1420 = vand.u32 %v1378, 4294901760
    %1421 = vmatpush1.msra.mxu0 %v1420
    %1422 = vmatprep.subr.mxu0 0.0
    %v1423 = vand.u32 %v1377, 4294901760
    %1424 = vmatpush1.msra.mxu0 %v1423
    %1425 = vmatprep.subr.mxu0 0.0
    %v1426 = vand.u32 %v1376, 4294901760
    %1427 = vmatpush1.msra.mxu0 %v1426
    %1428 = vmatprep.subr.mxu0 0.0
    %v1429 = vand.u32 %v1375, 4294901760
    %1430 = vmatpush1.msra.mxu0 %v1429
    %1431 = vmatprep.subr.mxu0 0.0
    %v1432 = vand.u32 %v1374, 4294901760
    %1433 = vmatpush1.msra.mxu0 %v1432
    %1434 = vmatprep.subr.mxu0 0.0
    %v1435 = vand.u32 %v1373, 4294901760
    %1436 = vmatpush1.msra.mxu0 %v1435
    %1437 = vmatprep.subr.mxu0 0.0
    %1438 = vmatpush2.msra.mxu0 0.0
    %1439 = vmatprep.subr.mxu0 0.0
    %1440 = vmatpush2.msra.mxu0 0.0
    %1441 = vmatprep.subr.mxu0 0.0
    %1442 = vmatpush2.msra.mxu0 0.0
    %1443 = vmatprep.subr.mxu0 0.0
    %1444 = vmatpush2.msra.mxu0 0.0
    %1445 = vmatprep.subr.mxu0 0.0
    %1446 = vmatpush2.msra.mxu0 0.0
    %1447 = vmatprep.subr.mxu0 0.0
    %1448 = vmatpush2.msra.mxu0 0.0
    %1449 = vmatprep.subr.mxu0 0.0
    %1450 = vmatpush2.msra.mxu0 0.0
    %1451 = vmatprep.subr.mxu0 0.0
    %1452 = vmatpush2.msra.mxu0 0.0
    %1453 = vmatprep.subr.mxu0 0.0
    %1454 = vmatpush2.msra.mxu0 0.0
    %1455 = vmatprep.subr.mxu0 0.0
    %1456 = vmatpush2.msra.mxu0 0.0
    %1457 = vmatprep.subr.mxu0 0.0
    %1458 = vmatpush2.msra.mxu0 0.0
    %1459 = vmatprep.subr.mxu0 0.0
    %1460 = vmatpush2.msra.mxu0 0.0
    %1461 = vmatprep.subr.mxu0 0.0
    %1462 = vmatpush2.msra.mxu0 0.0
    %1463 = vmatprep.subr.mxu0 0.0
    %1464 = vmatpush2.msra.mxu0 0.0
    %1465 = vmatprep.subr.mxu0 0.0
    %1466 = vmatpush2.msra.mxu0 0.0
    %1467 = vmatprep.subr.mxu0 0.0
    %1468 = vmatpush2.msra.mxu0 0.0
    %1469 = vmatprep.mubr.f32.mxu0 0.0
    %v1470 = vand.u32 %v46, 4294901760
    %v1471 = vsub.f32 %v46, %v1470
    %v1472 = vand.u32 %v1471, 4294901760
    %v1473 = vsub.f32 %v1471, %v1472
    %v1474 = vand.u32 %v1473, 4294901760
    %1475 = vmatmul.mubr.f32.gmra.mxu0 %v1474
    %v1476 = vpop.f32.mrf.mxu0
    %v1477 = vadd.f32 0.0, %v1476
    %v1478 = vpop.f32.mrf.mxu0
    %1479 = vdwg.mxu0
    %1480 = vmatprep.subr.mxu0 0.0
    %v1481 = vand.u32 %v1388, 4294901760
    %v1482 = vsub.f32 %v1388, %v1481
    %v1483 = vand.u32 %v1482, 4294901760
    %v1484 = vsub.f32 %v1482, %v1483
    %v1485 = vand.u32 %v1484, 4294901760
    %1486 = vmatpush1.msra.mxu0 %v1485
    %1487 = vmatprep.subr.mxu0 0.0
    %v1488 = vand.u32 %v1387, 4294901760
    %v1489 = vsub.f32 %v1387, %v1488
    %v1490 = vand.u32 %v1489, 4294901760
    %v1491 = vsub.f32 %v1489, %v1490
    %v1492 = vand.u32 %v1491, 4294901760
    %1493 = vmatpush1.msra.mxu0 %v1492
    %1494 = vmatprep.subr.mxu0 0.0
    %v1495 = vand.u32 %v1386, 4294901760
    %v1496 = vsub.f32 %v1386, %v1495
    %v1497 = vand.u32 %v1496, 4294901760
    %v1498 = vsub.f32 %v1496, %v1497
    %v1499 = vand.u32 %v1498, 4294901760
    %1500 = vmatpush1.msra.mxu0 %v1499
    %1501 = vmatprep.subr.mxu0 0.0
    %v1502 = vand.u32 %v1385, 4294901760
    %v1503 = vsub.f32 %v1385, %v1502
    %v1504 = vand.u32 %v1503, 4294901760
    %v1505 = vsub.f32 %v1503, %v1504
    %v1506 = vand.u32 %v1505, 4294901760
    %1507 = vmatpush1.msra.mxu0 %v1506
    %1508 = vmatprep.subr.mxu0 0.0
    %v1509 = vand.u32 %v1384, 4294901760
    %v1510 = vsub.f32 %v1384, %v1509
    %v1511 = vand.u32 %v1510, 4294901760
    %v1512 = vsub.f32 %v1510, %v1511
    %v1513 = vand.u32 %v1512, 4294901760
    %1514 = vmatpush1.msra.mxu0 %v1513
    %1515 = vmatprep.subr.mxu0 0.0
    %v1516 = vand.u32 %v1383, 4294901760
    %v1517 = vsub.f32 %v1383, %v1516
    %v1518 = vand.u32 %v1517, 4294901760
    %v1519 = vsub.f32 %v1517, %v1518
    %v1520 = vand.u32 %v1519, 4294901760
    %1521 = vmatpush1.msra.mxu0 %v1520
    %1522 = vmatprep.subr.mxu0 0.0
    %v1523 = vand.u32 %v1382, 4294901760
    %v1524 = vsub.f32 %v1382, %v1523
    %v1525 = vand.u32 %v1524, 4294901760
    %v1526 = vsub.f32 %v1524, %v1525
    %v1527 = vand.u32 %v1526, 4294901760
    %1528 = vmatpush1.msra.mxu0 %v1527
    %1529 = vmatprep.subr.mxu0 0.0
    %v1530 = vand.u32 %v1381, 4294901760
    %v1531 = vsub.f32 %v1381, %v1530
    %v1532 = vand.u32 %v1531, 4294901760
    %v1533 = vsub.f32 %v1531, %v1532
    %v1534 = vand.u32 %v1533, 4294901760
    %1535 = vmatpush1.msra.mxu0 %v1534
    %1536 = vmatprep.subr.mxu0 0.0
    %v1537 = vand.u32 %v1380, 4294901760
    %v1538 = vsub.f32 %v1380, %v1537
    %v1539 = vand.u32 %v1538, 4294901760
    %v1540 = vsub.f32 %v1538, %v1539
    %v1541 = vand.u32 %v1540, 4294901760
    %1542 = vmatpush1.msra.mxu0 %v1541
    %1543 = vmatprep.subr.mxu0 0.0
    %v1544 = vand.u32 %v1379, 4294901760
    %v1545 = vsub.f32 %v1379, %v1544
    %v1546 = vand.u32 %v1545, 4294901760
    %v1547 = vsub.f32 %v1545, %v1546
    %v1548 = vand.u32 %v1547, 4294901760
    %1549 = vmatpush1.msra.mxu0 %v1548
    %1550 = vmatprep.subr.mxu0 0.0
    %v1551 = vand.u32 %v1378, 4294901760
    %v1552 = vsub.f32 %v1378, %v1551
    %v1553 = vand.u32 %v1552, 4294901760
    %v1554 = vsub.f32 %v1552, %v1553
    %v1555 = vand.u32 %v1554, 4294901760
    %1556 = vmatpush1.msra.mxu0 %v1555
    %1557 = vmatprep.subr.mxu0 0.0
    %v1558 = vand.u32 %v1377, 4294901760
    %v1559 = vsub.f32 %v1377, %v1558
    %v1560 = vand.u32 %v1559, 4294901760
    %v1561 = vsub.f32 %v1559, %v1560
    %v1562 = vand.u32 %v1561, 4294901760
    %1563 = vmatpush1.msra.mxu0 %v1562
    %1564 = vmatprep.subr.mxu0 0.0
    %v1565 = vand.u32 %v1376, 4294901760
    %v1566 = vsub.f32 %v1376, %v1565
    %v1567 = vand.u32 %v1566, 4294901760
    %v1568 = vsub.f32 %v1566, %v1567
    %v1569 = vand.u32 %v1568, 4294901760
    %1570 = vmatpush1.msra.mxu0 %v1569
    %1571 = vmatprep.subr.mxu0 0.0
    %v1572 = vand.u32 %v1375, 4294901760
    %v1573 = vsub.f32 %v1375, %v1572
    %v1574 = vand.u32 %v1573, 4294901760
    %v1575 = vsub.f32 %v1573, %v1574
    %v1576 = vand.u32 %v1575, 4294901760
    %1577 = vmatpush1.msra.mxu0 %v1576
    %1578 = vmatprep.subr.mxu0 0.0
    %v1579 = vand.u32 %v1374, 4294901760
    %v1580 = vsub.f32 %v1374, %v1579
    %v1581 = vand.u32 %v1580, 4294901760
    %v1582 = vsub.f32 %v1580, %v1581
    %v1583 = vand.u32 %v1582, 4294901760
    %1584 = vmatpush1.msra.mxu0 %v1583
    %1585 = vmatprep.subr.mxu0 0.0
    %v1586 = vand.u32 %v1373, 4294901760
    %v1587 = vsub.f32 %v1373, %v1586
    %v1588 = vand.u32 %v1587, 4294901760
    %v1589 = vsub.f32 %v1587, %v1588
    %v1590 = vand.u32 %v1589, 4294901760
    %1591 = vmatpush1.msra.mxu0 %v1590
    %1592 = vmatprep.subr.mxu0 0.0
    %1593 = vmatpush2.msra.mxu0 0.0
    %1594 = vmatprep.subr.mxu0 0.0
    %1595 = vmatpush2.msra.mxu0 0.0
    %1596 = vmatprep.subr.mxu0 0.0
    %1597 = vmatpush2.msra.mxu0 0.0
    %1598 = vmatprep.subr.mxu0 0.0
    %1599 = vmatpush2.msra.mxu0 0.0
    %1600 = vmatprep.subr.mxu0 0.0
    %1601 = vmatpush2.msra.mxu0 0.0
    %1602 = vmatprep.subr.mxu0 0.0
    %1603 = vmatpush2.msra.mxu0 0.0
    %1604 = vmatprep.subr.mxu0 0.0
    %1605 = vmatpush2.msra.mxu0 0.0
    %1606 = vmatprep.subr.mxu0 0.0
    %1607 = vmatpush2.msra.mxu0 0.0
    %1608 = vmatprep.subr.mxu0 0.0
    %1609 = vmatpush2.msra.mxu0 0.0
    %1610 = vmatprep.subr.mxu0 0.0
    %1611 = vmatpush2.msra.mxu0 0.0
    %1612 = vmatprep.subr.mxu0 0.0
    %1613 = vmatpush2.msra.mxu0 0.0
    %1614 = vmatprep.subr.mxu0 0.0
    %1615 = vmatpush2.msra.mxu0 0.0
    %1616 = vmatprep.subr.mxu0 0.0
    %1617 = vmatpush2.msra.mxu0 0.0
    %1618 = vmatprep.subr.mxu0 0.0
    %1619 = vmatpush2.msra.mxu0 0.0
    %1620 = vmatprep.subr.mxu0 0.0
    %1621 = vmatpush2.msra.mxu0 0.0
    %1622 = vmatprep.subr.mxu0 0.0
    %1623 = vmatpush2.msra.mxu0 0.0
    %1624 = vmatprep.mubr.f32.mxu0 0.0
    %v1625 = vand.u32 %v46, 4294901760
    %1626 = vmatmul.mubr.f32.gmra.mxu0 %v1625
    %v1627 = vpop.f32.mrf.mxu0
    %v1628 = vadd.f32 %v1477, %v1627
    %v1629 = vpop.f32.mrf.mxu0
    %1630 = vdwg.mxu0
    %1631 = vmatprep.subr.mxu0 0.0
    %v1632 = vand.u32 %v1388, 4294901760
    %v1633 = vsub.f32 %v1388, %v1632
    %1634 = vmatpush1.msra.mxu0 %v1633
    %1635 = vmatprep.subr.mxu0 0.0
    %v1636 = vand.u32 %v1387, 4294901760
    %v1637 = vsub.f32 %v1387, %v1636
    %1638 = vmatpush1.msra.mxu0 %v1637
    %1639 = vmatprep.subr.mxu0 0.0
    %v1640 = vand.u32 %v1386, 4294901760
    %v1641 = vsub.f32 %v1386, %v1640
    %1642 = vmatpush1.msra.mxu0 %v1641
    %1643 = vmatprep.subr.mxu0 0.0
    %v1644 = vand.u32 %v1385, 4294901760
    %v1645 = vsub.f32 %v1385, %v1644
    %1646 = vmatpush1.msra.mxu0 %v1645
    %1647 = vmatprep.subr.mxu0 0.0
    %v1648 = vand.u32 %v1384, 4294901760
    %v1649 = vsub.f32 %v1384, %v1648
    %1650 = vmatpush1.msra.mxu0 %v1649
    %1651 = vmatprep.subr.mxu0 0.0
    %v1652 = vand.u32 %v1383, 4294901760
    %v1653 = vsub.f32 %v1383, %v1652
    %1654 = vmatpush1.msra.mxu0 %v1653
    %1655 = vmatprep.subr.mxu0 0.0
    %v1656 = vand.u32 %v1382, 4294901760
    %v1657 = vsub.f32 %v1382, %v1656
    %1658 = vmatpush1.msra.mxu0 %v1657
    %1659 = vmatprep.subr.mxu0 0.0
    %v1660 = vand.u32 %v1381, 4294901760
    %v1661 = vsub.f32 %v1381, %v1660
    %1662 = vmatpush1.msra.mxu0 %v1661
    %1663 = vmatprep.subr.mxu0 0.0
    %v1664 = vand.u32 %v1380, 4294901760
    %v1665 = vsub.f32 %v1380, %v1664
    %1666 = vmatpush1.msra.mxu0 %v1665
    %1667 = vmatprep.subr.mxu0 0.0
    %v1668 = vand.u32 %v1379, 4294901760
    %v1669 = vsub.f32 %v1379, %v1668
    %1670 = vmatpush1.msra.mxu0 %v1669
    %1671 = vmatprep.subr.mxu0 0.0
    %v1672 = vand.u32 %v1378, 4294901760
    %v1673 = vsub.f32 %v1378, %v1672
    %1674 = vmatpush1.msra.mxu0 %v1673
    %1675 = vmatprep.subr.mxu0 0.0
    %v1676 = vand.u32 %v1377, 4294901760
    %v1677 = vsub.f32 %v1377, %v1676
    %1678 = vmatpush1.msra.mxu0 %v1677
    %1679 = vmatprep.subr.mxu0 0.0
    %v1680 = vand.u32 %v1376, 4294901760
    %v1681 = vsub.f32 %v1376, %v1680
    %1682 = vmatpush1.msra.mxu0 %v1681
    %1683 = vmatprep.subr.mxu0 0.0
    %v1684 = vand.u32 %v1375, 4294901760
    %v1685 = vsub.f32 %v1375, %v1684
    %1686 = vmatpush1.msra.mxu0 %v1685
    %1687 = vmatprep.subr.mxu0 0.0
    %v1688 = vand.u32 %v1374, 4294901760
    %v1689 = vsub.f32 %v1374, %v1688
    %1690 = vmatpush1.msra.mxu0 %v1689
    %1691 = vmatprep.subr.mxu0 0.0
    %v1692 = vand.u32 %v1373, 4294901760
    %v1693 = vsub.f32 %v1373, %v1692
    %1694 = vmatpush1.msra.mxu0 %v1693
    %1695 = vmatprep.subr.mxu0 0.0
    %1696 = vmatpush2.msra.mxu0 0.0
    %1697 = vmatprep.subr.mxu0 0.0
    %1698 = vmatpush2.msra.mxu0 0.0
    %1699 = vmatprep.subr.mxu0 0.0
    %1700 = vmatpush2.msra.mxu0 0.0
    %1701 = vmatprep.subr.mxu0 0.0
    %1702 = vmatpush2.msra.mxu0 0.0
    %1703 = vmatprep.subr.mxu0 0.0
    %1704 = vmatpush2.msra.mxu0 0.0
    %1705 = vmatprep.subr.mxu0 0.0
    %1706 = vmatpush2.msra.mxu0 0.0
    %1707 = vmatprep.subr.mxu0 0.0
    %1708 = vmatpush2.msra.mxu0 0.0
    %1709 = vmatprep.subr.mxu0 0.0
    %1710 = vmatpush2.msra.mxu0 0.0
    %1711 = vmatprep.subr.mxu0 0.0
    %1712 = vmatpush2.msra.mxu0 0.0
    %1713 = vmatprep.subr.mxu0 0.0
    %1714 = vmatpush2.msra.mxu0 0.0
    %1715 = vmatprep.subr.mxu0 0.0
    %1716 = vmatpush2.msra.mxu0 0.0
    %1717 = vmatprep.subr.mxu0 0.0
    %1718 = vmatpush2.msra.mxu0 0.0
    %1719 = vmatprep.subr.mxu0 0.0
    %1720 = vmatpush2.msra.mxu0 0.0
    %1721 = vmatprep.subr.mxu0 0.0
    %1722 = vmatpush2.msra.mxu0 0.0
    %1723 = vmatprep.subr.mxu0 0.0
    %1724 = vmatpush2.msra.mxu0 0.0
    %1725 = vmatprep.subr.mxu0 0.0
    %1726 = vmatpush2.msra.mxu0 0.0
    %1727 = vmatprep.mubr.f32.mxu0 0.0
    %v1728 = vand.u32 %v46, 4294901760
    %v1729 = vsub.f32 %v46, %v1728
    %1730 = vmatmul.mubr.f32.gmra.mxu0 %v1729
    %v1731 = vpop.f32.mrf.mxu0
    %v1732 = vadd.f32 %v1628, %v1731
    %v1733 = vpop.f32.mrf.mxu0
    %1734 = vdwg.mxu0
    %1735 = vmatprep.subr.mxu0 0.0
    %v1736 = vand.u32 %v1388, 4294901760
    %1737 = vmatpush1.msra.mxu0 %v1736
    %1738 = vmatprep.subr.mxu0 0.0
    %v1739 = vand.u32 %v1387, 4294901760
    %1740 = vmatpush1.msra.mxu0 %v1739
    %1741 = vmatprep.subr.mxu0 0.0
    %v1742 = vand.u32 %v1386, 4294901760
    %1743 = vmatpush1.msra.mxu0 %v1742
    %1744 = vmatprep.subr.mxu0 0.0
    %v1745 = vand.u32 %v1385, 4294901760
    %1746 = vmatpush1.msra.mxu0 %v1745
    %1747 = vmatprep.subr.mxu0 0.0
    %v1748 = vand.u32 %v1384, 4294901760
    %1749 = vmatpush1.msra.mxu0 %v1748
    %1750 = vmatprep.subr.mxu0 0.0
    %v1751 = vand.u32 %v1383, 4294901760
    %1752 = vmatpush1.msra.mxu0 %v1751
    %1753 = vmatprep.subr.mxu0 0.0
    %v1754 = vand.u32 %v1382, 4294901760
    %1755 = vmatpush1.msra.mxu0 %v1754
    %1756 = vmatprep.subr.mxu0 0.0
    %v1757 = vand.u32 %v1381, 4294901760
    %1758 = vmatpush1.msra.mxu0 %v1757
    %1759 = vmatprep.subr.mxu0 0.0
    %v1760 = vand.u32 %v1380, 4294901760
    %1761 = vmatpush1.msra.mxu0 %v1760
    %1762 = vmatprep.subr.mxu0 0.0
    %v1763 = vand.u32 %v1379, 4294901760
    %1764 = vmatpush1.msra.mxu0 %v1763
    %1765 = vmatprep.subr.mxu0 0.0
    %v1766 = vand.u32 %v1378, 4294901760
    %1767 = vmatpush1.msra.mxu0 %v1766
    %1768 = vmatprep.subr.mxu0 0.0
    %v1769 = vand.u32 %v1377, 4294901760
    %1770 = vmatpush1.msra.mxu0 %v1769
    %1771 = vmatprep.subr.mxu0 0.0
    %v1772 = vand.u32 %v1376, 4294901760
    %1773 = vmatpush1.msra.mxu0 %v1772
    %1774 = vmatprep.subr.mxu0 0.0
    %v1775 = vand.u32 %v1375, 4294901760
    %1776 = vmatpush1.msra.mxu0 %v1775
    %1777 = vmatprep.subr.mxu0 0.0
    %v1778 = vand.u32 %v1374, 4294901760
    %1779 = vmatpush1.msra.mxu0 %v1778
    %1780 = vmatprep.subr.mxu0 0.0
    %v1781 = vand.u32 %v1373, 4294901760
    %1782 = vmatpush1.msra.mxu0 %v1781
    %1783 = vmatprep.subr.mxu0 0.0
    %1784 = vmatpush2.msra.mxu0 0.0
    %1785 = vmatprep.subr.mxu0 0.0
    %1786 = vmatpush2.msra.mxu0 0.0
    %1787 = vmatprep.subr.mxu0 0.0
    %1788 = vmatpush2.msra.mxu0 0.0
    %1789 = vmatprep.subr.mxu0 0.0
    %1790 = vmatpush2.msra.mxu0 0.0
    %1791 = vmatprep.subr.mxu0 0.0
    %1792 = vmatpush2.msra.mxu0 0.0
    %1793 = vmatprep.subr.mxu0 0.0
    %1794 = vmatpush2.msra.mxu0 0.0
    %1795 = vmatprep.subr.mxu0 0.0
    %1796 = vmatpush2.msra.mxu0 0.0
    %1797 = vmatprep.subr.mxu0 0.0
    %1798 = vmatpush2.msra.mxu0 0.0
    %1799 = vmatprep.subr.mxu0 0.0
    %1800 = vmatpush2.msra.mxu0 0.0
    %1801 = vmatprep.subr.mxu0 0.0
    %1802 = vmatpush2.msra.mxu0 0.0
    %1803 = vmatprep.subr.mxu0 0.0
    %1804 = vmatpush2.msra.mxu0 0.0
    %1805 = vmatprep.subr.mxu0 0.0
    %1806 = vmatpush2.msra.mxu0 0.0
    %1807 = vmatprep.subr.mxu0 0.0
    %1808 = vmatpush2.msra.mxu0 0.0
    %1809 = vmatprep.subr.mxu0 0.0
    %1810 = vmatpush2.msra.mxu0 0.0
    %1811 = vmatprep.subr.mxu0 0.0
    %1812 = vmatpush2.msra.mxu0 0.0
    %1813 = vmatprep.subr.mxu0 0.0
    %1814 = vmatpush2.msra.mxu0 0.0
    %1815 = vmatprep.mubr.f32.mxu0 0.0
    %v1816 = vand.u32 %v46, 4294901760
    %v1817 = vsub.f32 %v46, %v1816
    %v1818 = vand.u32 %v1817, 4294901760
    %1819 = vmatmul.mubr.f32.gmra.mxu0 %v1818
    %v1820 = vpop.f32.mrf.mxu0
    %v1821 = vadd.f32 %v1732, %v1820
    %v1822 = vpop.f32.mrf.mxu0
    %1823 = vdwg.mxu0
    %1824 = vmatprep.subr.mxu0 0.0
    %v1825 = vand.u32 %v1388, 4294901760
    %v1826 = vsub.f32 %v1388, %v1825
    %v1827 = vand.u32 %v1826, 4294901760
    %1828 = vmatpush1.msra.mxu0 %v1827
    %1829 = vmatprep.subr.mxu0 0.0
    %v1830 = vand.u32 %v1387, 4294901760
    %v1831 = vsub.f32 %v1387, %v1830
    %v1832 = vand.u32 %v1831, 4294901760
    %1833 = vmatpush1.msra.mxu0 %v1832
    %1834 = vmatprep.subr.mxu0 0.0
    %v1835 = vand.u32 %v1386, 4294901760
    %v1836 = vsub.f32 %v1386, %v1835
    %v1837 = vand.u32 %v1836, 4294901760
    %1838 = vmatpush1.msra.mxu0 %v1837
    %1839 = vmatprep.subr.mxu0 0.0
    %v1840 = vand.u32 %v1385, 4294901760
    %v1841 = vsub.f32 %v1385, %v1840
    %v1842 = vand.u32 %v1841, 4294901760
    %1843 = vmatpush1.msra.mxu0 %v1842
    %1844 = vmatprep.subr.mxu0 0.0
    %v1845 = vand.u32 %v1384, 4294901760
    %v1846 = vsub.f32 %v1384, %v1845
    %v1847 = vand.u32 %v1846, 4294901760
    %1848 = vmatpush1.msra.mxu0 %v1847
    %1849 = vmatprep.subr.mxu0 0.0
    %v1850 = vand.u32 %v1383, 4294901760
    %v1851 = vsub.f32 %v1383, %v1850
    %v1852 = vand.u32 %v1851, 4294901760
    %1853 = vmatpush1.msra.mxu0 %v1852
    %1854 = vmatprep.subr.mxu0 0.0
    %v1855 = vand.u32 %v1382, 4294901760
    %v1856 = vsub.f32 %v1382, %v1855
    %v1857 = vand.u32 %v1856, 4294901760
    %1858 = vmatpush1.msra.mxu0 %v1857
    %1859 = vmatprep.subr.mxu0 0.0
    %v1860 = vand.u32 %v1381, 4294901760
    %v1861 = vsub.f32 %v1381, %v1860
    %v1862 = vand.u32 %v1861, 4294901760
    %1863 = vmatpush1.msra.mxu0 %v1862
    %1864 = vmatprep.subr.mxu0 0.0
    %v1865 = vand.u32 %v1380, 4294901760
    %v1866 = vsub.f32 %v1380, %v1865
    %v1867 = vand.u32 %v1866, 4294901760
    %1868 = vmatpush1.msra.mxu0 %v1867
    %1869 = vmatprep.subr.mxu0 0.0
    %v1870 = vand.u32 %v1379, 4294901760
    %v1871 = vsub.f32 %v1379, %v1870
    %v1872 = vand.u32 %v1871, 4294901760
    %1873 = vmatpush1.msra.mxu0 %v1872
    %1874 = vmatprep.subr.mxu0 0.0
    %v1875 = vand.u32 %v1378, 4294901760
    %v1876 = vsub.f32 %v1378, %v1875
    %v1877 = vand.u32 %v1876, 4294901760
    %1878 = vmatpush1.msra.mxu0 %v1877
    %1879 = vmatprep.subr.mxu0 0.0
    %v1880 = vand.u32 %v1377, 4294901760
    %v1881 = vsub.f32 %v1377, %v1880
    %v1882 = vand.u32 %v1881, 4294901760
    %1883 = vmatpush1.msra.mxu0 %v1882
    %1884 = vmatprep.subr.mxu0 0.0
    %v1885 = vand.u32 %v1376, 4294901760
    %v1886 = vsub.f32 %v1376, %v1885
    %v1887 = vand.u32 %v1886, 4294901760
    %1888 = vmatpush1.msra.mxu0 %v1887
    %1889 = vmatprep.subr.mxu0 0.0
    %v1890 = vand.u32 %v1375, 4294901760
    %v1891 = vsub.f32 %v1375, %v1890
    %v1892 = vand.u32 %v1891, 4294901760
    %1893 = vmatpush1.msra.mxu0 %v1892
    %1894 = vmatprep.subr.mxu0 0.0
    %v1895 = vand.u32 %v1374, 4294901760
    %v1896 = vsub.f32 %v1374, %v1895
    %v1897 = vand.u32 %v1896, 4294901760
    %1898 = vmatpush1.msra.mxu0 %v1897
    %1899 = vmatprep.subr.mxu0 0.0
    %v1900 = vand.u32 %v1373, 4294901760
    %v1901 = vsub.f32 %v1373, %v1900
    %v1902 = vand.u32 %v1901, 4294901760
    %1903 = vmatpush1.msra.mxu0 %v1902
    %1904 = vmatprep.subr.mxu0 0.0
    %1905 = vmatpush2.msra.mxu0 0.0
    %1906 = vmatprep.subr.mxu0 0.0
    %1907 = vmatpush2.msra.mxu0 0.0
    %1908 = vmatprep.subr.mxu0 0.0
    %1909 = vmatpush2.msra.mxu0 0.0
    %1910 = vmatprep.subr.mxu0 0.0
    %1911 = vmatpush2.msra.mxu0 0.0
    %1912 = vmatprep.subr.mxu0 0.0
    %1913 = vmatpush2.msra.mxu0 0.0
    %1914 = vmatprep.subr.mxu0 0.0
    %1915 = vmatpush2.msra.mxu0 0.0
    %1916 = vmatprep.subr.mxu0 0.0
    %1917 = vmatpush2.msra.mxu0 0.0
    %1918 = vmatprep.subr.mxu0 0.0
    %1919 = vmatpush2.msra.mxu0 0.0
    %1920 = vmatprep.subr.mxu0 0.0
    %1921 = vmatpush2.msra.mxu0 0.0
    %1922 = vmatprep.subr.mxu0 0.0
    %1923 = vmatpush2.msra.mxu0 0.0
    %1924 = vmatprep.subr.mxu0 0.0
    %1925 = vmatpush2.msra.mxu0 0.0
    %1926 = vmatprep.subr.mxu0 0.0
    %1927 = vmatpush2.msra.mxu0 0.0
    %1928 = vmatprep.subr.mxu0 0.0
    %1929 = vmatpush2.msra.mxu0 0.0
    %1930 = vmatprep.subr.mxu0 0.0
    %1931 = vmatpush2.msra.mxu0 0.0
    %1932 = vmatprep.subr.mxu0 0.0
    %1933 = vmatpush2.msra.mxu0 0.0
    %1934 = vmatprep.subr.mxu0 0.0
    %1935 = vmatpush2.msra.mxu0 0.0
    %1936 = vmatprep.mubr.f32.mxu0 0.0
    %v1937 = vand.u32 %v46, 4294901760
    %1938 = vmatmul.mubr.f32.gmra.mxu0 %v1937
    %v1939 = vpop.f32.mrf.mxu0
    %v1940 = vadd.f32 %v1821, %v1939
    %v1941 = vpop.f32.mrf.mxu0
    %1942 = vdwg.mxu0
    %1943 = vmatprep.subr.mxu0 0.0
    %v1944 = vand.u32 %v1388, 4294901760
    %1945 = vmatpush1.msra.mxu0 %v1944
    %1946 = vmatprep.subr.mxu0 0.0
    %v1947 = vand.u32 %v1387, 4294901760
    %1948 = vmatpush1.msra.mxu0 %v1947
    %1949 = vmatprep.subr.mxu0 0.0
    %v1950 = vand.u32 %v1386, 4294901760
    %1951 = vmatpush1.msra.mxu0 %v1950
    %1952 = vmatprep.subr.mxu0 0.0
    %v1953 = vand.u32 %v1385, 4294901760
    %1954 = vmatpush1.msra.mxu0 %v1953
    %1955 = vmatprep.subr.mxu0 0.0
    %v1956 = vand.u32 %v1384, 4294901760
    %1957 = vmatpush1.msra.mxu0 %v1956
    %1958 = vmatprep.subr.mxu0 0.0
    %v1959 = vand.u32 %v1383, 4294901760
    %1960 = vmatpush1.msra.mxu0 %v1959
    %1961 = vmatprep.subr.mxu0 0.0
    %v1962 = vand.u32 %v1382, 4294901760
    %1963 = vmatpush1.msra.mxu0 %v1962
    %1964 = vmatprep.subr.mxu0 0.0
    %v1965 = vand.u32 %v1381, 4294901760
    %1966 = vmatpush1.msra.mxu0 %v1965
    %1967 = vmatprep.subr.mxu0 0.0
    %v1968 = vand.u32 %v1380, 4294901760
    %1969 = vmatpush1.msra.mxu0 %v1968
    %1970 = vmatprep.subr.mxu0 0.0
    %v1971 = vand.u32 %v1379, 4294901760
    %1972 = vmatpush1.msra.mxu0 %v1971
    %1973 = vmatprep.subr.mxu0 0.0
    %v1974 = vand.u32 %v1378, 4294901760
    %1975 = vmatpush1.msra.mxu0 %v1974
    %1976 = vmatprep.subr.mxu0 0.0
    %v1977 = vand.u32 %v1377, 4294901760
    %1978 = vmatpush1.msra.mxu0 %v1977
    %1979 = vmatprep.subr.mxu0 0.0
    %v1980 = vand.u32 %v1376, 4294901760
    %1981 = vmatpush1.msra.mxu0 %v1980
    %1982 = vmatprep.subr.mxu0 0.0
    %v1983 = vand.u32 %v1375, 4294901760
    %1984 = vmatpush1.msra.mxu0 %v1983
    %1985 = vmatprep.subr.mxu0 0.0
    %v1986 = vand.u32 %v1374, 4294901760
    %1987 = vmatpush1.msra.mxu0 %v1986
    %1988 = vmatprep.subr.mxu0 0.0
    %v1989 = vand.u32 %v1373, 4294901760
    %1990 = vmatpush1.msra.mxu0 %v1989
    %1991 = vmatprep.subr.mxu0 0.0
    %1992 = vmatpush2.msra.mxu0 0.0
    %1993 = vmatprep.subr.mxu0 0.0
    %1994 = vmatpush2.msra.mxu0 0.0
    %1995 = vmatprep.subr.mxu0 0.0
    %1996 = vmatpush2.msra.mxu0 0.0
    %1997 = vmatprep.subr.mxu0 0.0
    %1998 = vmatpush2.msra.mxu0 0.0
    %1999 = vmatprep.subr.mxu0 0.0
    %2000 = vmatpush2.msra.mxu0 0.0
    %2001 = vmatprep.subr.mxu0 0.0
    %2002 = vmatpush2.msra.mxu0 0.0
    %2003 = vmatprep.subr.mxu0 0.0
    %2004 = vmatpush2.msra.mxu0 0.0
    %2005 = vmatprep.subr.mxu0 0.0
    %2006 = vmatpush2.msra.mxu0 0.0
    %2007 = vmatprep.subr.mxu0 0.0
    %2008 = vmatpush2.msra.mxu0 0.0
    %2009 = vmatprep.subr.mxu0 0.0
    %2010 = vmatpush2.msra.mxu0 0.0
    %2011 = vmatprep.subr.mxu0 0.0
    %2012 = vmatpush2.msra.mxu0 0.0
    %2013 = vmatprep.subr.mxu0 0.0
    %2014 = vmatpush2.msra.mxu0 0.0
    %2015 = vmatprep.subr.mxu0 0.0
    %2016 = vmatpush2.msra.mxu0 0.0
    %2017 = vmatprep.subr.mxu0 0.0
    %2018 = vmatpush2.msra.mxu0 0.0
    %2019 = vmatprep.subr.mxu0 0.0
    %2020 = vmatpush2.msra.mxu0 0.0
    %2021 = vmatprep.subr.mxu0 0.0
    %2022 = vmatpush2.msra.mxu0 0.0
    %2023 = vmatprep.mubr.f32.mxu0 0.0
    %v2024 = vand.u32 %v46, 4294901760
    %2025 = vmatmul.mubr.f32.gmra.mxu0 %v2024
    %v2026 = vpop.f32.mrf.mxu0
    %v2027 = vadd.f32 %v1940, %v2026
    %v2028 = vpop.f32.mrf.mxu0
    %2029 = vdwg.mxu0
    %v2030 = vmul.f32 %v2027, %v46
    %2031 = vadd.xlane.f32.xlu0 %v2030
    %v2032 = vpop.xlane.xlu0 %2031
    %v2033 = vmul.f32 %v2032, 0.5
    %v2034 = vadd.f32 %v2033, 98.03543
    %s2035 = scalar_lea.vmem [#allocation5], 384
    %v2036 = vld [vmem:[%s2035] sm:$0xff]
    %v2037 = vld [vmem:[%s2035 + $0x8] sm:$0xff]
    %v2038 = vld [vmem:[%s2035 + $0x10] sm:$0xff]
    %v2039 = vld [vmem:[%s2035 + $0x18] sm:$0xff]
    %v2040 = vld [vmem:[%s2035 + $0x20] sm:$0xff]
    %v2041 = vld [vmem:[%s2035 + $0x28] sm:$0xff]
    %v2042 = vld [vmem:[%s2035 + $0x30] sm:$0xff]
    %v2043 = vld [vmem:[%s2035 + $0x38] sm:$0xff]
    %v2044 = vld [vmem:[%s2035 + $0x40] sm:$0xff]
    %v2045 = vld [vmem:[%s2035 + $0x48] sm:$0xff]
    %v2046 = vld [vmem:[%s2035 + $0x50] sm:$0xff]
    %v2047 = vld [vmem:[%s2035 + $0x58] sm:$0xff]
    %v2048 = vld [vmem:[%s2035 + $0x60] sm:$0xff]
    %v2049 = vld [vmem:[%s2035 + $0x68] sm:$0xff]
    %v2050 = vld [vmem:[%s2035 + $0x70] sm:$0xff]
    %v2051 = vld [vmem:[%s2035 + $0x78] sm:$0xff]
    %2052 = vmatprep.subr.mxu0 0.0
    %v2053 = vand.u32 %v2051, 4294901760
    %2054 = vmatpush1.msra.mxu0 %v2053
    %2055 = vmatprep.subr.mxu0 0.0
    %v2056 = vand.u32 %v2050, 4294901760
    %2057 = vmatpush1.msra.mxu0 %v2056
    %2058 = vmatprep.subr.mxu0 0.0
    %v2059 = vand.u32 %v2049, 4294901760
    %2060 = vmatpush1.msra.mxu0 %v2059
    %2061 = vmatprep.subr.mxu0 0.0
    %v2062 = vand.u32 %v2048, 4294901760
    %2063 = vmatpush1.msra.mxu0 %v2062
    %2064 = vmatprep.subr.mxu0 0.0
    %v2065 = vand.u32 %v2047, 4294901760
    %2066 = vmatpush1.msra.mxu0 %v2065
    %2067 = vmatprep.subr.mxu0 0.0
    %v2068 = vand.u32 %v2046, 4294901760
    %2069 = vmatpush1.msra.mxu0 %v2068
    %2070 = vmatprep.subr.mxu0 0.0
    %v2071 = vand.u32 %v2045, 4294901760
    %2072 = vmatpush1.msra.mxu0 %v2071
    %2073 = vmatprep.subr.mxu0 0.0
    %v2074 = vand.u32 %v2044, 4294901760
    %2075 = vmatpush1.msra.mxu0 %v2074
    %2076 = vmatprep.subr.mxu0 0.0
    %v2077 = vand.u32 %v2043, 4294901760
    %2078 = vmatpush1.msra.mxu0 %v2077
    %2079 = vmatprep.subr.mxu0 0.0
    %v2080 = vand.u32 %v2042, 4294901760
    %2081 = vmatpush1.msra.mxu0 %v2080
    %2082 = vmatprep.subr.mxu0 0.0
    %v2083 = vand.u32 %v2041, 4294901760
    %2084 = vmatpush1.msra.mxu0 %v2083
    %2085 = vmatprep.subr.mxu0 0.0
    %v2086 = vand.u32 %v2040, 4294901760
    %2087 = vmatpush1.msra.mxu0 %v2086
    %2088 = vmatprep.subr.mxu0 0.0
    %v2089 = vand.u32 %v2039, 4294901760
    %2090 = vmatpush1.msra.mxu0 %v2089
    %2091 = vmatprep.subr.mxu0 0.0
    %v2092 = vand.u32 %v2038, 4294901760
    %2093 = vmatpush1.msra.mxu0 %v2092
    %2094 = vmatprep.subr.mxu0 0.0
    %v2095 = vand.u32 %v2037, 4294901760
    %2096 = vmatpush1.msra.mxu0 %v2095
    %2097 = vmatprep.subr.mxu0 0.0
    %v2098 = vand.u32 %v2036, 4294901760
    %2099 = vmatpush1.msra.mxu0 %v2098
    %2100 = vmatprep.subr.mxu0 0.0
    %2101 = vmatpush2.msra.mxu0 0.0
    %2102 = vmatprep.subr.mxu0 0.0
    %2103 = vmatpush2.msra.mxu0 0.0
    %2104 = vmatprep.subr.mxu0 0.0
    %2105 = vmatpush2.msra.mxu0 0.0
    %2106 = vmatprep.subr.mxu0 0.0
    %2107 = vmatpush2.msra.mxu0 0.0
    %2108 = vmatprep.subr.mxu0 0.0
    %2109 = vmatpush2.msra.mxu0 0.0
    %2110 = vmatprep.subr.mxu0 0.0
    %2111 = vmatpush2.msra.mxu0 0.0
    %2112 = vmatprep.subr.mxu0 0.0
    %2113 = vmatpush2.msra.mxu0 0.0
    %2114 = vmatprep.subr.mxu0 0.0
    %2115 = vmatpush2.msra.mxu0 0.0
    %2116 = vmatprep.subr.mxu0 0.0
    %2117 = vmatpush2.msra.mxu0 0.0
    %2118 = vmatprep.subr.mxu0 0.0
    %2119 = vmatpush2.msra.mxu0 0.0
    %2120 = vmatprep.subr.mxu0 0.0
    %2121 = vmatpush2.msra.mxu0 0.0
    %2122 = vmatprep.subr.mxu0 0.0
    %2123 = vmatpush2.msra.mxu0 0.0
    %2124 = vmatprep.subr.mxu0 0.0
    %2125 = vmatpush2.msra.mxu0 0.0
    %2126 = vmatprep.subr.mxu0 0.0
    %2127 = vmatpush2.msra.mxu0 0.0
    %2128 = vmatprep.subr.mxu0 0.0
    %2129 = vmatpush2.msra.mxu0 0.0
    %2130 = vmatprep.subr.mxu0 0.0
    %2131 = vmatpush2.msra.mxu0 0.0
    %2132 = vmatprep.mubr.f32.mxu0 0.0
    %v2133 = vand.u32 %v46, 4294901760
    %v2134 = vsub.f32 %v46, %v2133
    %v2135 = vand.u32 %v2134, 4294901760
    %v2136 = vsub.f32 %v2134, %v2135
    %v2137 = vand.u32 %v2136, 4294901760
    %2138 = vmatmul.mubr.f32.gmra.mxu0 %v2137
    %v2139 = vpop.f32.mrf.mxu0
    %v2140 = vadd.f32 0.0, %v2139
    %v2141 = vpop.f32.mrf.mxu0
    %2142 = vdwg.mxu0
    %2143 = vmatprep.subr.mxu0 0.0
    %v2144 = vand.u32 %v2051, 4294901760
    %v2145 = vsub.f32 %v2051, %v2144
    %v2146 = vand.u32 %v2145, 4294901760
    %v2147 = vsub.f32 %v2145, %v2146
    %v2148 = vand.u32 %v2147, 4294901760
    %2149 = vmatpush1.msra.mxu0 %v2148
    %2150 = vmatprep.subr.mxu0 0.0
    %v2151 = vand.u32 %v2050, 4294901760
    %v2152 = vsub.f32 %v2050, %v2151
    %v2153 = vand.u32 %v2152, 4294901760
    %v2154 = vsub.f32 %v2152, %v2153
    %v2155 = vand.u32 %v2154, 4294901760
    %2156 = vmatpush1.msra.mxu0 %v2155
    %2157 = vmatprep.subr.mxu0 0.0
    %v2158 = vand.u32 %v2049, 4294901760
    %v2159 = vsub.f32 %v2049, %v2158
    %v2160 = vand.u32 %v2159, 4294901760
    %v2161 = vsub.f32 %v2159, %v2160
    %v2162 = vand.u32 %v2161, 4294901760
    %2163 = vmatpush1.msra.mxu0 %v2162
    %2164 = vmatprep.subr.mxu0 0.0
    %v2165 = vand.u32 %v2048, 4294901760
    %v2166 = vsub.f32 %v2048, %v2165
    %v2167 = vand.u32 %v2166, 4294901760
    %v2168 = vsub.f32 %v2166, %v2167
    %v2169 = vand.u32 %v2168, 4294901760
    %2170 = vmatpush1.msra.mxu0 %v2169
    %2171 = vmatprep.subr.mxu0 0.0
    %v2172 = vand.u32 %v2047, 4294901760
    %v2173 = vsub.f32 %v2047, %v2172
    %v2174 = vand.u32 %v2173, 4294901760
    %v2175 = vsub.f32 %v2173, %v2174
    %v2176 = vand.u32 %v2175, 4294901760
    %2177 = vmatpush1.msra.mxu0 %v2176
    %2178 = vmatprep.subr.mxu0 0.0
    %v2179 = vand.u32 %v2046, 4294901760
    %v2180 = vsub.f32 %v2046, %v2179
    %v2181 = vand.u32 %v2180, 4294901760
    %v2182 = vsub.f32 %v2180, %v2181
    %v2183 = vand.u32 %v2182, 4294901760
    %2184 = vmatpush1.msra.mxu0 %v2183
    %2185 = vmatprep.subr.mxu0 0.0
    %v2186 = vand.u32 %v2045, 4294901760
    %v2187 = vsub.f32 %v2045, %v2186
    %v2188 = vand.u32 %v2187, 4294901760
    %v2189 = vsub.f32 %v2187, %v2188
    %v2190 = vand.u32 %v2189, 4294901760
    %2191 = vmatpush1.msra.mxu0 %v2190
    %2192 = vmatprep.subr.mxu0 0.0
    %v2193 = vand.u32 %v2044, 4294901760
    %v2194 = vsub.f32 %v2044, %v2193
    %v2195 = vand.u32 %v2194, 4294901760
    %v2196 = vsub.f32 %v2194, %v2195
    %v2197 = vand.u32 %v2196, 4294901760
    %2198 = vmatpush1.msra.mxu0 %v2197
    %2199 = vmatprep.subr.mxu0 0.0
    %v2200 = vand.u32 %v2043, 4294901760
    %v2201 = vsub.f32 %v2043, %v2200
    %v2202 = vand.u32 %v2201, 4294901760
    %v2203 = vsub.f32 %v2201, %v2202
    %v2204 = vand.u32 %v2203, 4294901760
    %2205 = vmatpush1.msra.mxu0 %v2204
    %2206 = vmatprep.subr.mxu0 0.0
    %v2207 = vand.u32 %v2042, 4294901760
    %v2208 = vsub.f32 %v2042, %v2207
    %v2209 = vand.u32 %v2208, 4294901760
    %v2210 = vsub.f32 %v2208, %v2209
    %v2211 = vand.u32 %v2210, 4294901760
    %2212 = vmatpush1.msra.mxu0 %v2211
    %2213 = vmatprep.subr.mxu0 0.0
    %v2214 = vand.u32 %v2041, 4294901760
    %v2215 = vsub.f32 %v2041, %v2214
    %v2216 = vand.u32 %v2215, 4294901760
    %v2217 = vsub.f32 %v2215, %v2216
    %v2218 = vand.u32 %v2217, 4294901760
    %2219 = vmatpush1.msra.mxu0 %v2218
    %2220 = vmatprep.subr.mxu0 0.0
    %v2221 = vand.u32 %v2040, 4294901760
    %v2222 = vsub.f32 %v2040, %v2221
    %v2223 = vand.u32 %v2222, 4294901760
    %v2224 = vsub.f32 %v2222, %v2223
    %v2225 = vand.u32 %v2224, 4294901760
    %2226 = vmatpush1.msra.mxu0 %v2225
    %2227 = vmatprep.subr.mxu0 0.0
    %v2228 = vand.u32 %v2039, 4294901760
    %v2229 = vsub.f32 %v2039, %v2228
    %v2230 = vand.u32 %v2229, 4294901760
    %v2231 = vsub.f32 %v2229, %v2230
    %v2232 = vand.u32 %v2231, 4294901760
    %2233 = vmatpush1.msra.mxu0 %v2232
    %2234 = vmatprep.subr.mxu0 0.0
    %v2235 = vand.u32 %v2038, 4294901760
    %v2236 = vsub.f32 %v2038, %v2235
    %v2237 = vand.u32 %v2236, 4294901760
    %v2238 = vsub.f32 %v2236, %v2237
    %v2239 = vand.u32 %v2238, 4294901760
    %2240 = vmatpush1.msra.mxu0 %v2239
    %2241 = vmatprep.subr.mxu0 0.0
    %v2242 = vand.u32 %v2037, 4294901760
    %v2243 = vsub.f32 %v2037, %v2242
    %v2244 = vand.u32 %v2243, 4294901760
    %v2245 = vsub.f32 %v2243, %v2244
    %v2246 = vand.u32 %v2245, 4294901760
    %2247 = vmatpush1.msra.mxu0 %v2246
    %2248 = vmatprep.subr.mxu0 0.0
    %v2249 = vand.u32 %v2036, 4294901760
    %v2250 = vsub.f32 %v2036, %v2249
    %v2251 = vand.u32 %v2250, 4294901760
    %v2252 = vsub.f32 %v2250, %v2251
    %v2253 = vand.u32 %v2252, 4294901760
    %2254 = vmatpush1.msra.mxu0 %v2253
    %2255 = vmatprep.subr.mxu0 0.0
    %2256 = vmatpush2.msra.mxu0 0.0
    %2257 = vmatprep.subr.mxu0 0.0
    %2258 = vmatpush2.msra.mxu0 0.0
    %2259 = vmatprep.subr.mxu0 0.0
    %2260 = vmatpush2.msra.mxu0 0.0
    %2261 = vmatprep.subr.mxu0 0.0
    %2262 = vmatpush2.msra.mxu0 0.0
    %2263 = vmatprep.subr.mxu0 0.0
    %2264 = vmatpush2.msra.mxu0 0.0
    %2265 = vmatprep.subr.mxu0 0.0
    %2266 = vmatpush2.msra.mxu0 0.0
    %2267 = vmatprep.subr.mxu0 0.0
    %2268 = vmatpush2.msra.mxu0 0.0
    %2269 = vmatprep.subr.mxu0 0.0
    %2270 = vmatpush2.msra.mxu0 0.0
    %2271 = vmatprep.subr.mxu0 0.0
    %2272 = vmatpush2.msra.mxu0 0.0
    %2273 = vmatprep.subr.mxu0 0.0
    %2274 = vmatpush2.msra.mxu0 0.0
    %2275 = vmatprep.subr.mxu0 0.0
    %2276 = vmatpush2.msra.mxu0 0.0
    %2277 = vmatprep.subr.mxu0 0.0
    %2278 = vmatpush2.msra.mxu0 0.0
    %2279 = vmatprep.subr.mxu0 0.0
    %2280 = vmatpush2.msra.mxu0 0.0
    %2281 = vmatprep.subr.mxu0 0.0
    %2282 = vmatpush2.msra.mxu0 0.0
    %2283 = vmatprep.subr.mxu0 0.0
    %2284 = vmatpush2.msra.mxu0 0.0
    %2285 = vmatprep.subr.mxu0 0.0
    %2286 = vmatpush2.msra.mxu0 0.0
    %2287 = vmatprep.mubr.f32.mxu0 0.0
    %v2288 = vand.u32 %v46, 4294901760
    %2289 = vmatmul.mubr.f32.gmra.mxu0 %v2288
    %v2290 = vpop.f32.mrf.mxu0
    %v2291 = vadd.f32 %v2140, %v2290
    %v2292 = vpop.f32.mrf.mxu0
    %2293 = vdwg.mxu0
    %2294 = vmatprep.subr.mxu0 0.0
    %v2295 = vand.u32 %v2051, 4294901760
    %v2296 = vsub.f32 %v2051, %v2295
    %2297 = vmatpush1.msra.mxu0 %v2296
    %2298 = vmatprep.subr.mxu0 0.0
    %v2299 = vand.u32 %v2050, 4294901760
    %v2300 = vsub.f32 %v2050, %v2299
    %2301 = vmatpush1.msra.mxu0 %v2300
    %2302 = vmatprep.subr.mxu0 0.0
    %v2303 = vand.u32 %v2049, 4294901760
    %v2304 = vsub.f32 %v2049, %v2303
    %2305 = vmatpush1.msra.mxu0 %v2304
    %2306 = vmatprep.subr.mxu0 0.0
    %v2307 = vand.u32 %v2048, 4294901760
    %v2308 = vsub.f32 %v2048, %v2307
    %2309 = vmatpush1.msra.mxu0 %v2308
    %2310 = vmatprep.subr.mxu0 0.0
    %v2311 = vand.u32 %v2047, 4294901760
    %v2312 = vsub.f32 %v2047, %v2311
    %2313 = vmatpush1.msra.mxu0 %v2312
    %2314 = vmatprep.subr.mxu0 0.0
    %v2315 = vand.u32 %v2046, 4294901760
    %v2316 = vsub.f32 %v2046, %v2315
    %2317 = vmatpush1.msra.mxu0 %v2316
    %2318 = vmatprep.subr.mxu0 0.0
    %v2319 = vand.u32 %v2045, 4294901760
    %v2320 = vsub.f32 %v2045, %v2319
    %2321 = vmatpush1.msra.mxu0 %v2320
    %2322 = vmatprep.subr.mxu0 0.0
    %v2323 = vand.u32 %v2044, 4294901760
    %v2324 = vsub.f32 %v2044, %v2323
    %2325 = vmatpush1.msra.mxu0 %v2324
    %2326 = vmatprep.subr.mxu0 0.0
    %v2327 = vand.u32 %v2043, 4294901760
    %v2328 = vsub.f32 %v2043, %v2327
    %2329 = vmatpush1.msra.mxu0 %v2328
    %2330 = vmatprep.subr.mxu0 0.0
    %v2331 = vand.u32 %v2042, 4294901760
    %v2332 = vsub.f32 %v2042, %v2331
    %2333 = vmatpush1.msra.mxu0 %v2332
    %2334 = vmatprep.subr.mxu0 0.0
    %v2335 = vand.u32 %v2041, 4294901760
    %v2336 = vsub.f32 %v2041, %v2335
    %2337 = vmatpush1.msra.mxu0 %v2336
    %2338 = vmatprep.subr.mxu0 0.0
    %v2339 = vand.u32 %v2040, 4294901760
    %v2340 = vsub.f32 %v2040, %v2339
    %2341 = vmatpush1.msra.mxu0 %v2340
    %2342 = vmatprep.subr.mxu0 0.0
    %v2343 = vand.u32 %v2039, 4294901760
    %v2344 = vsub.f32 %v2039, %v2343
    %2345 = vmatpush1.msra.mxu0 %v2344
    %2346 = vmatprep.subr.mxu0 0.0
    %v2347 = vand.u32 %v2038, 4294901760
    %v2348 = vsub.f32 %v2038, %v2347
    %2349 = vmatpush1.msra.mxu0 %v2348
    %2350 = vmatprep.subr.mxu0 0.0
    %v2351 = vand.u32 %v2037, 4294901760
    %v2352 = vsub.f32 %v2037, %v2351
    %2353 = vmatpush1.msra.mxu0 %v2352
    %2354 = vmatprep.subr.mxu0 0.0
    %v2355 = vand.u32 %v2036, 4294901760
    %v2356 = vsub.f32 %v2036, %v2355
    %2357 = vmatpush1.msra.mxu0 %v2356
    %2358 = vmatprep.subr.mxu0 0.0
    %2359 = vmatpush2.msra.mxu0 0.0
    %2360 = vmatprep.subr.mxu0 0.0
    %2361 = vmatpush2.msra.mxu0 0.0
    %2362 = vmatprep.subr.mxu0 0.0
    %2363 = vmatpush2.msra.mxu0 0.0
    %2364 = vmatprep.subr.mxu0 0.0
    %2365 = vmatpush2.msra.mxu0 0.0
    %2366 = vmatprep.subr.mxu0 0.0
    %2367 = vmatpush2.msra.mxu0 0.0
    %2368 = vmatprep.subr.mxu0 0.0
    %2369 = vmatpush2.msra.mxu0 0.0
    %2370 = vmatprep.subr.mxu0 0.0
    %2371 = vmatpush2.msra.mxu0 0.0
    %2372 = vmatprep.subr.mxu0 0.0
    %2373 = vmatpush2.msra.mxu0 0.0
    %2374 = vmatprep.subr.mxu0 0.0
    %2375 = vmatpush2.msra.mxu0 0.0
    %2376 = vmatprep.subr.mxu0 0.0
    %2377 = vmatpush2.msra.mxu0 0.0
    %2378 = vmatprep.subr.mxu0 0.0
    %2379 = vmatpush2.msra.mxu0 0.0
    %2380 = vmatprep.subr.mxu0 0.0
    %2381 = vmatpush2.msra.mxu0 0.0
    %2382 = vmatprep.subr.mxu0 0.0
    %2383 = vmatpush2.msra.mxu0 0.0
    %2384 = vmatprep.subr.mxu0 0.0
    %2385 = vmatpush2.msra.mxu0 0.0
    %2386 = vmatprep.subr.mxu0 0.0
    %2387 = vmatpush2.msra.mxu0 0.0
    %2388 = vmatprep.subr.mxu0 0.0
    %2389 = vmatpush2.msra.mxu0 0.0
    %2390 = vmatprep.mubr.f32.mxu0 0.0
    %v2391 = vand.u32 %v46, 4294901760
    %v2392 = vsub.f32 %v46, %v2391
    %2393 = vmatmul.mubr.f32.gmra.mxu0 %v2392
    %v2394 = vpop.f32.mrf.mxu0
    %v2395 = vadd.f32 %v2291, %v2394
    %v2396 = vpop.f32.mrf.mxu0
    %2397 = vdwg.mxu0
    %2398 = vmatprep.subr.mxu0 0.0
    %v2399 = vand.u32 %v2051, 4294901760
    %2400 = vmatpush1.msra.mxu0 %v2399
    %2401 = vmatprep.subr.mxu0 0.0
    %v2402 = vand.u32 %v2050, 4294901760
    %2403 = vmatpush1.msra.mxu0 %v2402
    %2404 = vmatprep.subr.mxu0 0.0
    %v2405 = vand.u32 %v2049, 4294901760
    %2406 = vmatpush1.msra.mxu0 %v2405
    %2407 = vmatprep.subr.mxu0 0.0
    %v2408 = vand.u32 %v2048, 4294901760
    %2409 = vmatpush1.msra.mxu0 %v2408
    %2410 = vmatprep.subr.mxu0 0.0
    %v2411 = vand.u32 %v2047, 4294901760
    %2412 = vmatpush1.msra.mxu0 %v2411
    %2413 = vmatprep.subr.mxu0 0.0
    %v2414 = vand.u32 %v2046, 4294901760
    %2415 = vmatpush1.msra.mxu0 %v2414
    %2416 = vmatprep.subr.mxu0 0.0
    %v2417 = vand.u32 %v2045, 4294901760
    %2418 = vmatpush1.msra.mxu0 %v2417
    %2419 = vmatprep.subr.mxu0 0.0
    %v2420 = vand.u32 %v2044, 4294901760
    %2421 = vmatpush1.msra.mxu0 %v2420
    %2422 = vmatprep.subr.mxu0 0.0
    %v2423 = vand.u32 %v2043, 4294901760
    %2424 = vmatpush1.msra.mxu0 %v2423
    %2425 = vmatprep.subr.mxu0 0.0
    %v2426 = vand.u32 %v2042, 4294901760
    %2427 = vmatpush1.msra.mxu0 %v2426
    %2428 = vmatprep.subr.mxu0 0.0
    %v2429 = vand.u32 %v2041, 4294901760
    %2430 = vmatpush1.msra.mxu0 %v2429
    %2431 = vmatprep.subr.mxu0 0.0
    %v2432 = vand.u32 %v2040, 4294901760
    %2433 = vmatpush1.msra.mxu0 %v2432
    %2434 = vmatprep.subr.mxu0 0.0
    %v2435 = vand.u32 %v2039, 4294901760
    %2436 = vmatpush1.msra.mxu0 %v2435
    %2437 = vmatprep.subr.mxu0 0.0
    %v2438 = vand.u32 %v2038, 4294901760
    %2439 = vmatpush1.msra.mxu0 %v2438
    %2440 = vmatprep.subr.mxu0 0.0
    %v2441 = vand.u32 %v2037, 4294901760
    %2442 = vmatpush1.msra.mxu0 %v2441
    %2443 = vmatprep.subr.mxu0 0.0
    %v2444 = vand.u32 %v2036, 4294901760
    %2445 = vmatpush1.msra.mxu0 %v2444
    %2446 = vmatprep.subr.mxu0 0.0
    %2447 = vmatpush2.msra.mxu0 0.0
    %2448 = vmatprep.subr.mxu0 0.0
    %2449 = vmatpush2.msra.mxu0 0.0
    %2450 = vmatprep.subr.mxu0 0.0
    %2451 = vmatpush2.msra.mxu0 0.0
    %2452 = vmatprep.subr.mxu0 0.0
    %2453 = vmatpush2.msra.mxu0 0.0
    %2454 = vmatprep.subr.mxu0 0.0
    %2455 = vmatpush2.msra.mxu0 0.0
    %2456 = vmatprep.subr.mxu0 0.0
    %2457 = vmatpush2.msra.mxu0 0.0
    %2458 = vmatprep.subr.mxu0 0.0
    %2459 = vmatpush2.msra.mxu0 0.0
    %2460 = vmatprep.subr.mxu0 0.0
    %2461 = vmatpush2.msra.mxu0 0.0
    %2462 = vmatprep.subr.mxu0 0.0
    %2463 = vmatpush2.msra.mxu0 0.0
    %2464 = vmatprep.subr.mxu0 0.0
    %2465 = vmatpush2.msra.mxu0 0.0
    %2466 = vmatprep.subr.mxu0 0.0
    %2467 = vmatpush2.msra.mxu0 0.0
    %2468 = vmatprep.subr.mxu0 0.0
    %2469 = vmatpush2.msra.mxu0 0.0
    %2470 = vmatprep.subr.mxu0 0.0
    %2471 = vmatpush2.msra.mxu0 0.0
    %2472 = vmatprep.subr.mxu0 0.0
    %2473 = vmatpush2.msra.mxu0 0.0
    %2474 = vmatprep.subr.mxu0 0.0
    %2475 = vmatpush2.msra.mxu0 0.0
    %2476 = vmatprep.subr.mxu0 0.0
    %2477 = vmatpush2.msra.mxu0 0.0
    %2478 = vmatprep.mubr.f32.mxu0 0.0
    %v2479 = vand.u32 %v46, 4294901760
    %v2480 = vsub.f32 %v46, %v2479
    %v2481 = vand.u32 %v2480, 4294901760
    %2482 = vmatmul.mubr.f32.gmra.mxu0 %v2481
    %v2483 = vpop.f32.mrf.mxu0
    %v2484 = vadd.f32 %v2395, %v2483
    %v2485 = vpop.f32.mrf.mxu0
    %2486 = vdwg.mxu0
    %2487 = vmatprep.subr.mxu0 0.0
    %v2488 = vand.u32 %v2051, 4294901760
    %v2489 = vsub.f32 %v2051, %v2488
    %v2490 = vand.u32 %v2489, 4294901760
    %2491 = vmatpush1.msra.mxu0 %v2490
    %2492 = vmatprep.subr.mxu0 0.0
    %v2493 = vand.u32 %v2050, 4294901760
    %v2494 = vsub.f32 %v2050, %v2493
    %v2495 = vand.u32 %v2494, 4294901760
    %2496 = vmatpush1.msra.mxu0 %v2495
    %2497 = vmatprep.subr.mxu0 0.0
    %v2498 = vand.u32 %v2049, 4294901760
    %v2499 = vsub.f32 %v2049, %v2498
    %v2500 = vand.u32 %v2499, 4294901760
    %2501 = vmatpush1.msra.mxu0 %v2500
    %2502 = vmatprep.subr.mxu0 0.0
    %v2503 = vand.u32 %v2048, 4294901760
    %v2504 = vsub.f32 %v2048, %v2503
    %v2505 = vand.u32 %v2504, 4294901760
    %2506 = vmatpush1.msra.mxu0 %v2505
    %2507 = vmatprep.subr.mxu0 0.0
    %v2508 = vand.u32 %v2047, 4294901760
    %v2509 = vsub.f32 %v2047, %v2508
    %v2510 = vand.u32 %v2509, 4294901760
    %2511 = vmatpush1.msra.mxu0 %v2510
    %2512 = vmatprep.subr.mxu0 0.0
    %v2513 = vand.u32 %v2046, 4294901760
    %v2514 = vsub.f32 %v2046, %v2513
    %v2515 = vand.u32 %v2514, 4294901760
    %2516 = vmatpush1.msra.mxu0 %v2515
    %2517 = vmatprep.subr.mxu0 0.0
    %v2518 = vand.u32 %v2045, 4294901760
    %v2519 = vsub.f32 %v2045, %v2518
    %v2520 = vand.u32 %v2519, 4294901760
    %2521 = vmatpush1.msra.mxu0 %v2520
    %2522 = vmatprep.subr.mxu0 0.0
    %v2523 = vand.u32 %v2044, 4294901760
    %v2524 = vsub.f32 %v2044, %v2523
    %v2525 = vand.u32 %v2524, 4294901760
    %2526 = vmatpush1.msra.mxu0 %v2525
    %2527 = vmatprep.subr.mxu0 0.0
    %v2528 = vand.u32 %v2043, 4294901760
    %v2529 = vsub.f32 %v2043, %v2528
    %v2530 = vand.u32 %v2529, 4294901760
    %2531 = vmatpush1.msra.mxu0 %v2530
    %2532 = vmatprep.subr.mxu0 0.0
    %v2533 = vand.u32 %v2042, 4294901760
    %v2534 = vsub.f32 %v2042, %v2533
    %v2535 = vand.u32 %v2534, 4294901760
    %2536 = vmatpush1.msra.mxu0 %v2535
    %2537 = vmatprep.subr.mxu0 0.0
    %v2538 = vand.u32 %v2041, 4294901760
    %v2539 = vsub.f32 %v2041, %v2538
    %v2540 = vand.u32 %v2539, 4294901760
    %2541 = vmatpush1.msra.mxu0 %v2540
    %2542 = vmatprep.subr.mxu0 0.0
    %v2543 = vand.u32 %v2040, 4294901760
    %v2544 = vsub.f32 %v2040, %v2543
    %v2545 = vand.u32 %v2544, 4294901760
    %2546 = vmatpush1.msra.mxu0 %v2545
    %2547 = vmatprep.subr.mxu0 0.0
    %v2548 = vand.u32 %v2039, 4294901760
    %v2549 = vsub.f32 %v2039, %v2548
    %v2550 = vand.u32 %v2549, 4294901760
    %2551 = vmatpush1.msra.mxu0 %v2550
    %2552 = vmatprep.subr.mxu0 0.0
    %v2553 = vand.u32 %v2038, 4294901760
    %v2554 = vsub.f32 %v2038, %v2553
    %v2555 = vand.u32 %v2554, 4294901760
    %2556 = vmatpush1.msra.mxu0 %v2555
    %2557 = vmatprep.subr.mxu0 0.0
    %v2558 = vand.u32 %v2037, 4294901760
    %v2559 = vsub.f32 %v2037, %v2558
    %v2560 = vand.u32 %v2559, 4294901760
    %2561 = vmatpush1.msra.mxu0 %v2560
    %2562 = vmatprep.subr.mxu0 0.0
    %v2563 = vand.u32 %v2036, 4294901760
    %v2564 = vsub.f32 %v2036, %v2563
    %v2565 = vand.u32 %v2564, 4294901760
    %2566 = vmatpush1.msra.mxu0 %v2565
    %2567 = vmatprep.subr.mxu0 0.0
    %2568 = vmatpush2.msra.mxu0 0.0
    %2569 = vmatprep.subr.mxu0 0.0
    %2570 = vmatpush2.msra.mxu0 0.0
    %2571 = vmatprep.subr.mxu0 0.0
    %2572 = vmatpush2.msra.mxu0 0.0
    %2573 = vmatprep.subr.mxu0 0.0
    %2574 = vmatpush2.msra.mxu0 0.0
    %2575 = vmatprep.subr.mxu0 0.0
    %2576 = vmatpush2.msra.mxu0 0.0
    %2577 = vmatprep.subr.mxu0 0.0
    %2578 = vmatpush2.msra.mxu0 0.0
    %2579 = vmatprep.subr.mxu0 0.0
    %2580 = vmatpush2.msra.mxu0 0.0
    %2581 = vmatprep.subr.mxu0 0.0
    %2582 = vmatpush2.msra.mxu0 0.0
    %2583 = vmatprep.subr.mxu0 0.0
    %2584 = vmatpush2.msra.mxu0 0.0
    %2585 = vmatprep.subr.mxu0 0.0
    %2586 = vmatpush2.msra.mxu0 0.0
    %2587 = vmatprep.subr.mxu0 0.0
    %2588 = vmatpush2.msra.mxu0 0.0
    %2589 = vmatprep.subr.mxu0 0.0
    %2590 = vmatpush2.msra.mxu0 0.0
    %2591 = vmatprep.subr.mxu0 0.0
    %2592 = vmatpush2.msra.mxu0 0.0
    %2593 = vmatprep.subr.mxu0 0.0
    %2594 = vmatpush2.msra.mxu0 0.0
    %2595 = vmatprep.subr.mxu0 0.0
    %2596 = vmatpush2.msra.mxu0 0.0
    %2597 = vmatprep.subr.mxu0 0.0
    %2598 = vmatpush2.msra.mxu0 0.0
    %2599 = vmatprep.mubr.f32.mxu0 0.0
    %v2600 = vand.u32 %v46, 4294901760
    %2601 = vmatmul.mubr.f32.gmra.mxu0 %v2600
    %v2602 = vpop.f32.mrf.mxu0
    %v2603 = vadd.f32 %v2484, %v2602
    %v2604 = vpop.f32.mrf.mxu0
    %2605 = vdwg.mxu0
    %2606 = vmatprep.subr.mxu0 0.0
    %v2607 = vand.u32 %v2051, 4294901760
    %2608 = vmatpush1.msra.mxu0 %v2607
    %2609 = vmatprep.subr.mxu0 0.0
    %v2610 = vand.u32 %v2050, 4294901760
    %2611 = vmatpush1.msra.mxu0 %v2610
    %2612 = vmatprep.subr.mxu0 0.0
    %v2613 = vand.u32 %v2049, 4294901760
    %2614 = vmatpush1.msra.mxu0 %v2613
    %2615 = vmatprep.subr.mxu0 0.0
    %v2616 = vand.u32 %v2048, 4294901760
    %2617 = vmatpush1.msra.mxu0 %v2616
    %2618 = vmatprep.subr.mxu0 0.0
    %v2619 = vand.u32 %v2047, 4294901760
    %2620 = vmatpush1.msra.mxu0 %v2619
    %2621 = vmatprep.subr.mxu0 0.0
    %v2622 = vand.u32 %v2046, 4294901760
    %2623 = vmatpush1.msra.mxu0 %v2622
    %2624 = vmatprep.subr.mxu0 0.0
    %v2625 = vand.u32 %v2045, 4294901760
    %2626 = vmatpush1.msra.mxu0 %v2625
    %2627 = vmatprep.subr.mxu0 0.0
    %v2628 = vand.u32 %v2044, 4294901760
    %2629 = vmatpush1.msra.mxu0 %v2628
    %2630 = vmatprep.subr.mxu0 0.0
    %v2631 = vand.u32 %v2043, 4294901760
    %2632 = vmatpush1.msra.mxu0 %v2631
    %2633 = vmatprep.subr.mxu0 0.0
    %v2634 = vand.u32 %v2042, 4294901760
    %2635 = vmatpush1.msra.mxu0 %v2634
    %2636 = vmatprep.subr.mxu0 0.0
    %v2637 = vand.u32 %v2041, 4294901760
    %2638 = vmatpush1.msra.mxu0 %v2637
    %2639 = vmatprep.subr.mxu0 0.0
    %v2640 = vand.u32 %v2040, 4294901760
    %2641 = vmatpush1.msra.mxu0 %v2640
    %2642 = vmatprep.subr.mxu0 0.0
    %v2643 = vand.u32 %v2039, 4294901760
    %2644 = vmatpush1.msra.mxu0 %v2643
    %2645 = vmatprep.subr.mxu0 0.0
    %v2646 = vand.u32 %v2038, 4294901760
    %2647 = vmatpush1.msra.mxu0 %v2646
    %2648 = vmatprep.subr.mxu0 0.0
    %v2649 = vand.u32 %v2037, 4294901760
    %2650 = vmatpush1.msra.mxu0 %v2649
    %2651 = vmatprep.subr.mxu0 0.0
    %v2652 = vand.u32 %v2036, 4294901760
    %2653 = vmatpush1.msra.mxu0 %v2652
    %2654 = vmatprep.subr.mxu0 0.0
    %2655 = vmatpush2.msra.mxu0 0.0
    %2656 = vmatprep.subr.mxu0 0.0
    %2657 = vmatpush2.msra.mxu0 0.0
    %2658 = vmatprep.subr.mxu0 0.0
    %2659 = vmatpush2.msra.mxu0 0.0
    %2660 = vmatprep.subr.mxu0 0.0
    %2661 = vmatpush2.msra.mxu0 0.0
    %2662 = vmatprep.subr.mxu0 0.0
    %2663 = vmatpush2.msra.mxu0 0.0
    %2664 = vmatprep.subr.mxu0 0.0
    %2665 = vmatpush2.msra.mxu0 0.0
    %2666 = vmatprep.subr.mxu0 0.0
    %2667 = vmatpush2.msra.mxu0 0.0
    %2668 = vmatprep.subr.mxu0 0.0
    %2669 = vmatpush2.msra.mxu0 0.0
    %2670 = vmatprep.subr.mxu0 0.0
    %2671 = vmatpush2.msra.mxu0 0.0
    %2672 = vmatprep.subr.mxu0 0.0
    %2673 = vmatpush2.msra.mxu0 0.0
    %2674 = vmatprep.subr.mxu0 0.0
    %2675 = vmatpush2.msra.mxu0 0.0
    %2676 = vmatprep.subr.mxu0 0.0
    %2677 = vmatpush2.msra.mxu0 0.0
    %2678 = vmatprep.subr.mxu0 0.0
    %2679 = vmatpush2.msra.mxu0 0.0
    %2680 = vmatprep.subr.mxu0 0.0
    %2681 = vmatpush2.msra.mxu0 0.0
    %2682 = vmatprep.subr.mxu0 0.0
    %2683 = vmatpush2.msra.mxu0 0.0
    %2684 = vmatprep.subr.mxu0 0.0
    %2685 = vmatpush2.msra.mxu0 0.0
    %2686 = vmatprep.mubr.f32.mxu0 0.0
    %v2687 = vand.u32 %v46, 4294901760
    %2688 = vmatmul.mubr.f32.gmra.mxu0 %v2687
    %v2689 = vpop.f32.mrf.mxu0
    %v2690 = vadd.f32 %v2603, %v2689
    %v2691 = vpop.f32.mrf.mxu0
    %2692 = vdwg.mxu0
    %v2693 = vmul.f32 %v2690, %v46
    %2694 = vadd.xlane.f32.xlu0 %v2693
    %v2695 = vpop.xlane.xlu0 %2694
    %v2696 = vmul.f32 %v2695, 0.5
    %v2697 = vadd.f32 %v2696, 92.47318
    %s2698 = scalar_lea.vmem [#allocation5], 512
    %v2699 = vld [vmem:[%s2698] sm:$0xff]
    %v2700 = vld [vmem:[%s2698 + $0x8] sm:$0xff]
    %v2701 = vld [vmem:[%s2698 + $0x10] sm:$0xff]
    %v2702 = vld [vmem:[%s2698 + $0x18] sm:$0xff]
    %v2703 = vld [vmem:[%s2698 + $0x20] sm:$0xff]
    %v2704 = vld [vmem:[%s2698 + $0x28] sm:$0xff]
    %v2705 = vld [vmem:[%s2698 + $0x30] sm:$0xff]
    %v2706 = vld [vmem:[%s2698 + $0x38] sm:$0xff]
    %v2707 = vld [vmem:[%s2698 + $0x40] sm:$0xff]
    %v2708 = vld [vmem:[%s2698 + $0x48] sm:$0xff]
    %v2709 = vld [vmem:[%s2698 + $0x50] sm:$0xff]
    %v2710 = vld [vmem:[%s2698 + $0x58] sm:$0xff]
    %v2711 = vld [vmem:[%s2698 + $0x60] sm:$0xff]
    %v2712 = vld [vmem:[%s2698 + $0x68] sm:$0xff]
    %v2713 = vld [vmem:[%s2698 + $0x70] sm:$0xff]
    %v2714 = vld [vmem:[%s2698 + $0x78] sm:$0xff]
    %2715 = vmatprep.subr.mxu0 0.0
    %v2716 = vand.u32 %v2714, 4294901760
    %2717 = vmatpush1.msra.mxu0 %v2716
    %2718 = vmatprep.subr.mxu0 0.0
    %v2719 = vand.u32 %v2713, 4294901760
    %2720 = vmatpush1.msra.mxu0 %v2719
    %2721 = vmatprep.subr.mxu0 0.0
    %v2722 = vand.u32 %v2712, 4294901760
    %2723 = vmatpush1.msra.mxu0 %v2722
    %2724 = vmatprep.subr.mxu0 0.0
    %v2725 = vand.u32 %v2711, 4294901760
    %2726 = vmatpush1.msra.mxu0 %v2725
    %2727 = vmatprep.subr.mxu0 0.0
    %v2728 = vand.u32 %v2710, 4294901760
    %2729 = vmatpush1.msra.mxu0 %v2728
    %2730 = vmatprep.subr.mxu0 0.0
    %v2731 = vand.u32 %v2709, 4294901760
    %2732 = vmatpush1.msra.mxu0 %v2731
    %2733 = vmatprep.subr.mxu0 0.0
    %v2734 = vand.u32 %v2708, 4294901760
    %2735 = vmatpush1.msra.mxu0 %v2734
    %2736 = vmatprep.subr.mxu0 0.0
    %v2737 = vand.u32 %v2707, 4294901760
    %2738 = vmatpush1.msra.mxu0 %v2737
    %2739 = vmatprep.subr.mxu0 0.0
    %v2740 = vand.u32 %v2706, 4294901760
    %2741 = vmatpush1.msra.mxu0 %v2740
    %2742 = vmatprep.subr.mxu0 0.0
    %v2743 = vand.u32 %v2705, 4294901760
    %2744 = vmatpush1.msra.mxu0 %v2743
    %2745 = vmatprep.subr.mxu0 0.0
    %v2746 = vand.u32 %v2704, 4294901760
    %2747 = vmatpush1.msra.mxu0 %v2746
    %2748 = vmatprep.subr.mxu0 0.0
    %v2749 = vand.u32 %v2703, 4294901760
    %2750 = vmatpush1.msra.mxu0 %v2749
    %2751 = vmatprep.subr.mxu0 0.0
    %v2752 = vand.u32 %v2702, 4294901760
    %2753 = vmatpush1.msra.mxu0 %v2752
    %2754 = vmatprep.subr.mxu0 0.0
    %v2755 = vand.u32 %v2701, 4294901760
    %2756 = vmatpush1.msra.mxu0 %v2755
    %2757 = vmatprep.subr.mxu0 0.0
    %v2758 = vand.u32 %v2700, 4294901760
    %2759 = vmatpush1.msra.mxu0 %v2758
    %2760 = vmatprep.subr.mxu0 0.0
    %v2761 = vand.u32 %v2699, 4294901760
    %2762 = vmatpush1.msra.mxu0 %v2761
    %2763 = vmatprep.subr.mxu0 0.0
    %2764 = vmatpush2.msra.mxu0 0.0
    %2765 = vmatprep.subr.mxu0 0.0
    %2766 = vmatpush2.msra.mxu0 0.0
    %2767 = vmatprep.subr.mxu0 0.0
    %2768 = vmatpush2.msra.mxu0 0.0
    %2769 = vmatprep.subr.mxu0 0.0
    %2770 = vmatpush2.msra.mxu0 0.0
    %2771 = vmatprep.subr.mxu0 0.0
    %2772 = vmatpush2.msra.mxu0 0.0
    %2773 = vmatprep.subr.mxu0 0.0
    %2774 = vmatpush2.msra.mxu0 0.0
    %2775 = vmatprep.subr.mxu0 0.0
    %2776 = vmatpush2.msra.mxu0 0.0
    %2777 = vmatprep.subr.mxu0 0.0
    %2778 = vmatpush2.msra.mxu0 0.0
    %2779 = vmatprep.subr.mxu0 0.0
    %2780 = vmatpush2.msra.mxu0 0.0
    %2781 = vmatprep.subr.mxu0 0.0
    %2782 = vmatpush2.msra.mxu0 0.0
    %2783 = vmatprep.subr.mxu0 0.0
    %2784 = vmatpush2.msra.mxu0 0.0
    %2785 = vmatprep.subr.mxu0 0.0
    %2786 = vmatpush2.msra.mxu0 0.0
    %2787 = vmatprep.subr.mxu0 0.0
    %2788 = vmatpush2.msra.mxu0 0.0
    %2789 = vmatprep.subr.mxu0 0.0
    %2790 = vmatpush2.msra.mxu0 0.0
    %2791 = vmatprep.subr.mxu0 0.0
    %2792 = vmatpush2.msra.mxu0 0.0
    %2793 = vmatprep.subr.mxu0 0.0
    %2794 = vmatpush2.msra.mxu0 0.0
    %2795 = vmatprep.mubr.f32.mxu0 0.0
    %v2796 = vand.u32 %v46, 4294901760
    %v2797 = vsub.f32 %v46, %v2796
    %v2798 = vand.u32 %v2797, 4294901760
    %v2799 = vsub.f32 %v2797, %v2798
    %v2800 = vand.u32 %v2799, 4294901760
    %2801 = vmatmul.mubr.f32.gmra.mxu0 %v2800
    %v2802 = vpop.f32.mrf.mxu0
    %v2803 = vadd.f32 0.0, %v2802
    %v2804 = vpop.f32.mrf.mxu0
    %2805 = vdwg.mxu0
    %2806 = vmatprep.subr.mxu0 0.0
    %v2807 = vand.u32 %v2714, 4294901760
    %v2808 = vsub.f32 %v2714, %v2807
    %v2809 = vand.u32 %v2808, 4294901760
    %v2810 = vsub.f32 %v2808, %v2809
    %v2811 = vand.u32 %v2810, 4294901760
    %2812 = vmatpush1.msra.mxu0 %v2811
    %2813 = vmatprep.subr.mxu0 0.0
    %v2814 = vand.u32 %v2713, 4294901760
    %v2815 = vsub.f32 %v2713, %v2814
    %v2816 = vand.u32 %v2815, 4294901760
    %v2817 = vsub.f32 %v2815, %v2816
    %v2818 = vand.u32 %v2817, 4294901760
    %2819 = vmatpush1.msra.mxu0 %v2818
    %2820 = vmatprep.subr.mxu0 0.0
    %v2821 = vand.u32 %v2712, 4294901760
    %v2822 = vsub.f32 %v2712, %v2821
    %v2823 = vand.u32 %v2822, 4294901760
    %v2824 = vsub.f32 %v2822, %v2823
    %v2825 = vand.u32 %v2824, 4294901760
    %2826 = vmatpush1.msra.mxu0 %v2825
    %2827 = vmatprep.subr.mxu0 0.0
    %v2828 = vand.u32 %v2711, 4294901760
    %v2829 = vsub.f32 %v2711, %v2828
    %v2830 = vand.u32 %v2829, 4294901760
    %v2831 = vsub.f32 %v2829, %v2830
    %v2832 = vand.u32 %v2831, 4294901760
    %2833 = vmatpush1.msra.mxu0 %v2832
    %2834 = vmatprep.subr.mxu0 0.0
    %v2835 = vand.u32 %v2710, 4294901760
    %v2836 = vsub.f32 %v2710, %v2835
    %v2837 = vand.u32 %v2836, 4294901760
    %v2838 = vsub.f32 %v2836, %v2837
    %v2839 = vand.u32 %v2838, 4294901760
    %2840 = vmatpush1.msra.mxu0 %v2839
    %2841 = vmatprep.subr.mxu0 0.0
    %v2842 = vand.u32 %v2709, 4294901760
    %v2843 = vsub.f32 %v2709, %v2842
    %v2844 = vand.u32 %v2843, 4294901760
    %v2845 = vsub.f32 %v2843, %v2844
    %v2846 = vand.u32 %v2845, 4294901760
    %2847 = vmatpush1.msra.mxu0 %v2846
    %2848 = vmatprep.subr.mxu0 0.0
    %v2849 = vand.u32 %v2708, 4294901760
    %v2850 = vsub.f32 %v2708, %v2849
    %v2851 = vand.u32 %v2850, 4294901760
    %v2852 = vsub.f32 %v2850, %v2851
    %v2853 = vand.u32 %v2852, 4294901760
    %2854 = vmatpush1.msra.mxu0 %v2853
    %2855 = vmatprep.subr.mxu0 0.0
    %v2856 = vand.u32 %v2707, 4294901760
    %v2857 = vsub.f32 %v2707, %v2856
    %v2858 = vand.u32 %v2857, 4294901760
    %v2859 = vsub.f32 %v2857, %v2858
    %v2860 = vand.u32 %v2859, 4294901760
    %2861 = vmatpush1.msra.mxu0 %v2860
    %2862 = vmatprep.subr.mxu0 0.0
    %v2863 = vand.u32 %v2706, 4294901760
    %v2864 = vsub.f32 %v2706, %v2863
    %v2865 = vand.u32 %v2864, 4294901760
    %v2866 = vsub.f32 %v2864, %v2865
    %v2867 = vand.u32 %v2866, 4294901760
    %2868 = vmatpush1.msra.mxu0 %v2867
    %2869 = vmatprep.subr.mxu0 0.0
    %v2870 = vand.u32 %v2705, 4294901760
    %v2871 = vsub.f32 %v2705, %v2870
    %v2872 = vand.u32 %v2871, 4294901760
    %v2873 = vsub.f32 %v2871, %v2872
    %v2874 = vand.u32 %v2873, 4294901760
    %2875 = vmatpush1.msra.mxu0 %v2874
    %2876 = vmatprep.subr.mxu0 0.0
    %v2877 = vand.u32 %v2704, 4294901760
    %v2878 = vsub.f32 %v2704, %v2877
    %v2879 = vand.u32 %v2878, 4294901760
    %v2880 = vsub.f32 %v2878, %v2879
    %v2881 = vand.u32 %v2880, 4294901760
    %2882 = vmatpush1.msra.mxu0 %v2881
    %2883 = vmatprep.subr.mxu0 0.0
    %v2884 = vand.u32 %v2703, 4294901760
    %v2885 = vsub.f32 %v2703, %v2884
    %v2886 = vand.u32 %v2885, 4294901760
    %v2887 = vsub.f32 %v2885, %v2886
    %v2888 = vand.u32 %v2887, 4294901760
    %2889 = vmatpush1.msra.mxu0 %v2888
    %2890 = vmatprep.subr.mxu0 0.0
    %v2891 = vand.u32 %v2702, 4294901760
    %v2892 = vsub.f32 %v2702, %v2891
    %v2893 = vand.u32 %v2892, 4294901760
    %v2894 = vsub.f32 %v2892, %v2893
    %v2895 = vand.u32 %v2894, 4294901760
    %2896 = vmatpush1.msra.mxu0 %v2895
    %2897 = vmatprep.subr.mxu0 0.0
    %v2898 = vand.u32 %v2701, 4294901760
    %v2899 = vsub.f32 %v2701, %v2898
    %v2900 = vand.u32 %v2899, 4294901760
    %v2901 = vsub.f32 %v2899, %v2900
    %v2902 = vand.u32 %v2901, 4294901760
    %2903 = vmatpush1.msra.mxu0 %v2902
    %2904 = vmatprep.subr.mxu0 0.0
    %v2905 = vand.u32 %v2700, 4294901760
    %v2906 = vsub.f32 %v2700, %v2905
    %v2907 = vand.u32 %v2906, 4294901760
    %v2908 = vsub.f32 %v2906, %v2907
    %v2909 = vand.u32 %v2908, 4294901760
    %2910 = vmatpush1.msra.mxu0 %v2909
    %2911 = vmatprep.subr.mxu0 0.0
    %v2912 = vand.u32 %v2699, 4294901760
    %v2913 = vsub.f32 %v2699, %v2912
    %v2914 = vand.u32 %v2913, 4294901760
    %v2915 = vsub.f32 %v2913, %v2914
    %v2916 = vand.u32 %v2915, 4294901760
    %2917 = vmatpush1.msra.mxu0 %v2916
    %2918 = vmatprep.subr.mxu0 0.0
    %2919 = vmatpush2.msra.mxu0 0.0
    %2920 = vmatprep.subr.mxu0 0.0
    %2921 = vmatpush2.msra.mxu0 0.0
    %2922 = vmatprep.subr.mxu0 0.0
    %2923 = vmatpush2.msra.mxu0 0.0
    %2924 = vmatprep.subr.mxu0 0.0
    %2925 = vmatpush2.msra.mxu0 0.0
    %2926 = vmatprep.subr.mxu0 0.0
    %2927 = vmatpush2.msra.mxu0 0.0
    %2928 = vmatprep.subr.mxu0 0.0
    %2929 = vmatpush2.msra.mxu0 0.0
    %2930 = vmatprep.subr.mxu0 0.0
    %2931 = vmatpush2.msra.mxu0 0.0
    %2932 = vmatprep.subr.mxu0 0.0
    %2933 = vmatpush2.msra.mxu0 0.0
    %2934 = vmatprep.subr.mxu0 0.0
    %2935 = vmatpush2.msra.mxu0 0.0
    %2936 = vmatprep.subr.mxu0 0.0
    %2937 = vmatpush2.msra.mxu0 0.0
    %2938 = vmatprep.subr.mxu0 0.0
    %2939 = vmatpush2.msra.mxu0 0.0
    %2940 = vmatprep.subr.mxu0 0.0
    %2941 = vmatpush2.msra.mxu0 0.0
    %2942 = vmatprep.subr.mxu0 0.0
    %2943 = vmatpush2.msra.mxu0 0.0
    %2944 = vmatprep.subr.mxu0 0.0
    %2945 = vmatpush2.msra.mxu0 0.0
    %2946 = vmatprep.subr.mxu0 0.0
    %2947 = vmatpush2.msra.mxu0 0.0
    %2948 = vmatprep.subr.mxu0 0.0
    %2949 = vmatpush2.msra.mxu0 0.0
    %2950 = vmatprep.mubr.f32.mxu0 0.0
    %v2951 = vand.u32 %v46, 4294901760
    %2952 = vmatmul.mubr.f32.gmra.mxu0 %v2951
    %v2953 = vpop.f32.mrf.mxu0
    %v2954 = vadd.f32 %v2803, %v2953
    %v2955 = vpop.f32.mrf.mxu0
    %2956 = vdwg.mxu0
    %2957 = vmatprep.subr.mxu0 0.0
    %v2958 = vand.u32 %v2714, 4294901760
    %v2959 = vsub.f32 %v2714, %v2958
    %2960 = vmatpush1.msra.mxu0 %v2959
    %2961 = vmatprep.subr.mxu0 0.0
    %v2962 = vand.u32 %v2713, 4294901760
    %v2963 = vsub.f32 %v2713, %v2962
    %2964 = vmatpush1.msra.mxu0 %v2963
    %2965 = vmatprep.subr.mxu0 0.0
    %v2966 = vand.u32 %v2712, 4294901760
    %v2967 = vsub.f32 %v2712, %v2966
    %2968 = vmatpush1.msra.mxu0 %v2967
    %2969 = vmatprep.subr.mxu0 0.0
    %v2970 = vand.u32 %v2711, 4294901760
    %v2971 = vsub.f32 %v2711, %v2970
    %2972 = vmatpush1.msra.mxu0 %v2971
    %2973 = vmatprep.subr.mxu0 0.0
    %v2974 = vand.u32 %v2710, 4294901760
    %v2975 = vsub.f32 %v2710, %v2974
    %2976 = vmatpush1.msra.mxu0 %v2975
    %2977 = vmatprep.subr.mxu0 0.0
    %v2978 = vand.u32 %v2709, 4294901760
    %v2979 = vsub.f32 %v2709, %v2978
    %2980 = vmatpush1.msra.mxu0 %v2979
    %2981 = vmatprep.subr.mxu0 0.0
    %v2982 = vand.u32 %v2708, 4294901760
    %v2983 = vsub.f32 %v2708, %v2982
    %2984 = vmatpush1.msra.mxu0 %v2983
    %2985 = vmatprep.subr.mxu0 0.0
    %v2986 = vand.u32 %v2707, 4294901760
    %v2987 = vsub.f32 %v2707, %v2986
    %2988 = vmatpush1.msra.mxu0 %v2987
    %2989 = vmatprep.subr.mxu0 0.0
    %v2990 = vand.u32 %v2706, 4294901760
    %v2991 = vsub.f32 %v2706, %v2990
    %2992 = vmatpush1.msra.mxu0 %v2991
    %2993 = vmatprep.subr.mxu0 0.0
    %v2994 = vand.u32 %v2705, 4294901760
    %v2995 = vsub.f32 %v2705, %v2994
    %2996 = vmatpush1.msra.mxu0 %v2995
    %2997 = vmatprep.subr.mxu0 0.0
    %v2998 = vand.u32 %v2704, 4294901760
    %v2999 = vsub.f32 %v2704, %v2998
    %3000 = vmatpush1.msra.mxu0 %v2999
    %3001 = vmatprep.subr.mxu0 0.0
    %v3002 = vand.u32 %v2703, 4294901760
    %v3003 = vsub.f32 %v2703, %v3002
    %3004 = vmatpush1.msra.mxu0 %v3003
    %3005 = vmatprep.subr.mxu0 0.0
    %v3006 = vand.u32 %v2702, 4294901760
    %v3007 = vsub.f32 %v2702, %v3006
    %3008 = vmatpush1.msra.mxu0 %v3007
    %3009 = vmatprep.subr.mxu0 0.0
    %v3010 = vand.u32 %v2701, 4294901760
    %v3011 = vsub.f32 %v2701, %v3010
    %3012 = vmatpush1.msra.mxu0 %v3011
    %3013 = vmatprep.subr.mxu0 0.0
    %v3014 = vand.u32 %v2700, 4294901760
    %v3015 = vsub.f32 %v2700, %v3014
    %3016 = vmatpush1.msra.mxu0 %v3015
    %3017 = vmatprep.subr.mxu0 0.0
    %v3018 = vand.u32 %v2699, 4294901760
    %v3019 = vsub.f32 %v2699, %v3018
    %3020 = vmatpush1.msra.mxu0 %v3019
    %3021 = vmatprep.subr.mxu0 0.0
    %3022 = vmatpush2.msra.mxu0 0.0
    %3023 = vmatprep.subr.mxu0 0.0
    %3024 = vmatpush2.msra.mxu0 0.0
    %3025 = vmatprep.subr.mxu0 0.0
    %3026 = vmatpush2.msra.mxu0 0.0
    %3027 = vmatprep.subr.mxu0 0.0
    %3028 = vmatpush2.msra.mxu0 0.0
    %3029 = vmatprep.subr.mxu0 0.0
    %3030 = vmatpush2.msra.mxu0 0.0
    %3031 = vmatprep.subr.mxu0 0.0
    %3032 = vmatpush2.msra.mxu0 0.0
    %3033 = vmatprep.subr.mxu0 0.0
    %3034 = vmatpush2.msra.mxu0 0.0
    %3035 = vmatprep.subr.mxu0 0.0
    %3036 = vmatpush2.msra.mxu0 0.0
    %3037 = vmatprep.subr.mxu0 0.0
    %3038 = vmatpush2.msra.mxu0 0.0
    %3039 = vmatprep.subr.mxu0 0.0
    %3040 = vmatpush2.msra.mxu0 0.0
    %3041 = vmatprep.subr.mxu0 0.0
    %3042 = vmatpush2.msra.mxu0 0.0
    %3043 = vmatprep.subr.mxu0 0.0
    %3044 = vmatpush2.msra.mxu0 0.0
    %3045 = vmatprep.subr.mxu0 0.0
    %3046 = vmatpush2.msra.mxu0 0.0
    %3047 = vmatprep.subr.mxu0 0.0
    %3048 = vmatpush2.msra.mxu0 0.0
    %3049 = vmatprep.subr.mxu0 0.0
    %3050 = vmatpush2.msra.mxu0 0.0
    %3051 = vmatprep.subr.mxu0 0.0
    %3052 = vmatpush2.msra.mxu0 0.0
    %3053 = vmatprep.mubr.f32.mxu0 0.0
    %v3054 = vand.u32 %v46, 4294901760
    %v3055 = vsub.f32 %v46, %v3054
    %3056 = vmatmul.mubr.f32.gmra.mxu0 %v3055
    %v3057 = vpop.f32.mrf.mxu0
    %v3058 = vadd.f32 %v2954, %v3057
    %v3059 = vpop.f32.mrf.mxu0
    %3060 = vdwg.mxu0
    %3061 = vmatprep.subr.mxu0 0.0
    %v3062 = vand.u32 %v2714, 4294901760
    %3063 = vmatpush1.msra.mxu0 %v3062
    %3064 = vmatprep.subr.mxu0 0.0
    %v3065 = vand.u32 %v2713, 4294901760
    %3066 = vmatpush1.msra.mxu0 %v3065
    %3067 = vmatprep.subr.mxu0 0.0
    %v3068 = vand.u32 %v2712, 4294901760
    %3069 = vmatpush1.msra.mxu0 %v3068
    %3070 = vmatprep.subr.mxu0 0.0
    %v3071 = vand.u32 %v2711, 4294901760
    %3072 = vmatpush1.msra.mxu0 %v3071
    %3073 = vmatprep.subr.mxu0 0.0
    %v3074 = vand.u32 %v2710, 4294901760
    %3075 = vmatpush1.msra.mxu0 %v3074
    %3076 = vmatprep.subr.mxu0 0.0
    %v3077 = vand.u32 %v2709, 4294901760
    %3078 = vmatpush1.msra.mxu0 %v3077
    %3079 = vmatprep.subr.mxu0 0.0
    %v3080 = vand.u32 %v2708, 4294901760
    %3081 = vmatpush1.msra.mxu0 %v3080
    %3082 = vmatprep.subr.mxu0 0.0
    %v3083 = vand.u32 %v2707, 4294901760
    %3084 = vmatpush1.msra.mxu0 %v3083
    %3085 = vmatprep.subr.mxu0 0.0
    %v3086 = vand.u32 %v2706, 4294901760
    %3087 = vmatpush1.msra.mxu0 %v3086
    %3088 = vmatprep.subr.mxu0 0.0
    %v3089 = vand.u32 %v2705, 4294901760
    %3090 = vmatpush1.msra.mxu0 %v3089
    %3091 = vmatprep.subr.mxu0 0.0
    %v3092 = vand.u32 %v2704, 4294901760
    %3093 = vmatpush1.msra.mxu0 %v3092
    %3094 = vmatprep.subr.mxu0 0.0
    %v3095 = vand.u32 %v2703, 4294901760
    %3096 = vmatpush1.msra.mxu0 %v3095
    %3097 = vmatprep.subr.mxu0 0.0
    %v3098 = vand.u32 %v2702, 4294901760
    %3099 = vmatpush1.msra.mxu0 %v3098
    %3100 = vmatprep.subr.mxu0 0.0
    %v3101 = vand.u32 %v2701, 4294901760
    %3102 = vmatpush1.msra.mxu0 %v3101
    %3103 = vmatprep.subr.mxu0 0.0
    %v3104 = vand.u32 %v2700, 4294901760
    %3105 = vmatpush1.msra.mxu0 %v3104
    %3106 = vmatprep.subr.mxu0 0.0
    %v3107 = vand.u32 %v2699, 4294901760
    %3108 = vmatpush1.msra.mxu0 %v3107
    %3109 = vmatprep.subr.mxu0 0.0
    %3110 = vmatpush2.msra.mxu0 0.0
    %3111 = vmatprep.subr.mxu0 0.0
    %3112 = vmatpush2.msra.mxu0 0.0
    %3113 = vmatprep.subr.mxu0 0.0
    %3114 = vmatpush2.msra.mxu0 0.0
    %3115 = vmatprep.subr.mxu0 0.0
    %3116 = vmatpush2.msra.mxu0 0.0
    %3117 = vmatprep.subr.mxu0 0.0
    %3118 = vmatpush2.msra.mxu0 0.0
    %3119 = vmatprep.subr.mxu0 0.0
    %3120 = vmatpush2.msra.mxu0 0.0
    %3121 = vmatprep.subr.mxu0 0.0
    %3122 = vmatpush2.msra.mxu0 0.0
    %3123 = vmatprep.subr.mxu0 0.0
    %3124 = vmatpush2.msra.mxu0 0.0
    %3125 = vmatprep.subr.mxu0 0.0
    %3126 = vmatpush2.msra.mxu0 0.0
    %3127 = vmatprep.subr.mxu0 0.0
    %3128 = vmatpush2.msra.mxu0 0.0
    %3129 = vmatprep.subr.mxu0 0.0
    %3130 = vmatpush2.msra.mxu0 0.0
    %3131 = vmatprep.subr.mxu0 0.0
    %3132 = vmatpush2.msra.mxu0 0.0
    %3133 = vmatprep.subr.mxu0 0.0
    %3134 = vmatpush2.msra.mxu0 0.0
    %3135 = vmatprep.subr.mxu0 0.0
    %3136 = vmatpush2.msra.mxu0 0.0
    %3137 = vmatprep.subr.mxu0 0.0
    %3138 = vmatpush2.msra.mxu0 0.0
    %3139 = vmatprep.subr.mxu0 0.0
    %3140 = vmatpush2.msra.mxu0 0.0
    %3141 = vmatprep.mubr.f32.mxu0 0.0
    %v3142 = vand.u32 %v46, 4294901760
    %v3143 = vsub.f32 %v46, %v3142
    %v3144 = vand.u32 %v3143, 4294901760
    %3145 = vmatmul.mubr.f32.gmra.mxu0 %v3144
    %v3146 = vpop.f32.mrf.mxu0
    %v3147 = vadd.f32 %v3058, %v3146
    %v3148 = vpop.f32.mrf.mxu0
    %3149 = vdwg.mxu0
    %3150 = vmatprep.subr.mxu0 0.0
    %v3151 = vand.u32 %v2714, 4294901760
    %v3152 = vsub.f32 %v2714, %v3151
    %v3153 = vand.u32 %v3152, 4294901760
    %3154 = vmatpush1.msra.mxu0 %v3153
    %3155 = vmatprep.subr.mxu0 0.0
    %v3156 = vand.u32 %v2713, 4294901760
    %v3157 = vsub.f32 %v2713, %v3156
    %v3158 = vand.u32 %v3157, 4294901760
    %3159 = vmatpush1.msra.mxu0 %v3158
    %3160 = vmatprep.subr.mxu0 0.0
    %v3161 = vand.u32 %v2712, 4294901760
    %v3162 = vsub.f32 %v2712, %v3161
    %v3163 = vand.u32 %v3162, 4294901760
    %3164 = vmatpush1.msra.mxu0 %v3163
    %3165 = vmatprep.subr.mxu0 0.0
    %v3166 = vand.u32 %v2711, 4294901760
    %v3167 = vsub.f32 %v2711, %v3166
    %v3168 = vand.u32 %v3167, 4294901760
    %3169 = vmatpush1.msra.mxu0 %v3168
    %3170 = vmatprep.subr.mxu0 0.0
    %v3171 = vand.u32 %v2710, 4294901760
    %v3172 = vsub.f32 %v2710, %v3171
    %v3173 = vand.u32 %v3172, 4294901760
    %3174 = vmatpush1.msra.mxu0 %v3173
    %3175 = vmatprep.subr.mxu0 0.0
    %v3176 = vand.u32 %v2709, 4294901760
    %v3177 = vsub.f32 %v2709, %v3176
    %v3178 = vand.u32 %v3177, 4294901760
    %3179 = vmatpush1.msra.mxu0 %v3178
    %3180 = vmatprep.subr.mxu0 0.0
    %v3181 = vand.u32 %v2708, 4294901760
    %v3182 = vsub.f32 %v2708, %v3181
    %v3183 = vand.u32 %v3182, 4294901760
    %3184 = vmatpush1.msra.mxu0 %v3183
    %3185 = vmatprep.subr.mxu0 0.0
    %v3186 = vand.u32 %v2707, 4294901760
    %v3187 = vsub.f32 %v2707, %v3186
    %v3188 = vand.u32 %v3187, 4294901760
    %3189 = vmatpush1.msra.mxu0 %v3188
    %3190 = vmatprep.subr.mxu0 0.0
    %v3191 = vand.u32 %v2706, 4294901760
    %v3192 = vsub.f32 %v2706, %v3191
    %v3193 = vand.u32 %v3192, 4294901760
    %3194 = vmatpush1.msra.mxu0 %v3193
    %3195 = vmatprep.subr.mxu0 0.0
    %v3196 = vand.u32 %v2705, 4294901760
    %v3197 = vsub.f32 %v2705, %v3196
    %v3198 = vand.u32 %v3197, 4294901760
    %3199 = vmatpush1.msra.mxu0 %v3198
    %3200 = vmatprep.subr.mxu0 0.0
    %v3201 = vand.u32 %v2704, 4294901760
    %v3202 = vsub.f32 %v2704, %v3201
    %v3203 = vand.u32 %v3202, 4294901760
    %3204 = vmatpush1.msra.mxu0 %v3203
    %3205 = vmatprep.subr.mxu0 0.0
    %v3206 = vand.u32 %v2703, 4294901760
    %v3207 = vsub.f32 %v2703, %v3206
    %v3208 = vand.u32 %v3207, 4294901760
    %3209 = vmatpush1.msra.mxu0 %v3208
    %3210 = vmatprep.subr.mxu0 0.0
    %v3211 = vand.u32 %v2702, 4294901760
    %v3212 = vsub.f32 %v2702, %v3211
    %v3213 = vand.u32 %v3212, 4294901760
    %3214 = vmatpush1.msra.mxu0 %v3213
    %3215 = vmatprep.subr.mxu0 0.0
    %v3216 = vand.u32 %v2701, 4294901760
    %v3217 = vsub.f32 %v2701, %v3216
    %v3218 = vand.u32 %v3217, 4294901760
    %3219 = vmatpush1.msra.mxu0 %v3218
    %3220 = vmatprep.subr.mxu0 0.0
    %v3221 = vand.u32 %v2700, 4294901760
    %v3222 = vsub.f32 %v2700, %v3221
    %v3223 = vand.u32 %v3222, 4294901760
    %3224 = vmatpush1.msra.mxu0 %v3223
    %3225 = vmatprep.subr.mxu0 0.0
    %v3226 = vand.u32 %v2699, 4294901760
    %v3227 = vsub.f32 %v2699, %v3226
    %v3228 = vand.u32 %v3227, 4294901760
    %3229 = vmatpush1.msra.mxu0 %v3228
    %3230 = vmatprep.subr.mxu0 0.0
    %3231 = vmatpush2.msra.mxu0 0.0
    %3232 = vmatprep.subr.mxu0 0.0
    %3233 = vmatpush2.msra.mxu0 0.0
    %3234 = vmatprep.subr.mxu0 0.0
    %3235 = vmatpush2.msra.mxu0 0.0
    %3236 = vmatprep.subr.mxu0 0.0
    %3237 = vmatpush2.msra.mxu0 0.0
    %3238 = vmatprep.subr.mxu0 0.0
    %3239 = vmatpush2.msra.mxu0 0.0
    %3240 = vmatprep.subr.mxu0 0.0
    %3241 = vmatpush2.msra.mxu0 0.0
    %3242 = vmatprep.subr.mxu0 0.0
    %3243 = vmatpush2.msra.mxu0 0.0
    %3244 = vmatprep.subr.mxu0 0.0
    %3245 = vmatpush2.msra.mxu0 0.0
    %3246 = vmatprep.subr.mxu0 0.0
    %3247 = vmatpush2.msra.mxu0 0.0
    %3248 = vmatprep.subr.mxu0 0.0
    %3249 = vmatpush2.msra.mxu0 0.0
    %3250 = vmatprep.subr.mxu0 0.0
    %3251 = vmatpush2.msra.mxu0 0.0
    %3252 = vmatprep.subr.mxu0 0.0
    %3253 = vmatpush2.msra.mxu0 0.0
    %3254 = vmatprep.subr.mxu0 0.0
    %3255 = vmatpush2.msra.mxu0 0.0
    %3256 = vmatprep.subr.mxu0 0.0
    %3257 = vmatpush2.msra.mxu0 0.0
    %3258 = vmatprep.subr.mxu0 0.0
    %3259 = vmatpush2.msra.mxu0 0.0
    %3260 = vmatprep.subr.mxu0 0.0
    %3261 = vmatpush2.msra.mxu0 0.0
    %3262 = vmatprep.mubr.f32.mxu0 0.0
    %v3263 = vand.u32 %v46, 4294901760
    %3264 = vmatmul.mubr.f32.gmra.mxu0 %v3263
    %v3265 = vpop.f32.mrf.mxu0
    %v3266 = vadd.f32 %v3147, %v3265
    %v3267 = vpop.f32.mrf.mxu0
    %3268 = vdwg.mxu0
    %3269 = vmatprep.subr.mxu0 0.0
    %v3270 = vand.u32 %v2714, 4294901760
    %3271 = vmatpush1.msra.mxu0 %v3270
    %3272 = vmatprep.subr.mxu0 0.0
    %v3273 = vand.u32 %v2713, 4294901760
    %3274 = vmatpush1.msra.mxu0 %v3273
    %3275 = vmatprep.subr.mxu0 0.0
    %v3276 = vand.u32 %v2712, 4294901760
    %3277 = vmatpush1.msra.mxu0 %v3276
    %3278 = vmatprep.subr.mxu0 0.0
    %v3279 = vand.u32 %v2711, 4294901760
    %3280 = vmatpush1.msra.mxu0 %v3279
    %3281 = vmatprep.subr.mxu0 0.0
    %v3282 = vand.u32 %v2710, 4294901760
    %3283 = vmatpush1.msra.mxu0 %v3282
    %3284 = vmatprep.subr.mxu0 0.0
    %v3285 = vand.u32 %v2709, 4294901760
    %3286 = vmatpush1.msra.mxu0 %v3285
    %3287 = vmatprep.subr.mxu0 0.0
    %v3288 = vand.u32 %v2708, 4294901760
    %3289 = vmatpush1.msra.mxu0 %v3288
    %3290 = vmatprep.subr.mxu0 0.0
    %v3291 = vand.u32 %v2707, 4294901760
    %3292 = vmatpush1.msra.mxu0 %v3291
    %3293 = vmatprep.subr.mxu0 0.0
    %v3294 = vand.u32 %v2706, 4294901760
    %3295 = vmatpush1.msra.mxu0 %v3294
    %3296 = vmatprep.subr.mxu0 0.0
    %v3297 = vand.u32 %v2705, 4294901760
    %3298 = vmatpush1.msra.mxu0 %v3297
    %3299 = vmatprep.subr.mxu0 0.0
    %v3300 = vand.u32 %v2704, 4294901760
    %3301 = vmatpush1.msra.mxu0 %v3300
    %3302 = vmatprep.subr.mxu0 0.0
    %v3303 = vand.u32 %v2703, 4294901760
    %3304 = vmatpush1.msra.mxu0 %v3303
    %3305 = vmatprep.subr.mxu0 0.0
    %v3306 = vand.u32 %v2702, 4294901760
    %3307 = vmatpush1.msra.mxu0 %v3306
    %3308 = vmatprep.subr.mxu0 0.0
    %v3309 = vand.u32 %v2701, 4294901760
    %3310 = vmatpush1.msra.mxu0 %v3309
    %3311 = vmatprep.subr.mxu0 0.0
    %v3312 = vand.u32 %v2700, 4294901760
    %3313 = vmatpush1.msra.mxu0 %v3312
    %3314 = vmatprep.subr.mxu0 0.0
    %v3315 = vand.u32 %v2699, 4294901760
    %3316 = vmatpush1.msra.mxu0 %v3315
    %3317 = vmatprep.subr.mxu0 0.0
    %3318 = vmatpush2.msra.mxu0 0.0
    %3319 = vmatprep.subr.mxu0 0.0
    %3320 = vmatpush2.msra.mxu0 0.0
    %3321 = vmatprep.subr.mxu0 0.0
    %3322 = vmatpush2.msra.mxu0 0.0
    %3323 = vmatprep.subr.mxu0 0.0
    %3324 = vmatpush2.msra.mxu0 0.0
    %3325 = vmatprep.subr.mxu0 0.0
    %3326 = vmatpush2.msra.mxu0 0.0
    %3327 = vmatprep.subr.mxu0 0.0
    %3328 = vmatpush2.msra.mxu0 0.0
    %3329 = vmatprep.subr.mxu0 0.0
    %3330 = vmatpush2.msra.mxu0 0.0
    %3331 = vmatprep.subr.mxu0 0.0
    %3332 = vmatpush2.msra.mxu0 0.0
    %3333 = vmatprep.subr.mxu0 0.0
    %3334 = vmatpush2.msra.mxu0 0.0
    %3335 = vmatprep.subr.mxu0 0.0
    %3336 = vmatpush2.msra.mxu0 0.0
    %3337 = vmatprep.subr.mxu0 0.0
    %3338 = vmatpush2.msra.mxu0 0.0
    %3339 = vmatprep.subr.mxu0 0.0
    %3340 = vmatpush2.msra.mxu0 0.0
    %3341 = vmatprep.subr.mxu0 0.0
    %3342 = vmatpush2.msra.mxu0 0.0
    %3343 = vmatprep.subr.mxu0 0.0
    %3344 = vmatpush2.msra.mxu0 0.0
    %3345 = vmatprep.subr.mxu0 0.0
    %3346 = vmatpush2.msra.mxu0 0.0
    %3347 = vmatprep.subr.mxu0 0.0
    %3348 = vmatpush2.msra.mxu0 0.0
    %3349 = vmatprep.mubr.f32.mxu0 0.0
    %v3350 = vand.u32 %v46, 4294901760
    %3351 = vmatmul.mubr.f32.gmra.mxu0 %v3350
    %v3352 = vpop.f32.mrf.mxu0
    %v3353 = vadd.f32 %v3266, %v3352
    %v3354 = vpop.f32.mrf.mxu0
    %3355 = vdwg.mxu0
    %v3356 = vmul.f32 %v3353, %v46
    %3357 = vadd.xlane.f32.xlu0 %v3356
    %v3358 = vpop.xlane.xlu0 %3357
    %v3359 = vmul.f32 %v3358, 0.5
    %v3360 = vadd.f32 %v3359, 98.593445
    %s3361 = scalar_lea.vmem [#allocation5], 640
    %v3362 = vld [vmem:[%s3361] sm:$0xff]
    %v3363 = vld [vmem:[%s3361 + $0x8] sm:$0xff]
    %v3364 = vld [vmem:[%s3361 + $0x10] sm:$0xff]
    %v3365 = vld [vmem:[%s3361 + $0x18] sm:$0xff]
    %v3366 = vld [vmem:[%s3361 + $0x20] sm:$0xff]
    %v3367 = vld [vmem:[%s3361 + $0x28] sm:$0xff]
    %v3368 = vld [vmem:[%s3361 + $0x30] sm:$0xff]
    %v3369 = vld [vmem:[%s3361 + $0x38] sm:$0xff]
    %v3370 = vld [vmem:[%s3361 + $0x40] sm:$0xff]
    %v3371 = vld [vmem:[%s3361 + $0x48] sm:$0xff]
    %v3372 = vld [vmem:[%s3361 + $0x50] sm:$0xff]
    %v3373 = vld [vmem:[%s3361 + $0x58] sm:$0xff]
    %v3374 = vld [vmem:[%s3361 + $0x60] sm:$0xff]
    %v3375 = vld [vmem:[%s3361 + $0x68] sm:$0xff]
    %v3376 = vld [vmem:[%s3361 + $0x70] sm:$0xff]
    %v3377 = vld [vmem:[%s3361 + $0x78] sm:$0xff]
    %3378 = vmatprep.subr.mxu0 0.0
    %v3379 = vand.u32 %v3377, 4294901760
    %3380 = vmatpush1.msra.mxu0 %v3379
    %3381 = vmatprep.subr.mxu0 0.0
    %v3382 = vand.u32 %v3376, 4294901760
    %3383 = vmatpush1.msra.mxu0 %v3382
    %3384 = vmatprep.subr.mxu0 0.0
    %v3385 = vand.u32 %v3375, 4294901760
    %3386 = vmatpush1.msra.mxu0 %v3385
    %3387 = vmatprep.subr.mxu0 0.0
    %v3388 = vand.u32 %v3374, 4294901760
    %3389 = vmatpush1.msra.mxu0 %v3388
    %3390 = vmatprep.subr.mxu0 0.0
    %v3391 = vand.u32 %v3373, 4294901760
    %3392 = vmatpush1.msra.mxu0 %v3391
    %3393 = vmatprep.subr.mxu0 0.0
    %v3394 = vand.u32 %v3372, 4294901760
    %3395 = vmatpush1.msra.mxu0 %v3394
    %3396 = vmatprep.subr.mxu0 0.0
    %v3397 = vand.u32 %v3371, 4294901760
    %3398 = vmatpush1.msra.mxu0 %v3397
    %3399 = vmatprep.subr.mxu0 0.0
    %v3400 = vand.u32 %v3370, 4294901760
    %3401 = vmatpush1.msra.mxu0 %v3400
    %3402 = vmatprep.subr.mxu0 0.0
    %v3403 = vand.u32 %v3369, 4294901760
    %3404 = vmatpush1.msra.mxu0 %v3403
    %3405 = vmatprep.subr.mxu0 0.0
    %v3406 = vand.u32 %v3368, 4294901760
    %3407 = vmatpush1.msra.mxu0 %v3406
    %3408 = vmatprep.subr.mxu0 0.0
    %v3409 = vand.u32 %v3367, 4294901760
    %3410 = vmatpush1.msra.mxu0 %v3409
    %3411 = vmatprep.subr.mxu0 0.0
    %v3412 = vand.u32 %v3366, 4294901760
    %3413 = vmatpush1.msra.mxu0 %v3412
    %3414 = vmatprep.subr.mxu0 0.0
    %v3415 = vand.u32 %v3365, 4294901760
    %3416 = vmatpush1.msra.mxu0 %v3415
    %3417 = vmatprep.subr.mxu0 0.0
    %v3418 = vand.u32 %v3364, 4294901760
    %3419 = vmatpush1.msra.mxu0 %v3418
    %3420 = vmatprep.subr.mxu0 0.0
    %v3421 = vand.u32 %v3363, 4294901760
    %3422 = vmatpush1.msra.mxu0 %v3421
    %3423 = vmatprep.subr.mxu0 0.0
    %v3424 = vand.u32 %v3362, 4294901760
    %3425 = vmatpush1.msra.mxu0 %v3424
    %3426 = vmatprep.subr.mxu0 0.0
    %3427 = vmatpush2.msra.mxu0 0.0
    %3428 = vmatprep.subr.mxu0 0.0
    %3429 = vmatpush2.msra.mxu0 0.0
    %3430 = vmatprep.subr.mxu0 0.0
    %3431 = vmatpush2.msra.mxu0 0.0
    %3432 = vmatprep.subr.mxu0 0.0
    %3433 = vmatpush2.msra.mxu0 0.0
    %3434 = vmatprep.subr.mxu0 0.0
    %3435 = vmatpush2.msra.mxu0 0.0
    %3436 = vmatprep.subr.mxu0 0.0
    %3437 = vmatpush2.msra.mxu0 0.0
    %3438 = vmatprep.subr.mxu0 0.0
    %3439 = vmatpush2.msra.mxu0 0.0
    %3440 = vmatprep.subr.mxu0 0.0
    %3441 = vmatpush2.msra.mxu0 0.0
    %3442 = vmatprep.subr.mxu0 0.0
    %3443 = vmatpush2.msra.mxu0 0.0
    %3444 = vmatprep.subr.mxu0 0.0
    %3445 = vmatpush2.msra.mxu0 0.0
    %3446 = vmatprep.subr.mxu0 0.0
    %3447 = vmatpush2.msra.mxu0 0.0
    %3448 = vmatprep.subr.mxu0 0.0
    %3449 = vmatpush2.msra.mxu0 0.0
    %3450 = vmatprep.subr.mxu0 0.0
    %3451 = vmatpush2.msra.mxu0 0.0
    %3452 = vmatprep.subr.mxu0 0.0
    %3453 = vmatpush2.msra.mxu0 0.0
    %3454 = vmatprep.subr.mxu0 0.0
    %3455 = vmatpush2.msra.mxu0 0.0
    %3456 = vmatprep.subr.mxu0 0.0
    %3457 = vmatpush2.msra.mxu0 0.0
    %3458 = vmatprep.mubr.f32.mxu0 0.0
    %v3459 = vand.u32 %v46, 4294901760
    %v3460 = vsub.f32 %v46, %v3459
    %v3461 = vand.u32 %v3460, 4294901760
    %v3462 = vsub.f32 %v3460, %v3461
    %v3463 = vand.u32 %v3462, 4294901760
    %3464 = vmatmul.mubr.f32.gmra.mxu0 %v3463
    %v3465 = vpop.f32.mrf.mxu0
    %v3466 = vadd.f32 0.0, %v3465
    %v3467 = vpop.f32.mrf.mxu0
    %3468 = vdwg.mxu0
    %3469 = vmatprep.subr.mxu0 0.0
    %v3470 = vand.u32 %v3377, 4294901760
    %v3471 = vsub.f32 %v3377, %v3470
    %v3472 = vand.u32 %v3471, 4294901760
    %v3473 = vsub.f32 %v3471, %v3472
    %v3474 = vand.u32 %v3473, 4294901760
    %3475 = vmatpush1.msra.mxu0 %v3474
    %3476 = vmatprep.subr.mxu0 0.0
    %v3477 = vand.u32 %v3376, 4294901760
    %v3478 = vsub.f32 %v3376, %v3477
    %v3479 = vand.u32 %v3478, 4294901760
    %v3480 = vsub.f32 %v3478, %v3479
    %v3481 = vand.u32 %v3480, 4294901760
    %3482 = vmatpush1.msra.mxu0 %v3481
    %3483 = vmatprep.subr.mxu0 0.0
    %v3484 = vand.u32 %v3375, 4294901760
    %v3485 = vsub.f32 %v3375, %v3484
    %v3486 = vand.u32 %v3485, 4294901760
    %v3487 = vsub.f32 %v3485, %v3486
    %v3488 = vand.u32 %v3487, 4294901760
    %3489 = vmatpush1.msra.mxu0 %v3488
    %3490 = vmatprep.subr.mxu0 0.0
    %v3491 = vand.u32 %v3374, 4294901760
    %v3492 = vsub.f32 %v3374, %v3491
    %v3493 = vand.u32 %v3492, 4294901760
    %v3494 = vsub.f32 %v3492, %v3493
    %v3495 = vand.u32 %v3494, 4294901760
    %3496 = vmatpush1.msra.mxu0 %v3495
    %3497 = vmatprep.subr.mxu0 0.0
    %v3498 = vand.u32 %v3373, 4294901760
    %v3499 = vsub.f32 %v3373, %v3498
    %v3500 = vand.u32 %v3499, 4294901760
    %v3501 = vsub.f32 %v3499, %v3500
    %v3502 = vand.u32 %v3501, 4294901760
    %3503 = vmatpush1.msra.mxu0 %v3502
    %3504 = vmatprep.subr.mxu0 0.0
    %v3505 = vand.u32 %v3372, 4294901760
    %v3506 = vsub.f32 %v3372, %v3505
    %v3507 = vand.u32 %v3506, 4294901760
    %v3508 = vsub.f32 %v3506, %v3507
    %v3509 = vand.u32 %v3508, 4294901760
    %3510 = vmatpush1.msra.mxu0 %v3509
    %3511 = vmatprep.subr.mxu0 0.0
    %v3512 = vand.u32 %v3371, 4294901760
    %v3513 = vsub.f32 %v3371, %v3512
    %v3514 = vand.u32 %v3513, 4294901760
    %v3515 = vsub.f32 %v3513, %v3514
    %v3516 = vand.u32 %v3515, 4294901760
    %3517 = vmatpush1.msra.mxu0 %v3516
    %3518 = vmatprep.subr.mxu0 0.0
    %v3519 = vand.u32 %v3370, 4294901760
    %v3520 = vsub.f32 %v3370, %v3519
    %v3521 = vand.u32 %v3520, 4294901760
    %v3522 = vsub.f32 %v3520, %v3521
    %v3523 = vand.u32 %v3522, 4294901760
    %3524 = vmatpush1.msra.mxu0 %v3523
    %3525 = vmatprep.subr.mxu0 0.0
    %v3526 = vand.u32 %v3369, 4294901760
    %v3527 = vsub.f32 %v3369, %v3526
    %v3528 = vand.u32 %v3527, 4294901760
    %v3529 = vsub.f32 %v3527, %v3528
    %v3530 = vand.u32 %v3529, 4294901760
    %3531 = vmatpush1.msra.mxu0 %v3530
    %3532 = vmatprep.subr.mxu0 0.0
    %v3533 = vand.u32 %v3368, 4294901760
    %v3534 = vsub.f32 %v3368, %v3533
    %v3535 = vand.u32 %v3534, 4294901760
    %v3536 = vsub.f32 %v3534, %v3535
    %v3537 = vand.u32 %v3536, 4294901760
    %3538 = vmatpush1.msra.mxu0 %v3537
    %3539 = vmatprep.subr.mxu0 0.0
    %v3540 = vand.u32 %v3367, 4294901760
    %v3541 = vsub.f32 %v3367, %v3540
    %v3542 = vand.u32 %v3541, 4294901760
    %v3543 = vsub.f32 %v3541, %v3542
    %v3544 = vand.u32 %v3543, 4294901760
    %3545 = vmatpush1.msra.mxu0 %v3544
    %3546 = vmatprep.subr.mxu0 0.0
    %v3547 = vand.u32 %v3366, 4294901760
    %v3548 = vsub.f32 %v3366, %v3547
    %v3549 = vand.u32 %v3548, 4294901760
    %v3550 = vsub.f32 %v3548, %v3549
    %v3551 = vand.u32 %v3550, 4294901760
    %3552 = vmatpush1.msra.mxu0 %v3551
    %3553 = vmatprep.subr.mxu0 0.0
    %v3554 = vand.u32 %v3365, 4294901760
    %v3555 = vsub.f32 %v3365, %v3554
    %v3556 = vand.u32 %v3555, 4294901760
    %v3557 = vsub.f32 %v3555, %v3556
    %v3558 = vand.u32 %v3557, 4294901760
    %3559 = vmatpush1.msra.mxu0 %v3558
    %3560 = vmatprep.subr.mxu0 0.0
    %v3561 = vand.u32 %v3364, 4294901760
    %v3562 = vsub.f32 %v3364, %v3561
    %v3563 = vand.u32 %v3562, 4294901760
    %v3564 = vsub.f32 %v3562, %v3563
    %v3565 = vand.u32 %v3564, 4294901760
    %3566 = vmatpush1.msra.mxu0 %v3565
    %3567 = vmatprep.subr.mxu0 0.0
    %v3568 = vand.u32 %v3363, 4294901760
    %v3569 = vsub.f32 %v3363, %v3568
    %v3570 = vand.u32 %v3569, 4294901760
    %v3571 = vsub.f32 %v3569, %v3570
    %v3572 = vand.u32 %v3571, 4294901760
    %3573 = vmatpush1.msra.mxu0 %v3572
    %3574 = vmatprep.subr.mxu0 0.0
    %v3575 = vand.u32 %v3362, 4294901760
    %v3576 = vsub.f32 %v3362, %v3575
    %v3577 = vand.u32 %v3576, 4294901760
    %v3578 = vsub.f32 %v3576, %v3577
    %v3579 = vand.u32 %v3578, 4294901760
    %3580 = vmatpush1.msra.mxu0 %v3579
    %3581 = vmatprep.subr.mxu0 0.0
    %3582 = vmatpush2.msra.mxu0 0.0
    %3583 = vmatprep.subr.mxu0 0.0
    %3584 = vmatpush2.msra.mxu0 0.0
    %3585 = vmatprep.subr.mxu0 0.0
    %3586 = vmatpush2.msra.mxu0 0.0
    %3587 = vmatprep.subr.mxu0 0.0
    %3588 = vmatpush2.msra.mxu0 0.0
    %3589 = vmatprep.subr.mxu0 0.0
    %3590 = vmatpush2.msra.mxu0 0.0
    %3591 = vmatprep.subr.mxu0 0.0
    %3592 = vmatpush2.msra.mxu0 0.0
    %3593 = vmatprep.subr.mxu0 0.0
    %3594 = vmatpush2.msra.mxu0 0.0
    %3595 = vmatprep.subr.mxu0 0.0
    %3596 = vmatpush2.msra.mxu0 0.0
    %3597 = vmatprep.subr.mxu0 0.0
    %3598 = vmatpush2.msra.mxu0 0.0
    %3599 = vmatprep.subr.mxu0 0.0
    %3600 = vmatpush2.msra.mxu0 0.0
    %3601 = vmatprep.subr.mxu0 0.0
    %3602 = vmatpush2.msra.mxu0 0.0
    %3603 = vmatprep.subr.mxu0 0.0
    %3604 = vmatpush2.msra.mxu0 0.0
    %3605 = vmatprep.subr.mxu0 0.0
    %3606 = vmatpush2.msra.mxu0 0.0
    %3607 = vmatprep.subr.mxu0 0.0
    %3608 = vmatpush2.msra.mxu0 0.0
    %3609 = vmatprep.subr.mxu0 0.0
    %3610 = vmatpush2.msra.mxu0 0.0
    %3611 = vmatprep.subr.mxu0 0.0
    %3612 = vmatpush2.msra.mxu0 0.0
    %3613 = vmatprep.mubr.f32.mxu0 0.0
    %v3614 = vand.u32 %v46, 4294901760
    %3615 = vmatmul.mubr.f32.gmra.mxu0 %v3614
    %v3616 = vpop.f32.mrf.mxu0
    %v3617 = vadd.f32 %v3466, %v3616
    %v3618 = vpop.f32.mrf.mxu0
    %3619 = vdwg.mxu0
    %3620 = vmatprep.subr.mxu0 0.0
    %v3621 = vand.u32 %v3377, 4294901760
    %v3622 = vsub.f32 %v3377, %v3621
    %3623 = vmatpush1.msra.mxu0 %v3622
    %3624 = vmatprep.subr.mxu0 0.0
    %v3625 = vand.u32 %v3376, 4294901760
    %v3626 = vsub.f32 %v3376, %v3625
    %3627 = vmatpush1.msra.mxu0 %v3626
    %3628 = vmatprep.subr.mxu0 0.0
    %v3629 = vand.u32 %v3375, 4294901760
    %v3630 = vsub.f32 %v3375, %v3629
    %3631 = vmatpush1.msra.mxu0 %v3630
    %3632 = vmatprep.subr.mxu0 0.0
    %v3633 = vand.u32 %v3374, 4294901760
    %v3634 = vsub.f32 %v3374, %v3633
    %3635 = vmatpush1.msra.mxu0 %v3634
    %3636 = vmatprep.subr.mxu0 0.0
    %v3637 = vand.u32 %v3373, 4294901760
    %v3638 = vsub.f32 %v3373, %v3637
    %3639 = vmatpush1.msra.mxu0 %v3638
    %3640 = vmatprep.subr.mxu0 0.0
    %v3641 = vand.u32 %v3372, 4294901760
    %v3642 = vsub.f32 %v3372, %v3641
    %3643 = vmatpush1.msra.mxu0 %v3642
    %3644 = vmatprep.subr.mxu0 0.0
    %v3645 = vand.u32 %v3371, 4294901760
    %v3646 = vsub.f32 %v3371, %v3645
    %3647 = vmatpush1.msra.mxu0 %v3646
    %3648 = vmatprep.subr.mxu0 0.0
    %v3649 = vand.u32 %v3370, 4294901760
    %v3650 = vsub.f32 %v3370, %v3649
    %3651 = vmatpush1.msra.mxu0 %v3650
    %3652 = vmatprep.subr.mxu0 0.0
    %v3653 = vand.u32 %v3369, 4294901760
    %v3654 = vsub.f32 %v3369, %v3653
    %3655 = vmatpush1.msra.mxu0 %v3654
    %3656 = vmatprep.subr.mxu0 0.0
    %v3657 = vand.u32 %v3368, 4294901760
    %v3658 = vsub.f32 %v3368, %v3657
    %3659 = vmatpush1.msra.mxu0 %v3658
    %3660 = vmatprep.subr.mxu0 0.0
    %v3661 = vand.u32 %v3367, 4294901760
    %v3662 = vsub.f32 %v3367, %v3661
    %3663 = vmatpush1.msra.mxu0 %v3662
    %3664 = vmatprep.subr.mxu0 0.0
    %v3665 = vand.u32 %v3366, 4294901760
    %v3666 = vsub.f32 %v3366, %v3665
    %3667 = vmatpush1.msra.mxu0 %v3666
    %3668 = vmatprep.subr.mxu0 0.0
    %v3669 = vand.u32 %v3365, 4294901760
    %v3670 = vsub.f32 %v3365, %v3669
    %3671 = vmatpush1.msra.mxu0 %v3670
    %3672 = vmatprep.subr.mxu0 0.0
    %v3673 = vand.u32 %v3364, 4294901760
    %v3674 = vsub.f32 %v3364, %v3673
    %3675 = vmatpush1.msra.mxu0 %v3674
    %3676 = vmatprep.subr.mxu0 0.0
    %v3677 = vand.u32 %v3363, 4294901760
    %v3678 = vsub.f32 %v3363, %v3677
    %3679 = vmatpush1.msra.mxu0 %v3678
    %3680 = vmatprep.subr.mxu0 0.0
    %v3681 = vand.u32 %v3362, 4294901760
    %v3682 = vsub.f32 %v3362, %v3681
    %3683 = vmatpush1.msra.mxu0 %v3682
    %3684 = vmatprep.subr.mxu0 0.0
    %3685 = vmatpush2.msra.mxu0 0.0
    %3686 = vmatprep.subr.mxu0 0.0
    %3687 = vmatpush2.msra.mxu0 0.0
    %3688 = vmatprep.subr.mxu0 0.0
    %3689 = vmatpush2.msra.mxu0 0.0
    %3690 = vmatprep.subr.mxu0 0.0
    %3691 = vmatpush2.msra.mxu0 0.0
    %3692 = vmatprep.subr.mxu0 0.0
    %3693 = vmatpush2.msra.mxu0 0.0
    %3694 = vmatprep.subr.mxu0 0.0
    %3695 = vmatpush2.msra.mxu0 0.0
    %3696 = vmatprep.subr.mxu0 0.0
    %3697 = vmatpush2.msra.mxu0 0.0
    %3698 = vmatprep.subr.mxu0 0.0
    %3699 = vmatpush2.msra.mxu0 0.0
    %3700 = vmatprep.subr.mxu0 0.0
    %3701 = vmatpush2.msra.mxu0 0.0
    %3702 = vmatprep.subr.mxu0 0.0
    %3703 = vmatpush2.msra.mxu0 0.0
    %3704 = vmatprep.subr.mxu0 0.0
    %3705 = vmatpush2.msra.mxu0 0.0
    %3706 = vmatprep.subr.mxu0 0.0
    %3707 = vmatpush2.msra.mxu0 0.0
    %3708 = vmatprep.subr.mxu0 0.0
    %3709 = vmatpush2.msra.mxu0 0.0
    %3710 = vmatprep.subr.mxu0 0.0
    %3711 = vmatpush2.msra.mxu0 0.0
    %3712 = vmatprep.subr.mxu0 0.0
    %3713 = vmatpush2.msra.mxu0 0.0
    %3714 = vmatprep.subr.mxu0 0.0
    %3715 = vmatpush2.msra.mxu0 0.0
    %3716 = vmatprep.mubr.f32.mxu0 0.0
    %v3717 = vand.u32 %v46, 4294901760
    %v3718 = vsub.f32 %v46, %v3717
    %3719 = vmatmul.mubr.f32.gmra.mxu0 %v3718
    %v3720 = vpop.f32.mrf.mxu0
    %v3721 = vadd.f32 %v3617, %v3720
    %v3722 = vpop.f32.mrf.mxu0
    %3723 = vdwg.mxu0
    %3724 = vmatprep.subr.mxu0 0.0
    %v3725 = vand.u32 %v3377, 4294901760
    %3726 = vmatpush1.msra.mxu0 %v3725
    %3727 = vmatprep.subr.mxu0 0.0
    %v3728 = vand.u32 %v3376, 4294901760
    %3729 = vmatpush1.msra.mxu0 %v3728
    %3730 = vmatprep.subr.mxu0 0.0
    %v3731 = vand.u32 %v3375, 4294901760
    %3732 = vmatpush1.msra.mxu0 %v3731
    %3733 = vmatprep.subr.mxu0 0.0
    %v3734 = vand.u32 %v3374, 4294901760
    %3735 = vmatpush1.msra.mxu0 %v3734
    %3736 = vmatprep.subr.mxu0 0.0
    %v3737 = vand.u32 %v3373, 4294901760
    %3738 = vmatpush1.msra.mxu0 %v3737
    %3739 = vmatprep.subr.mxu0 0.0
    %v3740 = vand.u32 %v3372, 4294901760
    %3741 = vmatpush1.msra.mxu0 %v3740
    %3742 = vmatprep.subr.mxu0 0.0
    %v3743 = vand.u32 %v3371, 4294901760
    %3744 = vmatpush1.msra.mxu0 %v3743
    %3745 = vmatprep.subr.mxu0 0.0
    %v3746 = vand.u32 %v3370, 4294901760
    %3747 = vmatpush1.msra.mxu0 %v3746
    %3748 = vmatprep.subr.mxu0 0.0
    %v3749 = vand.u32 %v3369, 4294901760
    %3750 = vmatpush1.msra.mxu0 %v3749
    %3751 = vmatprep.subr.mxu0 0.0
    %v3752 = vand.u32 %v3368, 4294901760
    %3753 = vmatpush1.msra.mxu0 %v3752
    %3754 = vmatprep.subr.mxu0 0.0
    %v3755 = vand.u32 %v3367, 4294901760
    %3756 = vmatpush1.msra.mxu0 %v3755
    %3757 = vmatprep.subr.mxu0 0.0
    %v3758 = vand.u32 %v3366, 4294901760
    %3759 = vmatpush1.msra.mxu0 %v3758
    %3760 = vmatprep.subr.mxu0 0.0
    %v3761 = vand.u32 %v3365, 4294901760
    %3762 = vmatpush1.msra.mxu0 %v3761
    %3763 = vmatprep.subr.mxu0 0.0
    %v3764 = vand.u32 %v3364, 4294901760
    %3765 = vmatpush1.msra.mxu0 %v3764
    %3766 = vmatprep.subr.mxu0 0.0
    %v3767 = vand.u32 %v3363, 4294901760
    %3768 = vmatpush1.msra.mxu0 %v3767
    %3769 = vmatprep.subr.mxu0 0.0
    %v3770 = vand.u32 %v3362, 4294901760
    %3771 = vmatpush1.msra.mxu0 %v3770
    %3772 = vmatprep.subr.mxu0 0.0
    %3773 = vmatpush2.msra.mxu0 0.0
    %3774 = vmatprep.subr.mxu0 0.0
    %3775 = vmatpush2.msra.mxu0 0.0
    %3776 = vmatprep.subr.mxu0 0.0
    %3777 = vmatpush2.msra.mxu0 0.0
    %3778 = vmatprep.subr.mxu0 0.0
    %3779 = vmatpush2.msra.mxu0 0.0
    %3780 = vmatprep.subr.mxu0 0.0
    %3781 = vmatpush2.msra.mxu0 0.0
    %3782 = vmatprep.subr.mxu0 0.0
    %3783 = vmatpush2.msra.mxu0 0.0
    %3784 = vmatprep.subr.mxu0 0.0
    %3785 = vmatpush2.msra.mxu0 0.0
    %3786 = vmatprep.subr.mxu0 0.0
    %3787 = vmatpush2.msra.mxu0 0.0
    %3788 = vmatprep.subr.mxu0 0.0
    %3789 = vmatpush2.msra.mxu0 0.0
    %3790 = vmatprep.subr.mxu0 0.0
    %3791 = vmatpush2.msra.mxu0 0.0
    %3792 = vmatprep.subr.mxu0 0.0
    %3793 = vmatpush2.msra.mxu0 0.0
    %3794 = vmatprep.subr.mxu0 0.0
    %3795 = vmatpush2.msra.mxu0 0.0
    %3796 = vmatprep.subr.mxu0 0.0
    %3797 = vmatpush2.msra.mxu0 0.0
    %3798 = vmatprep.subr.mxu0 0.0
    %3799 = vmatpush2.msra.mxu0 0.0
    %3800 = vmatprep.subr.mxu0 0.0
    %3801 = vmatpush2.msra.mxu0 0.0
    %3802 = vmatprep.subr.mxu0 0.0
    %3803 = vmatpush2.msra.mxu0 0.0
    %3804 = vmatprep.mubr.f32.mxu0 0.0
    %v3805 = vand.u32 %v46, 4294901760
    %v3806 = vsub.f32 %v46, %v3805
    %v3807 = vand.u32 %v3806, 4294901760
    %3808 = vmatmul.mubr.f32.gmra.mxu0 %v3807
    %v3809 = vpop.f32.mrf.mxu0
    %v3810 = vadd.f32 %v3721, %v3809
    %v3811 = vpop.f32.mrf.mxu0
    %3812 = vdwg.mxu0
    %3813 = vmatprep.subr.mxu0 0.0
    %v3814 = vand.u32 %v3377, 4294901760
    %v3815 = vsub.f32 %v3377, %v3814
    %v3816 = vand.u32 %v3815, 4294901760
    %3817 = vmatpush1.msra.mxu0 %v3816
    %3818 = vmatprep.subr.mxu0 0.0
    %v3819 = vand.u32 %v3376, 4294901760
    %v3820 = vsub.f32 %v3376, %v3819
    %v3821 = vand.u32 %v3820, 4294901760
    %3822 = vmatpush1.msra.mxu0 %v3821
    %3823 = vmatprep.subr.mxu0 0.0
    %v3824 = vand.u32 %v3375, 4294901760
    %v3825 = vsub.f32 %v3375, %v3824
    %v3826 = vand.u32 %v3825, 4294901760
    %3827 = vmatpush1.msra.mxu0 %v3826
    %3828 = vmatprep.subr.mxu0 0.0
    %v3829 = vand.u32 %v3374, 4294901760
    %v3830 = vsub.f32 %v3374, %v3829
    %v3831 = vand.u32 %v3830, 4294901760
    %3832 = vmatpush1.msra.mxu0 %v3831
    %3833 = vmatprep.subr.mxu0 0.0
    %v3834 = vand.u32 %v3373, 4294901760
    %v3835 = vsub.f32 %v3373, %v3834
    %v3836 = vand.u32 %v3835, 4294901760
    %3837 = vmatpush1.msra.mxu0 %v3836
    %3838 = vmatprep.subr.mxu0 0.0
    %v3839 = vand.u32 %v3372, 4294901760
    %v3840 = vsub.f32 %v3372, %v3839
    %v3841 = vand.u32 %v3840, 4294901760
    %3842 = vmatpush1.msra.mxu0 %v3841
    %3843 = vmatprep.subr.mxu0 0.0
    %v3844 = vand.u32 %v3371, 4294901760
    %v3845 = vsub.f32 %v3371, %v3844
    %v3846 = vand.u32 %v3845, 4294901760
    %3847 = vmatpush1.msra.mxu0 %v3846
    %3848 = vmatprep.subr.mxu0 0.0
    %v3849 = vand.u32 %v3370, 4294901760
    %v3850 = vsub.f32 %v3370, %v3849
    %v3851 = vand.u32 %v3850, 4294901760
    %3852 = vmatpush1.msra.mxu0 %v3851
    %3853 = vmatprep.subr.mxu0 0.0
    %v3854 = vand.u32 %v3369, 4294901760
    %v3855 = vsub.f32 %v3369, %v3854
    %v3856 = vand.u32 %v3855, 4294901760
    %3857 = vmatpush1.msra.mxu0 %v3856
    %3858 = vmatprep.subr.mxu0 0.0
    %v3859 = vand.u32 %v3368, 4294901760
    %v3860 = vsub.f32 %v3368, %v3859
    %v3861 = vand.u32 %v3860, 4294901760
    %3862 = vmatpush1.msra.mxu0 %v3861
    %3863 = vmatprep.subr.mxu0 0.0
    %v3864 = vand.u32 %v3367, 4294901760
    %v3865 = vsub.f32 %v3367, %v3864
    %v3866 = vand.u32 %v3865, 4294901760
    %3867 = vmatpush1.msra.mxu0 %v3866
    %3868 = vmatprep.subr.mxu0 0.0
    %v3869 = vand.u32 %v3366, 4294901760
    %v3870 = vsub.f32 %v3366, %v3869
    %v3871 = vand.u32 %v3870, 4294901760
    %3872 = vmatpush1.msra.mxu0 %v3871
    %3873 = vmatprep.subr.mxu0 0.0
    %v3874 = vand.u32 %v3365, 4294901760
    %v3875 = vsub.f32 %v3365, %v3874
    %v3876 = vand.u32 %v3875, 4294901760
    %3877 = vmatpush1.msra.mxu0 %v3876
    %3878 = vmatprep.subr.mxu0 0.0
    %v3879 = vand.u32 %v3364, 4294901760
    %v3880 = vsub.f32 %v3364, %v3879
    %v3881 = vand.u32 %v3880, 4294901760
    %3882 = vmatpush1.msra.mxu0 %v3881
    %3883 = vmatprep.subr.mxu0 0.0
    %v3884 = vand.u32 %v3363, 4294901760
    %v3885 = vsub.f32 %v3363, %v3884
    %v3886 = vand.u32 %v3885, 4294901760
    %3887 = vmatpush1.msra.mxu0 %v3886
    %3888 = vmatprep.subr.mxu0 0.0
    %v3889 = vand.u32 %v3362, 4294901760
    %v3890 = vsub.f32 %v3362, %v3889
    %v3891 = vand.u32 %v3890, 4294901760
    %3892 = vmatpush1.msra.mxu0 %v3891
    %3893 = vmatprep.subr.mxu0 0.0
    %3894 = vmatpush2.msra.mxu0 0.0
    %3895 = vmatprep.subr.mxu0 0.0
    %3896 = vmatpush2.msra.mxu0 0.0
    %3897 = vmatprep.subr.mxu0 0.0
    %3898 = vmatpush2.msra.mxu0 0.0
    %3899 = vmatprep.subr.mxu0 0.0
    %3900 = vmatpush2.msra.mxu0 0.0
    %3901 = vmatprep.subr.mxu0 0.0
    %3902 = vmatpush2.msra.mxu0 0.0
    %3903 = vmatprep.subr.mxu0 0.0
    %3904 = vmatpush2.msra.mxu0 0.0
    %3905 = vmatprep.subr.mxu0 0.0
    %3906 = vmatpush2.msra.mxu0 0.0
    %3907 = vmatprep.subr.mxu0 0.0
    %3908 = vmatpush2.msra.mxu0 0.0
    %3909 = vmatprep.subr.mxu0 0.0
    %3910 = vmatpush2.msra.mxu0 0.0
    %3911 = vmatprep.subr.mxu0 0.0
    %3912 = vmatpush2.msra.mxu0 0.0
    %3913 = vmatprep.subr.mxu0 0.0
    %3914 = vmatpush2.msra.mxu0 0.0
    %3915 = vmatprep.subr.mxu0 0.0
    %3916 = vmatpush2.msra.mxu0 0.0
    %3917 = vmatprep.subr.mxu0 0.0
    %3918 = vmatpush2.msra.mxu0 0.0
    %3919 = vmatprep.subr.mxu0 0.0
    %3920 = vmatpush2.msra.mxu0 0.0
    %3921 = vmatprep.subr.mxu0 0.0
    %3922 = vmatpush2.msra.mxu0 0.0
    %3923 = vmatprep.subr.mxu0 0.0
    %3924 = vmatpush2.msra.mxu0 0.0
    %3925 = vmatprep.mubr.f32.mxu0 0.0
    %v3926 = vand.u32 %v46, 4294901760
    %3927 = vmatmul.mubr.f32.gmra.mxu0 %v3926
    %v3928 = vpop.f32.mrf.mxu0
    %v3929 = vadd.f32 %v3810, %v3928
    %v3930 = vpop.f32.mrf.mxu0
    %3931 = vdwg.mxu0
    %3932 = vmatprep.subr.mxu0 0.0
    %v3933 = vand.u32 %v3377, 4294901760
    %3934 = vmatpush1.msra.mxu0 %v3933
    %3935 = vmatprep.subr.mxu0 0.0
    %v3936 = vand.u32 %v3376, 4294901760
    %3937 = vmatpush1.msra.mxu0 %v3936
    %3938 = vmatprep.subr.mxu0 0.0
    %v3939 = vand.u32 %v3375, 4294901760
    %3940 = vmatpush1.msra.mxu0 %v3939
    %3941 = vmatprep.subr.mxu0 0.0
    %v3942 = vand.u32 %v3374, 4294901760
    %3943 = vmatpush1.msra.mxu0 %v3942
    %3944 = vmatprep.subr.mxu0 0.0
    %v3945 = vand.u32 %v3373, 4294901760
    %3946 = vmatpush1.msra.mxu0 %v3945
    %3947 = vmatprep.subr.mxu0 0.0
    %v3948 = vand.u32 %v3372, 4294901760
    %3949 = vmatpush1.msra.mxu0 %v3948
    %3950 = vmatprep.subr.mxu0 0.0
    %v3951 = vand.u32 %v3371, 4294901760
    %3952 = vmatpush1.msra.mxu0 %v3951
    %3953 = vmatprep.subr.mxu0 0.0
    %v3954 = vand.u32 %v3370, 4294901760
    %3955 = vmatpush1.msra.mxu0 %v3954
    %3956 = vmatprep.subr.mxu0 0.0
    %v3957 = vand.u32 %v3369, 4294901760
    %3958 = vmatpush1.msra.mxu0 %v3957
    %3959 = vmatprep.subr.mxu0 0.0
    %v3960 = vand.u32 %v3368, 4294901760
    %3961 = vmatpush1.msra.mxu0 %v3960
    %3962 = vmatprep.subr.mxu0 0.0
    %v3963 = vand.u32 %v3367, 4294901760
    %3964 = vmatpush1.msra.mxu0 %v3963
    %3965 = vmatprep.subr.mxu0 0.0
    %v3966 = vand.u32 %v3366, 4294901760
    %3967 = vmatpush1.msra.mxu0 %v3966
    %3968 = vmatprep.subr.mxu0 0.0
    %v3969 = vand.u32 %v3365, 4294901760
    %3970 = vmatpush1.msra.mxu0 %v3969
    %3971 = vmatprep.subr.mxu0 0.0
    %v3972 = vand.u32 %v3364, 4294901760
    %3973 = vmatpush1.msra.mxu0 %v3972
    %3974 = vmatprep.subr.mxu0 0.0
    %v3975 = vand.u32 %v3363, 4294901760
    %3976 = vmatpush1.msra.mxu0 %v3975
    %3977 = vmatprep.subr.mxu0 0.0
    %v3978 = vand.u32 %v3362, 4294901760
    %3979 = vmatpush1.msra.mxu0 %v3978
    %3980 = vmatprep.subr.mxu0 0.0
    %3981 = vmatpush2.msra.mxu0 0.0
    %3982 = vmatprep.subr.mxu0 0.0
    %3983 = vmatpush2.msra.mxu0 0.0
    %3984 = vmatprep.subr.mxu0 0.0
    %3985 = vmatpush2.msra.mxu0 0.0
    %3986 = vmatprep.subr.mxu0 0.0
    %3987 = vmatpush2.msra.mxu0 0.0
    %3988 = vmatprep.subr.mxu0 0.0
    %3989 = vmatpush2.msra.mxu0 0.0
    %3990 = vmatprep.subr.mxu0 0.0
    %3991 = vmatpush2.msra.mxu0 0.0
    %3992 = vmatprep.subr.mxu0 0.0
    %3993 = vmatpush2.msra.mxu0 0.0
    %3994 = vmatprep.subr.mxu0 0.0
    %3995 = vmatpush2.msra.mxu0 0.0
    %3996 = vmatprep.subr.mxu0 0.0
    %3997 = vmatpush2.msra.mxu0 0.0
    %3998 = vmatprep.subr.mxu0 0.0
    %3999 = vmatpush2.msra.mxu0 0.0
    %4000 = vmatprep.subr.mxu0 0.0
    %4001 = vmatpush2.msra.mxu0 0.0
    %4002 = vmatprep.subr.mxu0 0.0
    %4003 = vmatpush2.msra.mxu0 0.0
    %4004 = vmatprep.subr.mxu0 0.0
    %4005 = vmatpush2.msra.mxu0 0.0
    %4006 = vmatprep.subr.mxu0 0.0
    %4007 = vmatpush2.msra.mxu0 0.0
    %4008 = vmatprep.subr.mxu0 0.0
    %4009 = vmatpush2.msra.mxu0 0.0
    %4010 = vmatprep.subr.mxu0 0.0
    %4011 = vmatpush2.msra.mxu0 0.0
    %4012 = vmatprep.mubr.f32.mxu0 0.0
    %v4013 = vand.u32 %v46, 4294901760
    %4014 = vmatmul.mubr.f32.gmra.mxu0 %v4013
    %v4015 = vpop.f32.mrf.mxu0
    %v4016 = vadd.f32 %v3929, %v4015
    %v4017 = vpop.f32.mrf.mxu0
    %4018 = vdwg.mxu0
    %v4019 = vmul.f32 %v4016, %v46
    %4020 = vadd.xlane.f32.xlu0 %v4019
    %v4021 = vpop.xlane.xlu0 %4020
    %v4022 = vmul.f32 %v4021, 0.5
    %v4023 = vadd.f32 %v4022, 90.71445
    %s4024 = scalar_lea.vmem [#allocation5], 768
    %v4025 = vld [vmem:[%s4024] sm:$0xff]
    %v4026 = vld [vmem:[%s4024 + $0x8] sm:$0xff]
    %v4027 = vld [vmem:[%s4024 + $0x10] sm:$0xff]
    %v4028 = vld [vmem:[%s4024 + $0x18] sm:$0xff]
    %v4029 = vld [vmem:[%s4024 + $0x20] sm:$0xff]
    %v4030 = vld [vmem:[%s4024 + $0x28] sm:$0xff]
    %v4031 = vld [vmem:[%s4024 + $0x30] sm:$0xff]
    %v4032 = vld [vmem:[%s4024 + $0x38] sm:$0xff]
    %v4033 = vld [vmem:[%s4024 + $0x40] sm:$0xff]
    %v4034 = vld [vmem:[%s4024 + $0x48] sm:$0xff]
    %v4035 = vld [vmem:[%s4024 + $0x50] sm:$0xff]
    %v4036 = vld [vmem:[%s4024 + $0x58] sm:$0xff]
    %v4037 = vld [vmem:[%s4024 + $0x60] sm:$0xff]
    %v4038 = vld [vmem:[%s4024 + $0x68] sm:$0xff]
    %v4039 = vld [vmem:[%s4024 + $0x70] sm:$0xff]
    %v4040 = vld [vmem:[%s4024 + $0x78] sm:$0xff]
    %4041 = vmatprep.subr.mxu0 0.0
    %v4042 = vand.u32 %v4040, 4294901760
    %4043 = vmatpush1.msra.mxu0 %v4042
    %4044 = vmatprep.subr.mxu0 0.0
    %v4045 = vand.u32 %v4039, 4294901760
    %4046 = vmatpush1.msra.mxu0 %v4045
    %4047 = vmatprep.subr.mxu0 0.0
    %v4048 = vand.u32 %v4038, 4294901760
    %4049 = vmatpush1.msra.mxu0 %v4048
    %4050 = vmatprep.subr.mxu0 0.0
    %v4051 = vand.u32 %v4037, 4294901760
    %4052 = vmatpush1.msra.mxu0 %v4051
    %4053 = vmatprep.subr.mxu0 0.0
    %v4054 = vand.u32 %v4036, 4294901760
    %4055 = vmatpush1.msra.mxu0 %v4054
    %4056 = vmatprep.subr.mxu0 0.0
    %v4057 = vand.u32 %v4035, 4294901760
    %4058 = vmatpush1.msra.mxu0 %v4057
    %4059 = vmatprep.subr.mxu0 0.0
    %v4060 = vand.u32 %v4034, 4294901760
    %4061 = vmatpush1.msra.mxu0 %v4060
    %4062 = vmatprep.subr.mxu0 0.0
    %v4063 = vand.u32 %v4033, 4294901760
    %4064 = vmatpush1.msra.mxu0 %v4063
    %4065 = vmatprep.subr.mxu0 0.0
    %v4066 = vand.u32 %v4032, 4294901760
    %4067 = vmatpush1.msra.mxu0 %v4066
    %4068 = vmatprep.subr.mxu0 0.0
    %v4069 = vand.u32 %v4031, 4294901760
    %4070 = vmatpush1.msra.mxu0 %v4069
    %4071 = vmatprep.subr.mxu0 0.0
    %v4072 = vand.u32 %v4030, 4294901760
    %4073 = vmatpush1.msra.mxu0 %v4072
    %4074 = vmatprep.subr.mxu0 0.0
    %v4075 = vand.u32 %v4029, 4294901760
    %4076 = vmatpush1.msra.mxu0 %v4075
    %4077 = vmatprep.subr.mxu0 0.0
    %v4078 = vand.u32 %v4028, 4294901760
    %4079 = vmatpush1.msra.mxu0 %v4078
    %4080 = vmatprep.subr.mxu0 0.0
    %v4081 = vand.u32 %v4027, 4294901760
    %4082 = vmatpush1.msra.mxu0 %v4081
    %4083 = vmatprep.subr.mxu0 0.0
    %v4084 = vand.u32 %v4026, 4294901760
    %4085 = vmatpush1.msra.mxu0 %v4084
    %4086 = vmatprep.subr.mxu0 0.0
    %v4087 = vand.u32 %v4025, 4294901760
    %4088 = vmatpush1.msra.mxu0 %v4087
    %4089 = vmatprep.subr.mxu0 0.0
    %4090 = vmatpush2.msra.mxu0 0.0
    %4091 = vmatprep.subr.mxu0 0.0
    %4092 = vmatpush2.msra.mxu0 0.0
    %4093 = vmatprep.subr.mxu0 0.0
    %4094 = vmatpush2.msra.mxu0 0.0
    %4095 = vmatprep.subr.mxu0 0.0
    %4096 = vmatpush2.msra.mxu0 0.0
    %4097 = vmatprep.subr.mxu0 0.0
    %4098 = vmatpush2.msra.mxu0 0.0
    %4099 = vmatprep.subr.mxu0 0.0
    %4100 = vmatpush2.msra.mxu0 0.0
    %4101 = vmatprep.subr.mxu0 0.0
    %4102 = vmatpush2.msra.mxu0 0.0
    %4103 = vmatprep.subr.mxu0 0.0
    %4104 = vmatpush2.msra.mxu0 0.0
    %4105 = vmatprep.subr.mxu0 0.0
    %4106 = vmatpush2.msra.mxu0 0.0
    %4107 = vmatprep.subr.mxu0 0.0
    %4108 = vmatpush2.msra.mxu0 0.0
    %4109 = vmatprep.subr.mxu0 0.0
    %4110 = vmatpush2.msra.mxu0 0.0
    %4111 = vmatprep.subr.mxu0 0.0
    %4112 = vmatpush2.msra.mxu0 0.0
    %4113 = vmatprep.subr.mxu0 0.0
    %4114 = vmatpush2.msra.mxu0 0.0
    %4115 = vmatprep.subr.mxu0 0.0
    %4116 = vmatpush2.msra.mxu0 0.0
    %4117 = vmatprep.subr.mxu0 0.0
    %4118 = vmatpush2.msra.mxu0 0.0
    %4119 = vmatprep.subr.mxu0 0.0
    %4120 = vmatpush2.msra.mxu0 0.0
    %4121 = vmatprep.mubr.f32.mxu0 0.0
    %v4122 = vand.u32 %v46, 4294901760
    %v4123 = vsub.f32 %v46, %v4122
    %v4124 = vand.u32 %v4123, 4294901760
    %v4125 = vsub.f32 %v4123, %v4124
    %v4126 = vand.u32 %v4125, 4294901760
    %4127 = vmatmul.mubr.f32.gmra.mxu0 %v4126
    %v4128 = vpop.f32.mrf.mxu0
    %v4129 = vadd.f32 0.0, %v4128
    %v4130 = vpop.f32.mrf.mxu0
    %4131 = vdwg.mxu0
    %4132 = vmatprep.subr.mxu0 0.0
    %v4133 = vand.u32 %v4040, 4294901760
    %v4134 = vsub.f32 %v4040, %v4133
    %v4135 = vand.u32 %v4134, 4294901760
    %v4136 = vsub.f32 %v4134, %v4135
    %v4137 = vand.u32 %v4136, 4294901760
    %4138 = vmatpush1.msra.mxu0 %v4137
    %4139 = vmatprep.subr.mxu0 0.0
    %v4140 = vand.u32 %v4039, 4294901760
    %v4141 = vsub.f32 %v4039, %v4140
    %v4142 = vand.u32 %v4141, 4294901760
    %v4143 = vsub.f32 %v4141, %v4142
    %v4144 = vand.u32 %v4143, 4294901760
    %4145 = vmatpush1.msra.mxu0 %v4144
    %4146 = vmatprep.subr.mxu0 0.0
    %v4147 = vand.u32 %v4038, 4294901760
    %v4148 = vsub.f32 %v4038, %v4147
    %v4149 = vand.u32 %v4148, 4294901760
    %v4150 = vsub.f32 %v4148, %v4149
    %v4151 = vand.u32 %v4150, 4294901760
    %4152 = vmatpush1.msra.mxu0 %v4151
    %4153 = vmatprep.subr.mxu0 0.0
    %v4154 = vand.u32 %v4037, 4294901760
    %v4155 = vsub.f32 %v4037, %v4154
    %v4156 = vand.u32 %v4155, 4294901760
    %v4157 = vsub.f32 %v4155, %v4156
    %v4158 = vand.u32 %v4157, 4294901760
    %4159 = vmatpush1.msra.mxu0 %v4158
    %4160 = vmatprep.subr.mxu0 0.0
    %v4161 = vand.u32 %v4036, 4294901760
    %v4162 = vsub.f32 %v4036, %v4161
    %v4163 = vand.u32 %v4162, 4294901760
    %v4164 = vsub.f32 %v4162, %v4163
    %v4165 = vand.u32 %v4164, 4294901760
    %4166 = vmatpush1.msra.mxu0 %v4165
    %4167 = vmatprep.subr.mxu0 0.0
    %v4168 = vand.u32 %v4035, 4294901760
    %v4169 = vsub.f32 %v4035, %v4168
    %v4170 = vand.u32 %v4169, 4294901760
    %v4171 = vsub.f32 %v4169, %v4170
    %v4172 = vand.u32 %v4171, 4294901760
    %4173 = vmatpush1.msra.mxu0 %v4172
    %4174 = vmatprep.subr.mxu0 0.0
    %v4175 = vand.u32 %v4034, 4294901760
    %v4176 = vsub.f32 %v4034, %v4175
    %v4177 = vand.u32 %v4176, 4294901760
    %v4178 = vsub.f32 %v4176, %v4177
    %v4179 = vand.u32 %v4178, 4294901760
    %4180 = vmatpush1.msra.mxu0 %v4179
    %4181 = vmatprep.subr.mxu0 0.0
    %v4182 = vand.u32 %v4033, 4294901760
    %v4183 = vsub.f32 %v4033, %v4182
    %v4184 = vand.u32 %v4183, 4294901760
    %v4185 = vsub.f32 %v4183, %v4184
    %v4186 = vand.u32 %v4185, 4294901760
    %4187 = vmatpush1.msra.mxu0 %v4186
    %4188 = vmatprep.subr.mxu0 0.0
    %v4189 = vand.u32 %v4032, 4294901760
    %v4190 = vsub.f32 %v4032, %v4189
    %v4191 = vand.u32 %v4190, 4294901760
    %v4192 = vsub.f32 %v4190, %v4191
    %v4193 = vand.u32 %v4192, 4294901760
    %4194 = vmatpush1.msra.mxu0 %v4193
    %4195 = vmatprep.subr.mxu0 0.0
    %v4196 = vand.u32 %v4031, 4294901760
    %v4197 = vsub.f32 %v4031, %v4196
    %v4198 = vand.u32 %v4197, 4294901760
    %v4199 = vsub.f32 %v4197, %v4198
    %v4200 = vand.u32 %v4199, 4294901760
    %4201 = vmatpush1.msra.mxu0 %v4200
    %4202 = vmatprep.subr.mxu0 0.0
    %v4203 = vand.u32 %v4030, 4294901760
    %v4204 = vsub.f32 %v4030, %v4203
    %v4205 = vand.u32 %v4204, 4294901760
    %v4206 = vsub.f32 %v4204, %v4205
    %v4207 = vand.u32 %v4206, 4294901760
    %4208 = vmatpush1.msra.mxu0 %v4207
    %4209 = vmatprep.subr.mxu0 0.0
    %v4210 = vand.u32 %v4029, 4294901760
    %v4211 = vsub.f32 %v4029, %v4210
    %v4212 = vand.u32 %v4211, 4294901760
    %v4213 = vsub.f32 %v4211, %v4212
    %v4214 = vand.u32 %v4213, 4294901760
    %4215 = vmatpush1.msra.mxu0 %v4214
    %4216 = vmatprep.subr.mxu0 0.0
    %v4217 = vand.u32 %v4028, 4294901760
    %v4218 = vsub.f32 %v4028, %v4217
    %v4219 = vand.u32 %v4218, 4294901760
    %v4220 = vsub.f32 %v4218, %v4219
    %v4221 = vand.u32 %v4220, 4294901760
    %4222 = vmatpush1.msra.mxu0 %v4221
    %4223 = vmatprep.subr.mxu0 0.0
    %v4224 = vand.u32 %v4027, 4294901760
    %v4225 = vsub.f32 %v4027, %v4224
    %v4226 = vand.u32 %v4225, 4294901760
    %v4227 = vsub.f32 %v4225, %v4226
    %v4228 = vand.u32 %v4227, 4294901760
    %4229 = vmatpush1.msra.mxu0 %v4228
    %4230 = vmatprep.subr.mxu0 0.0
    %v4231 = vand.u32 %v4026, 4294901760
    %v4232 = vsub.f32 %v4026, %v4231
    %v4233 = vand.u32 %v4232, 4294901760
    %v4234 = vsub.f32 %v4232, %v4233
    %v4235 = vand.u32 %v4234, 4294901760
    %4236 = vmatpush1.msra.mxu0 %v4235
    %4237 = vmatprep.subr.mxu0 0.0
    %v4238 = vand.u32 %v4025, 4294901760
    %v4239 = vsub.f32 %v4025, %v4238
    %v4240 = vand.u32 %v4239, 4294901760
    %v4241 = vsub.f32 %v4239, %v4240
    %v4242 = vand.u32 %v4241, 4294901760
    %4243 = vmatpush1.msra.mxu0 %v4242
    %4244 = vmatprep.subr.mxu0 0.0
    %4245 = vmatpush2.msra.mxu0 0.0
    %4246 = vmatprep.subr.mxu0 0.0
    %4247 = vmatpush2.msra.mxu0 0.0
    %4248 = vmatprep.subr.mxu0 0.0
    %4249 = vmatpush2.msra.mxu0 0.0
    %4250 = vmatprep.subr.mxu0 0.0
    %4251 = vmatpush2.msra.mxu0 0.0
    %4252 = vmatprep.subr.mxu0 0.0
    %4253 = vmatpush2.msra.mxu0 0.0
    %4254 = vmatprep.subr.mxu0 0.0
    %4255 = vmatpush2.msra.mxu0 0.0
    %4256 = vmatprep.subr.mxu0 0.0
    %4257 = vmatpush2.msra.mxu0 0.0
    %4258 = vmatprep.subr.mxu0 0.0
    %4259 = vmatpush2.msra.mxu0 0.0
    %4260 = vmatprep.subr.mxu0 0.0
    %4261 = vmatpush2.msra.mxu0 0.0
    %4262 = vmatprep.subr.mxu0 0.0
    %4263 = vmatpush2.msra.mxu0 0.0
    %4264 = vmatprep.subr.mxu0 0.0
    %4265 = vmatpush2.msra.mxu0 0.0
    %4266 = vmatprep.subr.mxu0 0.0
    %4267 = vmatpush2.msra.mxu0 0.0
    %4268 = vmatprep.subr.mxu0 0.0
    %4269 = vmatpush2.msra.mxu0 0.0
    %4270 = vmatprep.subr.mxu0 0.0
    %4271 = vmatpush2.msra.mxu0 0.0
    %4272 = vmatprep.subr.mxu0 0.0
    %4273 = vmatpush2.msra.mxu0 0.0
    %4274 = vmatprep.subr.mxu0 0.0
    %4275 = vmatpush2.msra.mxu0 0.0
    %4276 = vmatprep.mubr.f32.mxu0 0.0
    %v4277 = vand.u32 %v46, 4294901760
    %4278 = vmatmul.mubr.f32.gmra.mxu0 %v4277
    %v4279 = vpop.f32.mrf.mxu0
    %v4280 = vadd.f32 %v4129, %v4279
    %v4281 = vpop.f32.mrf.mxu0
    %4282 = vdwg.mxu0
    %4283 = vmatprep.subr.mxu0 0.0
    %v4284 = vand.u32 %v4040, 4294901760
    %v4285 = vsub.f32 %v4040, %v4284
    %4286 = vmatpush1.msra.mxu0 %v4285
    %4287 = vmatprep.subr.mxu0 0.0
    %v4288 = vand.u32 %v4039, 4294901760
    %v4289 = vsub.f32 %v4039, %v4288
    %4290 = vmatpush1.msra.mxu0 %v4289
    %4291 = vmatprep.subr.mxu0 0.0
    %v4292 = vand.u32 %v4038, 4294901760
    %v4293 = vsub.f32 %v4038, %v4292
    %4294 = vmatpush1.msra.mxu0 %v4293
    %4295 = vmatprep.subr.mxu0 0.0
    %v4296 = vand.u32 %v4037, 4294901760
    %v4297 = vsub.f32 %v4037, %v4296
    %4298 = vmatpush1.msra.mxu0 %v4297
    %4299 = vmatprep.subr.mxu0 0.0
    %v4300 = vand.u32 %v4036, 4294901760
    %v4301 = vsub.f32 %v4036, %v4300
    %4302 = vmatpush1.msra.mxu0 %v4301
    %4303 = vmatprep.subr.mxu0 0.0
    %v4304 = vand.u32 %v4035, 4294901760
    %v4305 = vsub.f32 %v4035, %v4304
    %4306 = vmatpush1.msra.mxu0 %v4305
    %4307 = vmatprep.subr.mxu0 0.0
    %v4308 = vand.u32 %v4034, 4294901760
    %v4309 = vsub.f32 %v4034, %v4308
    %4310 = vmatpush1.msra.mxu0 %v4309
    %4311 = vmatprep.subr.mxu0 0.0
    %v4312 = vand.u32 %v4033, 4294901760
    %v4313 = vsub.f32 %v4033, %v4312
    %4314 = vmatpush1.msra.mxu0 %v4313
    %4315 = vmatprep.subr.mxu0 0.0
    %v4316 = vand.u32 %v4032, 4294901760
    %v4317 = vsub.f32 %v4032, %v4316
    %4318 = vmatpush1.msra.mxu0 %v4317
    %4319 = vmatprep.subr.mxu0 0.0
    %v4320 = vand.u32 %v4031, 4294901760
    %v4321 = vsub.f32 %v4031, %v4320
    %4322 = vmatpush1.msra.mxu0 %v4321
    %4323 = vmatprep.subr.mxu0 0.0
    %v4324 = vand.u32 %v4030, 4294901760
    %v4325 = vsub.f32 %v4030, %v4324
    %4326 = vmatpush1.msra.mxu0 %v4325
    %4327 = vmatprep.subr.mxu0 0.0
    %v4328 = vand.u32 %v4029, 4294901760
    %v4329 = vsub.f32 %v4029, %v4328
    %4330 = vmatpush1.msra.mxu0 %v4329
    %4331 = vmatprep.subr.mxu0 0.0
    %v4332 = vand.u32 %v4028, 4294901760
    %v4333 = vsub.f32 %v4028, %v4332
    %4334 = vmatpush1.msra.mxu0 %v4333
    %4335 = vmatprep.subr.mxu0 0.0
    %v4336 = vand.u32 %v4027, 4294901760
    %v4337 = vsub.f32 %v4027, %v4336
    %4338 = vmatpush1.msra.mxu0 %v4337
    %4339 = vmatprep.subr.mxu0 0.0
    %v4340 = vand.u32 %v4026, 4294901760
    %v4341 = vsub.f32 %v4026, %v4340
    %4342 = vmatpush1.msra.mxu0 %v4341
    %4343 = vmatprep.subr.mxu0 0.0
    %v4344 = vand.u32 %v4025, 4294901760
    %v4345 = vsub.f32 %v4025, %v4344
    %4346 = vmatpush1.msra.mxu0 %v4345
    %4347 = vmatprep.subr.mxu0 0.0
    %4348 = vmatpush2.msra.mxu0 0.0
    %4349 = vmatprep.subr.mxu0 0.0
    %4350 = vmatpush2.msra.mxu0 0.0
    %4351 = vmatprep.subr.mxu0 0.0
    %4352 = vmatpush2.msra.mxu0 0.0
    %4353 = vmatprep.subr.mxu0 0.0
    %4354 = vmatpush2.msra.mxu0 0.0
    %4355 = vmatprep.subr.mxu0 0.0
    %4356 = vmatpush2.msra.mxu0 0.0
    %4357 = vmatprep.subr.mxu0 0.0
    %4358 = vmatpush2.msra.mxu0 0.0
    %4359 = vmatprep.subr.mxu0 0.0
    %4360 = vmatpush2.msra.mxu0 0.0
    %4361 = vmatprep.subr.mxu0 0.0
    %4362 = vmatpush2.msra.mxu0 0.0
    %4363 = vmatprep.subr.mxu0 0.0
    %4364 = vmatpush2.msra.mxu0 0.0
    %4365 = vmatprep.subr.mxu0 0.0
    %4366 = vmatpush2.msra.mxu0 0.0
    %4367 = vmatprep.subr.mxu0 0.0
    %4368 = vmatpush2.msra.mxu0 0.0
    %4369 = vmatprep.subr.mxu0 0.0
    %4370 = vmatpush2.msra.mxu0 0.0
    %4371 = vmatprep.subr.mxu0 0.0
    %4372 = vmatpush2.msra.mxu0 0.0
    %4373 = vmatprep.subr.mxu0 0.0
    %4374 = vmatpush2.msra.mxu0 0.0
    %4375 = vmatprep.subr.mxu0 0.0
    %4376 = vmatpush2.msra.mxu0 0.0
    %4377 = vmatprep.subr.mxu0 0.0
    %4378 = vmatpush2.msra.mxu0 0.0
    %4379 = vmatprep.mubr.f32.mxu0 0.0
    %v4380 = vand.u32 %v46, 4294901760
    %v4381 = vsub.f32 %v46, %v4380
    %4382 = vmatmul.mubr.f32.gmra.mxu0 %v4381
    %v4383 = vpop.f32.mrf.mxu0
    %v4384 = vadd.f32 %v4280, %v4383
    %v4385 = vpop.f32.mrf.mxu0
    %4386 = vdwg.mxu0
    %4387 = vmatprep.subr.mxu0 0.0
    %v4388 = vand.u32 %v4040, 4294901760
    %4389 = vmatpush1.msra.mxu0 %v4388
    %4390 = vmatprep.subr.mxu0 0.0
    %v4391 = vand.u32 %v4039, 4294901760
    %4392 = vmatpush1.msra.mxu0 %v4391
    %4393 = vmatprep.subr.mxu0 0.0
    %v4394 = vand.u32 %v4038, 4294901760
    %4395 = vmatpush1.msra.mxu0 %v4394
    %4396 = vmatprep.subr.mxu0 0.0
    %v4397 = vand.u32 %v4037, 4294901760
    %4398 = vmatpush1.msra.mxu0 %v4397
    %4399 = vmatprep.subr.mxu0 0.0
    %v4400 = vand.u32 %v4036, 4294901760
    %4401 = vmatpush1.msra.mxu0 %v4400
    %4402 = vmatprep.subr.mxu0 0.0
    %v4403 = vand.u32 %v4035, 4294901760
    %4404 = vmatpush1.msra.mxu0 %v4403
    %4405 = vmatprep.subr.mxu0 0.0
    %v4406 = vand.u32 %v4034, 4294901760
    %4407 = vmatpush1.msra.mxu0 %v4406
    %4408 = vmatprep.subr.mxu0 0.0
    %v4409 = vand.u32 %v4033, 4294901760
    %4410 = vmatpush1.msra.mxu0 %v4409
    %4411 = vmatprep.subr.mxu0 0.0
    %v4412 = vand.u32 %v4032, 4294901760
    %4413 = vmatpush1.msra.mxu0 %v4412
    %4414 = vmatprep.subr.mxu0 0.0
    %v4415 = vand.u32 %v4031, 4294901760
    %4416 = vmatpush1.msra.mxu0 %v4415
    %4417 = vmatprep.subr.mxu0 0.0
    %v4418 = vand.u32 %v4030, 4294901760
    %4419 = vmatpush1.msra.mxu0 %v4418
    %4420 = vmatprep.subr.mxu0 0.0
    %v4421 = vand.u32 %v4029, 4294901760
    %4422 = vmatpush1.msra.mxu0 %v4421
    %4423 = vmatprep.subr.mxu0 0.0
    %v4424 = vand.u32 %v4028, 4294901760
    %4425 = vmatpush1.msra.mxu0 %v4424
    %4426 = vmatprep.subr.mxu0 0.0
    %v4427 = vand.u32 %v4027, 4294901760
    %4428 = vmatpush1.msra.mxu0 %v4427
    %4429 = vmatprep.subr.mxu0 0.0
    %v4430 = vand.u32 %v4026, 4294901760
    %4431 = vmatpush1.msra.mxu0 %v4430
    %4432 = vmatprep.subr.mxu0 0.0
    %v4433 = vand.u32 %v4025, 4294901760
    %4434 = vmatpush1.msra.mxu0 %v4433
    %4435 = vmatprep.subr.mxu0 0.0
    %4436 = vmatpush2.msra.mxu0 0.0
    %4437 = vmatprep.subr.mxu0 0.0
    %4438 = vmatpush2.msra.mxu0 0.0
    %4439 = vmatprep.subr.mxu0 0.0
    %4440 = vmatpush2.msra.mxu0 0.0
    %4441 = vmatprep.subr.mxu0 0.0
    %4442 = vmatpush2.msra.mxu0 0.0
    %4443 = vmatprep.subr.mxu0 0.0
    %4444 = vmatpush2.msra.mxu0 0.0
    %4445 = vmatprep.subr.mxu0 0.0
    %4446 = vmatpush2.msra.mxu0 0.0
    %4447 = vmatprep.subr.mxu0 0.0
    %4448 = vmatpush2.msra.mxu0 0.0
    %4449 = vmatprep.subr.mxu0 0.0
    %4450 = vmatpush2.msra.mxu0 0.0
    %4451 = vmatprep.subr.mxu0 0.0
    %4452 = vmatpush2.msra.mxu0 0.0
    %4453 = vmatprep.subr.mxu0 0.0
    %4454 = vmatpush2.msra.mxu0 0.0
    %4455 = vmatprep.subr.mxu0 0.0
    %4456 = vmatpush2.msra.mxu0 0.0
    %4457 = vmatprep.subr.mxu0 0.0
    %4458 = vmatpush2.msra.mxu0 0.0
    %4459 = vmatprep.subr.mxu0 0.0
    %4460 = vmatpush2.msra.mxu0 0.0
    %4461 = vmatprep.subr.mxu0 0.0
    %4462 = vmatpush2.msra.mxu0 0.0
    %4463 = vmatprep.subr.mxu0 0.0
    %4464 = vmatpush2.msra.mxu0 0.0
    %4465 = vmatprep.subr.mxu0 0.0
    %4466 = vmatpush2.msra.mxu0 0.0
    %4467 = vmatprep.mubr.f32.mxu0 0.0
    %v4468 = vand.u32 %v46, 4294901760
    %v4469 = vsub.f32 %v46, %v4468
    %v4470 = vand.u32 %v4469, 4294901760
    %4471 = vmatmul.mubr.f32.gmra.mxu0 %v4470
    %v4472 = vpop.f32.mrf.mxu0
    %v4473 = vadd.f32 %v4384, %v4472
    %v4474 = vpop.f32.mrf.mxu0
    %4475 = vdwg.mxu0
    %4476 = vmatprep.subr.mxu0 0.0
    %v4477 = vand.u32 %v4040, 4294901760
    %v4478 = vsub.f32 %v4040, %v4477
    %v4479 = vand.u32 %v4478, 4294901760
    %4480 = vmatpush1.msra.mxu0 %v4479
    %4481 = vmatprep.subr.mxu0 0.0
    %v4482 = vand.u32 %v4039, 4294901760
    %v4483 = vsub.f32 %v4039, %v4482
    %v4484 = vand.u32 %v4483, 4294901760
    %4485 = vmatpush1.msra.mxu0 %v4484
    %4486 = vmatprep.subr.mxu0 0.0
    %v4487 = vand.u32 %v4038, 4294901760
    %v4488 = vsub.f32 %v4038, %v4487
    %v4489 = vand.u32 %v4488, 4294901760
    %4490 = vmatpush1.msra.mxu0 %v4489
    %4491 = vmatprep.subr.mxu0 0.0
    %v4492 = vand.u32 %v4037, 4294901760
    %v4493 = vsub.f32 %v4037, %v4492
    %v4494 = vand.u32 %v4493, 4294901760
    %4495 = vmatpush1.msra.mxu0 %v4494
    %4496 = vmatprep.subr.mxu0 0.0
    %v4497 = vand.u32 %v4036, 4294901760
    %v4498 = vsub.f32 %v4036, %v4497
    %v4499 = vand.u32 %v4498, 4294901760
    %4500 = vmatpush1.msra.mxu0 %v4499
    %4501 = vmatprep.subr.mxu0 0.0
    %v4502 = vand.u32 %v4035, 4294901760
    %v4503 = vsub.f32 %v4035, %v4502
    %v4504 = vand.u32 %v4503, 4294901760
    %4505 = vmatpush1.msra.mxu0 %v4504
    %4506 = vmatprep.subr.mxu0 0.0
    %v4507 = vand.u32 %v4034, 4294901760
    %v4508 = vsub.f32 %v4034, %v4507
    %v4509 = vand.u32 %v4508, 4294901760
    %4510 = vmatpush1.msra.mxu0 %v4509
    %4511 = vmatprep.subr.mxu0 0.0
    %v4512 = vand.u32 %v4033, 4294901760
    %v4513 = vsub.f32 %v4033, %v4512
    %v4514 = vand.u32 %v4513, 4294901760
    %4515 = vmatpush1.msra.mxu0 %v4514
    %4516 = vmatprep.subr.mxu0 0.0
    %v4517 = vand.u32 %v4032, 4294901760
    %v4518 = vsub.f32 %v4032, %v4517
    %v4519 = vand.u32 %v4518, 4294901760
    %4520 = vmatpush1.msra.mxu0 %v4519
    %4521 = vmatprep.subr.mxu0 0.0
    %v4522 = vand.u32 %v4031, 4294901760
    %v4523 = vsub.f32 %v4031, %v4522
    %v4524 = vand.u32 %v4523, 4294901760
    %4525 = vmatpush1.msra.mxu0 %v4524
    %4526 = vmatprep.subr.mxu0 0.0
    %v4527 = vand.u32 %v4030, 4294901760
    %v4528 = vsub.f32 %v4030, %v4527
    %v4529 = vand.u32 %v4528, 4294901760
    %4530 = vmatpush1.msra.mxu0 %v4529
    %4531 = vmatprep.subr.mxu0 0.0
    %v4532 = vand.u32 %v4029, 4294901760
    %v4533 = vsub.f32 %v4029, %v4532
    %v4534 = vand.u32 %v4533, 4294901760
    %4535 = vmatpush1.msra.mxu0 %v4534
    %4536 = vmatprep.subr.mxu0 0.0
    %v4537 = vand.u32 %v4028, 4294901760
    %v4538 = vsub.f32 %v4028, %v4537
    %v4539 = vand.u32 %v4538, 4294901760
    %4540 = vmatpush1.msra.mxu0 %v4539
    %4541 = vmatprep.subr.mxu0 0.0
    %v4542 = vand.u32 %v4027, 4294901760
    %v4543 = vsub.f32 %v4027, %v4542
    %v4544 = vand.u32 %v4543, 4294901760
    %4545 = vmatpush1.msra.mxu0 %v4544
    %4546 = vmatprep.subr.mxu0 0.0
    %v4547 = vand.u32 %v4026, 4294901760
    %v4548 = vsub.f32 %v4026, %v4547
    %v4549 = vand.u32 %v4548, 4294901760
    %4550 = vmatpush1.msra.mxu0 %v4549
    %4551 = vmatprep.subr.mxu0 0.0
    %v4552 = vand.u32 %v4025, 4294901760
    %v4553 = vsub.f32 %v4025, %v4552
    %v4554 = vand.u32 %v4553, 4294901760
    %4555 = vmatpush1.msra.mxu0 %v4554
    %4556 = vmatprep.subr.mxu0 0.0
    %4557 = vmatpush2.msra.mxu0 0.0
    %4558 = vmatprep.subr.mxu0 0.0
    %4559 = vmatpush2.msra.mxu0 0.0
    %4560 = vmatprep.subr.mxu0 0.0
    %4561 = vmatpush2.msra.mxu0 0.0
    %4562 = vmatprep.subr.mxu0 0.0
    %4563 = vmatpush2.msra.mxu0 0.0
    %4564 = vmatprep.subr.mxu0 0.0
    %4565 = vmatpush2.msra.mxu0 0.0
    %4566 = vmatprep.subr.mxu0 0.0
    %4567 = vmatpush2.msra.mxu0 0.0
    %4568 = vmatprep.subr.mxu0 0.0
    %4569 = vmatpush2.msra.mxu0 0.0
    %4570 = vmatprep.subr.mxu0 0.0
    %4571 = vmatpush2.msra.mxu0 0.0
    %4572 = vmatprep.subr.mxu0 0.0
    %4573 = vmatpush2.msra.mxu0 0.0
    %4574 = vmatprep.subr.mxu0 0.0
    %4575 = vmatpush2.msra.mxu0 0.0
    %4576 = vmatprep.subr.mxu0 0.0
    %4577 = vmatpush2.msra.mxu0 0.0
    %4578 = vmatprep.subr.mxu0 0.0
    %4579 = vmatpush2.msra.mxu0 0.0
    %4580 = vmatprep.subr.mxu0 0.0
    %4581 = vmatpush2.msra.mxu0 0.0
    %4582 = vmatprep.subr.mxu0 0.0
    %4583 = vmatpush2.msra.mxu0 0.0
    %4584 = vmatprep.subr.mxu0 0.0
    %4585 = vmatpush2.msra.mxu0 0.0
    %4586 = vmatprep.subr.mxu0 0.0
    %4587 = vmatpush2.msra.mxu0 0.0
    %4588 = vmatprep.mubr.f32.mxu0 0.0
    %v4589 = vand.u32 %v46, 4294901760
    %4590 = vmatmul.mubr.f32.gmra.mxu0 %v4589
    %v4591 = vpop.f32.mrf.mxu0
    %v4592 = vadd.f32 %v4473, %v4591
    %v4593 = vpop.f32.mrf.mxu0
    %4594 = vdwg.mxu0
    %4595 = vmatprep.subr.mxu0 0.0
    %v4596 = vand.u32 %v4040, 4294901760
    %4597 = vmatpush1.msra.mxu0 %v4596
    %4598 = vmatprep.subr.mxu0 0.0
    %v4599 = vand.u32 %v4039, 4294901760
    %4600 = vmatpush1.msra.mxu0 %v4599
    %4601 = vmatprep.subr.mxu0 0.0
    %v4602 = vand.u32 %v4038, 4294901760
    %4603 = vmatpush1.msra.mxu0 %v4602
    %4604 = vmatprep.subr.mxu0 0.0
    %v4605 = vand.u32 %v4037, 4294901760
    %4606 = vmatpush1.msra.mxu0 %v4605
    %4607 = vmatprep.subr.mxu0 0.0
    %v4608 = vand.u32 %v4036, 4294901760
    %4609 = vmatpush1.msra.mxu0 %v4608
    %4610 = vmatprep.subr.mxu0 0.0
    %v4611 = vand.u32 %v4035, 4294901760
    %4612 = vmatpush1.msra.mxu0 %v4611
    %4613 = vmatprep.subr.mxu0 0.0
    %v4614 = vand.u32 %v4034, 4294901760
    %4615 = vmatpush1.msra.mxu0 %v4614
    %4616 = vmatprep.subr.mxu0 0.0
    %v4617 = vand.u32 %v4033, 4294901760
    %4618 = vmatpush1.msra.mxu0 %v4617
    %4619 = vmatprep.subr.mxu0 0.0
    %v4620 = vand.u32 %v4032, 4294901760
    %4621 = vmatpush1.msra.mxu0 %v4620
    %4622 = vmatprep.subr.mxu0 0.0
    %v4623 = vand.u32 %v4031, 4294901760
    %4624 = vmatpush1.msra.mxu0 %v4623
    %4625 = vmatprep.subr.mxu0 0.0
    %v4626 = vand.u32 %v4030, 4294901760
    %4627 = vmatpush1.msra.mxu0 %v4626
    %4628 = vmatprep.subr.mxu0 0.0
    %v4629 = vand.u32 %v4029, 4294901760
    %4630 = vmatpush1.msra.mxu0 %v4629
    %4631 = vmatprep.subr.mxu0 0.0
    %v4632 = vand.u32 %v4028, 4294901760
    %4633 = vmatpush1.msra.mxu0 %v4632
    %4634 = vmatprep.subr.mxu0 0.0
    %v4635 = vand.u32 %v4027, 4294901760
    %4636 = vmatpush1.msra.mxu0 %v4635
    %4637 = vmatprep.subr.mxu0 0.0
    %v4638 = vand.u32 %v4026, 4294901760
    %4639 = vmatpush1.msra.mxu0 %v4638
    %4640 = vmatprep.subr.mxu0 0.0
    %v4641 = vand.u32 %v4025, 4294901760
    %4642 = vmatpush1.msra.mxu0 %v4641
    %4643 = vmatprep.subr.mxu0 0.0
    %4644 = vmatpush2.msra.mxu0 0.0
    %4645 = vmatprep.subr.mxu0 0.0
    %4646 = vmatpush2.msra.mxu0 0.0
    %4647 = vmatprep.subr.mxu0 0.0
    %4648 = vmatpush2.msra.mxu0 0.0
    %4649 = vmatprep.subr.mxu0 0.0
    %4650 = vmatpush2.msra.mxu0 0.0
    %4651 = vmatprep.subr.mxu0 0.0
    %4652 = vmatpush2.msra.mxu0 0.0
    %4653 = vmatprep.subr.mxu0 0.0
    %4654 = vmatpush2.msra.mxu0 0.0
    %4655 = vmatprep.subr.mxu0 0.0
    %4656 = vmatpush2.msra.mxu0 0.0
    %4657 = vmatprep.subr.mxu0 0.0
    %4658 = vmatpush2.msra.mxu0 0.0
    %4659 = vmatprep.subr.mxu0 0.0
    %4660 = vmatpush2.msra.mxu0 0.0
    %4661 = vmatprep.subr.mxu0 0.0
    %4662 = vmatpush2.msra.mxu0 0.0
    %4663 = vmatprep.subr.mxu0 0.0
    %4664 = vmatpush2.msra.mxu0 0.0
    %4665 = vmatprep.subr.mxu0 0.0
    %4666 = vmatpush2.msra.mxu0 0.0
    %4667 = vmatprep.subr.mxu0 0.0
    %4668 = vmatpush2.msra.mxu0 0.0
    %4669 = vmatprep.subr.mxu0 0.0
    %4670 = vmatpush2.msra.mxu0 0.0
    %4671 = vmatprep.subr.mxu0 0.0
    %4672 = vmatpush2.msra.mxu0 0.0
    %4673 = vmatprep.subr.mxu0 0.0
    %4674 = vmatpush2.msra.mxu0 0.0
    %4675 = vmatprep.mubr.f32.mxu0 0.0
    %v4676 = vand.u32 %v46, 4294901760
    %4677 = vmatmul.mubr.f32.gmra.mxu0 %v4676
    %v4678 = vpop.f32.mrf.mxu0
    %v4679 = vadd.f32 %v4592, %v4678
    %v4680 = vpop.f32.mrf.mxu0
    %4681 = vdwg.mxu0
    %v4682 = vmul.f32 %v4679, %v46
    %4683 = vadd.xlane.f32.xlu0 %v4682
    %v4684 = vpop.xlane.xlu0 %4683
    %v4685 = vmul.f32 %v4684, 0.5
    %v4686 = vadd.f32 %v4685, 98.55802
    %s4687 = scalar_lea.vmem [#allocation5], 896
    %v4688 = vld [vmem:[%s4687] sm:$0xff]
    %v4689 = vld [vmem:[%s4687 + $0x8] sm:$0xff]
    %v4690 = vld [vmem:[%s4687 + $0x10] sm:$0xff]
    %v4691 = vld [vmem:[%s4687 + $0x18] sm:$0xff]
    %v4692 = vld [vmem:[%s4687 + $0x20] sm:$0xff]
    %v4693 = vld [vmem:[%s4687 + $0x28] sm:$0xff]
    %v4694 = vld [vmem:[%s4687 + $0x30] sm:$0xff]
    %v4695 = vld [vmem:[%s4687 + $0x38] sm:$0xff]
    %v4696 = vld [vmem:[%s4687 + $0x40] sm:$0xff]
    %v4697 = vld [vmem:[%s4687 + $0x48] sm:$0xff]
    %v4698 = vld [vmem:[%s4687 + $0x50] sm:$0xff]
    %v4699 = vld [vmem:[%s4687 + $0x58] sm:$0xff]
    %v4700 = vld [vmem:[%s4687 + $0x60] sm:$0xff]
    %v4701 = vld [vmem:[%s4687 + $0x68] sm:$0xff]
    %v4702 = vld [vmem:[%s4687 + $0x70] sm:$0xff]
    %v4703 = vld [vmem:[%s4687 + $0x78] sm:$0xff]
    %4704 = vmatprep.subr.mxu0 0.0
    %v4705 = vand.u32 %v4703, 4294901760
    %4706 = vmatpush1.msra.mxu0 %v4705
    %4707 = vmatprep.subr.mxu0 0.0
    %v4708 = vand.u32 %v4702, 4294901760
    %4709 = vmatpush1.msra.mxu0 %v4708
    %4710 = vmatprep.subr.mxu0 0.0
    %v4711 = vand.u32 %v4701, 4294901760
    %4712 = vmatpush1.msra.mxu0 %v4711
    %4713 = vmatprep.subr.mxu0 0.0
    %v4714 = vand.u32 %v4700, 4294901760
    %4715 = vmatpush1.msra.mxu0 %v4714
    %4716 = vmatprep.subr.mxu0 0.0
    %v4717 = vand.u32 %v4699, 4294901760
    %4718 = vmatpush1.msra.mxu0 %v4717
    %4719 = vmatprep.subr.mxu0 0.0
    %v4720 = vand.u32 %v4698, 4294901760
    %4721 = vmatpush1.msra.mxu0 %v4720
    %4722 = vmatprep.subr.mxu0 0.0
    %v4723 = vand.u32 %v4697, 4294901760
    %4724 = vmatpush1.msra.mxu0 %v4723
    %4725 = vmatprep.subr.mxu0 0.0
    %v4726 = vand.u32 %v4696, 4294901760
    %4727 = vmatpush1.msra.mxu0 %v4726
    %4728 = vmatprep.subr.mxu0 0.0
    %v4729 = vand.u32 %v4695, 4294901760
    %4730 = vmatpush1.msra.mxu0 %v4729
    %4731 = vmatprep.subr.mxu0 0.0
    %v4732 = vand.u32 %v4694, 4294901760
    %4733 = vmatpush1.msra.mxu0 %v4732
    %4734 = vmatprep.subr.mxu0 0.0
    %v4735 = vand.u32 %v4693, 4294901760
    %4736 = vmatpush1.msra.mxu0 %v4735
    %4737 = vmatprep.subr.mxu0 0.0
    %v4738 = vand.u32 %v4692, 4294901760
    %4739 = vmatpush1.msra.mxu0 %v4738
    %4740 = vmatprep.subr.mxu0 0.0
    %v4741 = vand.u32 %v4691, 4294901760
    %4742 = vmatpush1.msra.mxu0 %v4741
    %4743 = vmatprep.subr.mxu0 0.0
    %v4744 = vand.u32 %v4690, 4294901760
    %4745 = vmatpush1.msra.mxu0 %v4744
    %4746 = vmatprep.subr.mxu0 0.0
    %v4747 = vand.u32 %v4689, 4294901760
    %4748 = vmatpush1.msra.mxu0 %v4747
    %4749 = vmatprep.subr.mxu0 0.0
    %v4750 = vand.u32 %v4688, 4294901760
    %4751 = vmatpush1.msra.mxu0 %v4750
    %4752 = vmatprep.subr.mxu0 0.0
    %4753 = vmatpush2.msra.mxu0 0.0
    %4754 = vmatprep.subr.mxu0 0.0
    %4755 = vmatpush2.msra.mxu0 0.0
    %4756 = vmatprep.subr.mxu0 0.0
    %4757 = vmatpush2.msra.mxu0 0.0
    %4758 = vmatprep.subr.mxu0 0.0
    %4759 = vmatpush2.msra.mxu0 0.0
    %4760 = vmatprep.subr.mxu0 0.0
    %4761 = vmatpush2.msra.mxu0 0.0
    %4762 = vmatprep.subr.mxu0 0.0
    %4763 = vmatpush2.msra.mxu0 0.0
    %4764 = vmatprep.subr.mxu0 0.0
    %4765 = vmatpush2.msra.mxu0 0.0
    %4766 = vmatprep.subr.mxu0 0.0
    %4767 = vmatpush2.msra.mxu0 0.0
    %4768 = vmatprep.subr.mxu0 0.0
    %4769 = vmatpush2.msra.mxu0 0.0
    %4770 = vmatprep.subr.mxu0 0.0
    %4771 = vmatpush2.msra.mxu0 0.0
    %4772 = vmatprep.subr.mxu0 0.0
    %4773 = vmatpush2.msra.mxu0 0.0
    %4774 = vmatprep.subr.mxu0 0.0
    %4775 = vmatpush2.msra.mxu0 0.0
    %4776 = vmatprep.subr.mxu0 0.0
    %4777 = vmatpush2.msra.mxu0 0.0
    %4778 = vmatprep.subr.mxu0 0.0
    %4779 = vmatpush2.msra.mxu0 0.0
    %4780 = vmatprep.subr.mxu0 0.0
    %4781 = vmatpush2.msra.mxu0 0.0
    %4782 = vmatprep.subr.mxu0 0.0
    %4783 = vmatpush2.msra.mxu0 0.0
    %4784 = vmatprep.mubr.f32.mxu0 0.0
    %v4785 = vand.u32 %v46, 4294901760
    %v4786 = vsub.f32 %v46, %v4785
    %v4787 = vand.u32 %v4786, 4294901760
    %v4788 = vsub.f32 %v4786, %v4787
    %v4789 = vand.u32 %v4788, 4294901760
    %4790 = vmatmul.mubr.f32.gmra.mxu0 %v4789
    %v4791 = vpop.f32.mrf.mxu0
    %v4792 = vadd.f32 0.0, %v4791
    %v4793 = vpop.f32.mrf.mxu0
    %4794 = vdwg.mxu0
    %4795 = vmatprep.subr.mxu0 0.0
    %v4796 = vand.u32 %v4703, 4294901760
    %v4797 = vsub.f32 %v4703, %v4796
    %v4798 = vand.u32 %v4797, 4294901760
    %v4799 = vsub.f32 %v4797, %v4798
    %v4800 = vand.u32 %v4799, 4294901760
    %4801 = vmatpush1.msra.mxu0 %v4800
    %4802 = vmatprep.subr.mxu0 0.0
    %v4803 = vand.u32 %v4702, 4294901760
    %v4804 = vsub.f32 %v4702, %v4803
    %v4805 = vand.u32 %v4804, 4294901760
    %v4806 = vsub.f32 %v4804, %v4805
    %v4807 = vand.u32 %v4806, 4294901760
    %4808 = vmatpush1.msra.mxu0 %v4807
    %4809 = vmatprep.subr.mxu0 0.0
    %v4810 = vand.u32 %v4701, 4294901760
    %v4811 = vsub.f32 %v4701, %v4810
    %v4812 = vand.u32 %v4811, 4294901760
    %v4813 = vsub.f32 %v4811, %v4812
    %v4814 = vand.u32 %v4813, 4294901760
    %4815 = vmatpush1.msra.mxu0 %v4814
    %4816 = vmatprep.subr.mxu0 0.0
    %v4817 = vand.u32 %v4700, 4294901760
    %v4818 = vsub.f32 %v4700, %v4817
    %v4819 = vand.u32 %v4818, 4294901760
    %v4820 = vsub.f32 %v4818, %v4819
    %v4821 = vand.u32 %v4820, 4294901760
    %4822 = vmatpush1.msra.mxu0 %v4821
    %4823 = vmatprep.subr.mxu0 0.0
    %v4824 = vand.u32 %v4699, 4294901760
    %v4825 = vsub.f32 %v4699, %v4824
    %v4826 = vand.u32 %v4825, 4294901760
    %v4827 = vsub.f32 %v4825, %v4826
    %v4828 = vand.u32 %v4827, 4294901760
    %4829 = vmatpush1.msra.mxu0 %v4828
    %4830 = vmatprep.subr.mxu0 0.0
    %v4831 = vand.u32 %v4698, 4294901760
    %v4832 = vsub.f32 %v4698, %v4831
    %v4833 = vand.u32 %v4832, 4294901760
    %v4834 = vsub.f32 %v4832, %v4833
    %v4835 = vand.u32 %v4834, 4294901760
    %4836 = vmatpush1.msra.mxu0 %v4835
    %4837 = vmatprep.subr.mxu0 0.0
    %v4838 = vand.u32 %v4697, 4294901760
    %v4839 = vsub.f32 %v4697, %v4838
    %v4840 = vand.u32 %v4839, 4294901760
    %v4841 = vsub.f32 %v4839, %v4840
    %v4842 = vand.u32 %v4841, 4294901760
    %4843 = vmatpush1.msra.mxu0 %v4842
    %4844 = vmatprep.subr.mxu0 0.0
    %v4845 = vand.u32 %v4696, 4294901760
    %v4846 = vsub.f32 %v4696, %v4845
    %v4847 = vand.u32 %v4846, 4294901760
    %v4848 = vsub.f32 %v4846, %v4847
    %v4849 = vand.u32 %v4848, 4294901760
    %4850 = vmatpush1.msra.mxu0 %v4849
    %4851 = vmatprep.subr.mxu0 0.0
    %v4852 = vand.u32 %v4695, 4294901760
    %v4853 = vsub.f32 %v4695, %v4852
    %v4854 = vand.u32 %v4853, 4294901760
    %v4855 = vsub.f32 %v4853, %v4854
    %v4856 = vand.u32 %v4855, 4294901760
    %4857 = vmatpush1.msra.mxu0 %v4856
    %4858 = vmatprep.subr.mxu0 0.0
    %v4859 = vand.u32 %v4694, 4294901760
    %v4860 = vsub.f32 %v4694, %v4859
    %v4861 = vand.u32 %v4860, 4294901760
    %v4862 = vsub.f32 %v4860, %v4861
    %v4863 = vand.u32 %v4862, 4294901760
    %4864 = vmatpush1.msra.mxu0 %v4863
    %4865 = vmatprep.subr.mxu0 0.0
    %v4866 = vand.u32 %v4693, 4294901760
    %v4867 = vsub.f32 %v4693, %v4866
    %v4868 = vand.u32 %v4867, 4294901760
    %v4869 = vsub.f32 %v4867, %v4868
    %v4870 = vand.u32 %v4869, 4294901760
    %4871 = vmatpush1.msra.mxu0 %v4870
    %4872 = vmatprep.subr.mxu0 0.0
    %v4873 = vand.u32 %v4692, 4294901760
    %v4874 = vsub.f32 %v4692, %v4873
    %v4875 = vand.u32 %v4874, 4294901760
    %v4876 = vsub.f32 %v4874, %v4875
    %v4877 = vand.u32 %v4876, 4294901760
    %4878 = vmatpush1.msra.mxu0 %v4877
    %4879 = vmatprep.subr.mxu0 0.0
    %v4880 = vand.u32 %v4691, 4294901760
    %v4881 = vsub.f32 %v4691, %v4880
    %v4882 = vand.u32 %v4881, 4294901760
    %v4883 = vsub.f32 %v4881, %v4882
    %v4884 = vand.u32 %v4883, 4294901760
    %4885 = vmatpush1.msra.mxu0 %v4884
    %4886 = vmatprep.subr.mxu0 0.0
    %v4887 = vand.u32 %v4690, 4294901760
    %v4888 = vsub.f32 %v4690, %v4887
    %v4889 = vand.u32 %v4888, 4294901760
    %v4890 = vsub.f32 %v4888, %v4889
    %v4891 = vand.u32 %v4890, 4294901760
    %4892 = vmatpush1.msra.mxu0 %v4891
    %4893 = vmatprep.subr.mxu0 0.0
    %v4894 = vand.u32 %v4689, 4294901760
    %v4895 = vsub.f32 %v4689, %v4894
    %v4896 = vand.u32 %v4895, 4294901760
    %v4897 = vsub.f32 %v4895, %v4896
    %v4898 = vand.u32 %v4897, 4294901760
    %4899 = vmatpush1.msra.mxu0 %v4898
    %4900 = vmatprep.subr.mxu0 0.0
    %v4901 = vand.u32 %v4688, 4294901760
    %v4902 = vsub.f32 %v4688, %v4901
    %v4903 = vand.u32 %v4902, 4294901760
    %v4904 = vsub.f32 %v4902, %v4903
    %v4905 = vand.u32 %v4904, 4294901760
    %4906 = vmatpush1.msra.mxu0 %v4905
    %4907 = vmatprep.subr.mxu0 0.0
    %4908 = vmatpush2.msra.mxu0 0.0
    %4909 = vmatprep.subr.mxu0 0.0
    %4910 = vmatpush2.msra.mxu0 0.0
    %4911 = vmatprep.subr.mxu0 0.0
    %4912 = vmatpush2.msra.mxu0 0.0
    %4913 = vmatprep.subr.mxu0 0.0
    %4914 = vmatpush2.msra.mxu0 0.0
    %4915 = vmatprep.subr.mxu0 0.0
    %4916 = vmatpush2.msra.mxu0 0.0
    %4917 = vmatprep.subr.mxu0 0.0
    %4918 = vmatpush2.msra.mxu0 0.0
    %4919 = vmatprep.subr.mxu0 0.0
    %4920 = vmatpush2.msra.mxu0 0.0
    %4921 = vmatprep.subr.mxu0 0.0
    %4922 = vmatpush2.msra.mxu0 0.0
    %4923 = vmatprep.subr.mxu0 0.0
    %4924 = vmatpush2.msra.mxu0 0.0
    %4925 = vmatprep.subr.mxu0 0.0
    %4926 = vmatpush2.msra.mxu0 0.0
    %4927 = vmatprep.subr.mxu0 0.0
    %4928 = vmatpush2.msra.mxu0 0.0
    %4929 = vmatprep.subr.mxu0 0.0
    %4930 = vmatpush2.msra.mxu0 0.0
    %4931 = vmatprep.subr.mxu0 0.0
    %4932 = vmatpush2.msra.mxu0 0.0
    %4933 = vmatprep.subr.mxu0 0.0
    %4934 = vmatpush2.msra.mxu0 0.0
    %4935 = vmatprep.subr.mxu0 0.0
    %4936 = vmatpush2.msra.mxu0 0.0
    %4937 = vmatprep.subr.mxu0 0.0
    %4938 = vmatpush2.msra.mxu0 0.0
    %4939 = vmatprep.mubr.f32.mxu0 0.0
    %v4940 = vand.u32 %v46, 4294901760
    %4941 = vmatmul.mubr.f32.gmra.mxu0 %v4940
    %v4942 = vpop.f32.mrf.mxu0
    %v4943 = vadd.f32 %v4792, %v4942
    %v4944 = vpop.f32.mrf.mxu0
    %4945 = vdwg.mxu0
    %4946 = vmatprep.subr.mxu0 0.0
    %v4947 = vand.u32 %v4703, 4294901760
    %v4948 = vsub.f32 %v4703, %v4947
    %4949 = vmatpush1.msra.mxu0 %v4948
    %4950 = vmatprep.subr.mxu0 0.0
    %v4951 = vand.u32 %v4702, 4294901760
    %v4952 = vsub.f32 %v4702, %v4951
    %4953 = vmatpush1.msra.mxu0 %v4952
    %4954 = vmatprep.subr.mxu0 0.0
    %v4955 = vand.u32 %v4701, 4294901760
    %v4956 = vsub.f32 %v4701, %v4955
    %4957 = vmatpush1.msra.mxu0 %v4956
    %4958 = vmatprep.subr.mxu0 0.0
    %v4959 = vand.u32 %v4700, 4294901760
    %v4960 = vsub.f32 %v4700, %v4959
    %4961 = vmatpush1.msra.mxu0 %v4960
    %4962 = vmatprep.subr.mxu0 0.0
    %v4963 = vand.u32 %v4699, 4294901760
    %v4964 = vsub.f32 %v4699, %v4963
    %4965 = vmatpush1.msra.mxu0 %v4964
    %4966 = vmatprep.subr.mxu0 0.0
    %v4967 = vand.u32 %v4698, 4294901760
    %v4968 = vsub.f32 %v4698, %v4967
    %4969 = vmatpush1.msra.mxu0 %v4968
    %4970 = vmatprep.subr.mxu0 0.0
    %v4971 = vand.u32 %v4697, 4294901760
    %v4972 = vsub.f32 %v4697, %v4971
    %4973 = vmatpush1.msra.mxu0 %v4972
    %4974 = vmatprep.subr.mxu0 0.0
    %v4975 = vand.u32 %v4696, 4294901760
    %v4976 = vsub.f32 %v4696, %v4975
    %4977 = vmatpush1.msra.mxu0 %v4976
    %4978 = vmatprep.subr.mxu0 0.0
    %v4979 = vand.u32 %v4695, 4294901760
    %v4980 = vsub.f32 %v4695, %v4979
    %4981 = vmatpush1.msra.mxu0 %v4980
    %4982 = vmatprep.subr.mxu0 0.0
    %v4983 = vand.u32 %v4694, 4294901760
    %v4984 = vsub.f32 %v4694, %v4983
    %4985 = vmatpush1.msra.mxu0 %v4984
    %4986 = vmatprep.subr.mxu0 0.0
    %v4987 = vand.u32 %v4693, 4294901760
    %v4988 = vsub.f32 %v4693, %v4987
    %4989 = vmatpush1.msra.mxu0 %v4988
    %4990 = vmatprep.subr.mxu0 0.0
    %v4991 = vand.u32 %v4692, 4294901760
    %v4992 = vsub.f32 %v4692, %v4991
    %4993 = vmatpush1.msra.mxu0 %v4992
    %4994 = vmatprep.subr.mxu0 0.0
    %v4995 = vand.u32 %v4691, 4294901760
    %v4996 = vsub.f32 %v4691, %v4995
    %4997 = vmatpush1.msra.mxu0 %v4996
    %4998 = vmatprep.subr.mxu0 0.0
    %v4999 = vand.u32 %v4690, 4294901760
    %v5000 = vsub.f32 %v4690, %v4999
    %5001 = vmatpush1.msra.mxu0 %v5000
    %5002 = vmatprep.subr.mxu0 0.0
    %v5003 = vand.u32 %v4689, 4294901760
    %v5004 = vsub.f32 %v4689, %v5003
    %5005 = vmatpush1.msra.mxu0 %v5004
    %5006 = vmatprep.subr.mxu0 0.0
    %v5007 = vand.u32 %v4688, 4294901760
    %v5008 = vsub.f32 %v4688, %v5007
    %5009 = vmatpush1.msra.mxu0 %v5008
    %5010 = vmatprep.subr.mxu0 0.0
    %5011 = vmatpush2.msra.mxu0 0.0
    %5012 = vmatprep.subr.mxu0 0.0
    %5013 = vmatpush2.msra.mxu0 0.0
    %5014 = vmatprep.subr.mxu0 0.0
    %5015 = vmatpush2.msra.mxu0 0.0
    %5016 = vmatprep.subr.mxu0 0.0
    %5017 = vmatpush2.msra.mxu0 0.0
    %5018 = vmatprep.subr.mxu0 0.0
    %5019 = vmatpush2.msra.mxu0 0.0
    %5020 = vmatprep.subr.mxu0 0.0
    %5021 = vmatpush2.msra.mxu0 0.0
    %5022 = vmatprep.subr.mxu0 0.0
    %5023 = vmatpush2.msra.mxu0 0.0
    %5024 = vmatprep.subr.mxu0 0.0
    %5025 = vmatpush2.msra.mxu0 0.0
    %5026 = vmatprep.subr.mxu0 0.0
    %5027 = vmatpush2.msra.mxu0 0.0
    %5028 = vmatprep.subr.mxu0 0.0
    %5029 = vmatpush2.msra.mxu0 0.0
    %5030 = vmatprep.subr.mxu0 0.0
    %5031 = vmatpush2.msra.mxu0 0.0
    %5032 = vmatprep.subr.mxu0 0.0
    %5033 = vmatpush2.msra.mxu0 0.0
    %5034 = vmatprep.subr.mxu0 0.0
    %5035 = vmatpush2.msra.mxu0 0.0
    %5036 = vmatprep.subr.mxu0 0.0
    %5037 = vmatpush2.msra.mxu0 0.0
    %5038 = vmatprep.subr.mxu0 0.0
    %5039 = vmatpush2.msra.mxu0 0.0
    %5040 = vmatprep.subr.mxu0 0.0
    %5041 = vmatpush2.msra.mxu0 0.0
    %5042 = vmatprep.mubr.f32.mxu0 0.0
    %v5043 = vand.u32 %v46, 4294901760
    %v5044 = vsub.f32 %v46, %v5043
    %5045 = vmatmul.mubr.f32.gmra.mxu0 %v5044
    %v5046 = vpop.f32.mrf.mxu0
    %v5047 = vadd.f32 %v4943, %v5046
    %v5048 = vpop.f32.mrf.mxu0
    %5049 = vdwg.mxu0
    %5050 = vmatprep.subr.mxu0 0.0
    %v5051 = vand.u32 %v4703, 4294901760
    %5052 = vmatpush1.msra.mxu0 %v5051
    %5053 = vmatprep.subr.mxu0 0.0
    %v5054 = vand.u32 %v4702, 4294901760
    %5055 = vmatpush1.msra.mxu0 %v5054
    %5056 = vmatprep.subr.mxu0 0.0
    %v5057 = vand.u32 %v4701, 4294901760
    %5058 = vmatpush1.msra.mxu0 %v5057
    %5059 = vmatprep.subr.mxu0 0.0
    %v5060 = vand.u32 %v4700, 4294901760
    %5061 = vmatpush1.msra.mxu0 %v5060
    %5062 = vmatprep.subr.mxu0 0.0
    %v5063 = vand.u32 %v4699, 4294901760
    %5064 = vmatpush1.msra.mxu0 %v5063
    %5065 = vmatprep.subr.mxu0 0.0
    %v5066 = vand.u32 %v4698, 4294901760
    %5067 = vmatpush1.msra.mxu0 %v5066
    %5068 = vmatprep.subr.mxu0 0.0
    %v5069 = vand.u32 %v4697, 4294901760
    %5070 = vmatpush1.msra.mxu0 %v5069
    %5071 = vmatprep.subr.mxu0 0.0
    %v5072 = vand.u32 %v4696, 4294901760
    %5073 = vmatpush1.msra.mxu0 %v5072
    %5074 = vmatprep.subr.mxu0 0.0
    %v5075 = vand.u32 %v4695, 4294901760
    %5076 = vmatpush1.msra.mxu0 %v5075
    %5077 = vmatprep.subr.mxu0 0.0
    %v5078 = vand.u32 %v4694, 4294901760
    %5079 = vmatpush1.msra.mxu0 %v5078
    %5080 = vmatprep.subr.mxu0 0.0
    %v5081 = vand.u32 %v4693, 4294901760
    %5082 = vmatpush1.msra.mxu0 %v5081
    %5083 = vmatprep.subr.mxu0 0.0
    %v5084 = vand.u32 %v4692, 4294901760
    %5085 = vmatpush1.msra.mxu0 %v5084
    %5086 = vmatprep.subr.mxu0 0.0
    %v5087 = vand.u32 %v4691, 4294901760
    %5088 = vmatpush1.msra.mxu0 %v5087
    %5089 = vmatprep.subr.mxu0 0.0
    %v5090 = vand.u32 %v4690, 4294901760
    %5091 = vmatpush1.msra.mxu0 %v5090
    %5092 = vmatprep.subr.mxu0 0.0
    %v5093 = vand.u32 %v4689, 4294901760
    %5094 = vmatpush1.msra.mxu0 %v5093
    %5095 = vmatprep.subr.mxu0 0.0
    %v5096 = vand.u32 %v4688, 4294901760
    %5097 = vmatpush1.msra.mxu0 %v5096
    %5098 = vmatprep.subr.mxu0 0.0
    %5099 = vmatpush2.msra.mxu0 0.0
    %5100 = vmatprep.subr.mxu0 0.0
    %5101 = vmatpush2.msra.mxu0 0.0
    %5102 = vmatprep.subr.mxu0 0.0
    %5103 = vmatpush2.msra.mxu0 0.0
    %5104 = vmatprep.subr.mxu0 0.0
    %5105 = vmatpush2.msra.mxu0 0.0
    %5106 = vmatprep.subr.mxu0 0.0
    %5107 = vmatpush2.msra.mxu0 0.0
    %5108 = vmatprep.subr.mxu0 0.0
    %5109 = vmatpush2.msra.mxu0 0.0
    %5110 = vmatprep.subr.mxu0 0.0
    %5111 = vmatpush2.msra.mxu0 0.0
    %5112 = vmatprep.subr.mxu0 0.0
    %5113 = vmatpush2.msra.mxu0 0.0
    %5114 = vmatprep.subr.mxu0 0.0
    %5115 = vmatpush2.msra.mxu0 0.0
    %5116 = vmatprep.subr.mxu0 0.0
    %5117 = vmatpush2.msra.mxu0 0.0
    %5118 = vmatprep.subr.mxu0 0.0
    %5119 = vmatpush2.msra.mxu0 0.0
    %5120 = vmatprep.subr.mxu0 0.0
    %5121 = vmatpush2.msra.mxu0 0.0
    %5122 = vmatprep.subr.mxu0 0.0
    %5123 = vmatpush2.msra.mxu0 0.0
    %5124 = vmatprep.subr.mxu0 0.0
    %5125 = vmatpush2.msra.mxu0 0.0
    %5126 = vmatprep.subr.mxu0 0.0
    %5127 = vmatpush2.msra.mxu0 0.0
    %5128 = vmatprep.subr.mxu0 0.0
    %5129 = vmatpush2.msra.mxu0 0.0
    %5130 = vmatprep.mubr.f32.mxu0 0.0
    %v5131 = vand.u32 %v46, 4294901760
    %v5132 = vsub.f32 %v46, %v5131
    %v5133 = vand.u32 %v5132, 4294901760
    %5134 = vmatmul.mubr.f32.gmra.mxu0 %v5133
    %v5135 = vpop.f32.mrf.mxu0
    %v5136 = vadd.f32 %v5047, %v5135
    %v5137 = vpop.f32.mrf.mxu0
    %5138 = vdwg.mxu0
    %5139 = vmatprep.subr.mxu0 0.0
    %v5140 = vand.u32 %v4703, 4294901760
    %v5141 = vsub.f32 %v4703, %v5140
    %v5142 = vand.u32 %v5141, 4294901760
    %5143 = vmatpush1.msra.mxu0 %v5142
    %5144 = vmatprep.subr.mxu0 0.0
    %v5145 = vand.u32 %v4702, 4294901760
    %v5146 = vsub.f32 %v4702, %v5145
    %v5147 = vand.u32 %v5146, 4294901760
    %5148 = vmatpush1.msra.mxu0 %v5147
    %5149 = vmatprep.subr.mxu0 0.0
    %v5150 = vand.u32 %v4701, 4294901760
    %v5151 = vsub.f32 %v4701, %v5150
    %v5152 = vand.u32 %v5151, 4294901760
    %5153 = vmatpush1.msra.mxu0 %v5152
    %5154 = vmatprep.subr.mxu0 0.0
    %v5155 = vand.u32 %v4700, 4294901760
    %v5156 = vsub.f32 %v4700, %v5155
    %v5157 = vand.u32 %v5156, 4294901760
    %5158 = vmatpush1.msra.mxu0 %v5157
    %5159 = vmatprep.subr.mxu0 0.0
    %v5160 = vand.u32 %v4699, 4294901760
    %v5161 = vsub.f32 %v4699, %v5160
    %v5162 = vand.u32 %v5161, 4294901760
    %5163 = vmatpush1.msra.mxu0 %v5162
    %5164 = vmatprep.subr.mxu0 0.0
    %v5165 = vand.u32 %v4698, 4294901760
    %v5166 = vsub.f32 %v4698, %v5165
    %v5167 = vand.u32 %v5166, 4294901760
    %5168 = vmatpush1.msra.mxu0 %v5167
    %5169 = vmatprep.subr.mxu0 0.0
    %v5170 = vand.u32 %v4697, 4294901760
    %v5171 = vsub.f32 %v4697, %v5170
    %v5172 = vand.u32 %v5171, 4294901760
    %5173 = vmatpush1.msra.mxu0 %v5172
    %5174 = vmatprep.subr.mxu0 0.0
    %v5175 = vand.u32 %v4696, 4294901760
    %v5176 = vsub.f32 %v4696, %v5175
    %v5177 = vand.u32 %v5176, 4294901760
    %5178 = vmatpush1.msra.mxu0 %v5177
    %5179 = vmatprep.subr.mxu0 0.0
    %v5180 = vand.u32 %v4695, 4294901760
    %v5181 = vsub.f32 %v4695, %v5180
    %v5182 = vand.u32 %v5181, 4294901760
    %5183 = vmatpush1.msra.mxu0 %v5182
    %5184 = vmatprep.subr.mxu0 0.0
    %v5185 = vand.u32 %v4694, 4294901760
    %v5186 = vsub.f32 %v4694, %v5185
    %v5187 = vand.u32 %v5186, 4294901760
    %5188 = vmatpush1.msra.mxu0 %v5187
    %5189 = vmatprep.subr.mxu0 0.0
    %v5190 = vand.u32 %v4693, 4294901760
    %v5191 = vsub.f32 %v4693, %v5190
    %v5192 = vand.u32 %v5191, 4294901760
    %5193 = vmatpush1.msra.mxu0 %v5192
    %5194 = vmatprep.subr.mxu0 0.0
    %v5195 = vand.u32 %v4692, 4294901760
    %v5196 = vsub.f32 %v4692, %v5195
    %v5197 = vand.u32 %v5196, 4294901760
    %5198 = vmatpush1.msra.mxu0 %v5197
    %5199 = vmatprep.subr.mxu0 0.0
    %v5200 = vand.u32 %v4691, 4294901760
    %v5201 = vsub.f32 %v4691, %v5200
    %v5202 = vand.u32 %v5201, 4294901760
    %5203 = vmatpush1.msra.mxu0 %v5202
    %5204 = vmatprep.subr.mxu0 0.0
    %v5205 = vand.u32 %v4690, 4294901760
    %v5206 = vsub.f32 %v4690, %v5205
    %v5207 = vand.u32 %v5206, 4294901760
    %5208 = vmatpush1.msra.mxu0 %v5207
    %5209 = vmatprep.subr.mxu0 0.0
    %v5210 = vand.u32 %v4689, 4294901760
    %v5211 = vsub.f32 %v4689, %v5210
    %v5212 = vand.u32 %v5211, 4294901760
    %5213 = vmatpush1.msra.mxu0 %v5212
    %5214 = vmatprep.subr.mxu0 0.0
    %v5215 = vand.u32 %v4688, 4294901760
    %v5216 = vsub.f32 %v4688, %v5215
    %v5217 = vand.u32 %v5216, 4294901760
    %5218 = vmatpush1.msra.mxu0 %v5217
    %5219 = vmatprep.subr.mxu0 0.0
    %5220 = vmatpush2.msra.mxu0 0.0
    %5221 = vmatprep.subr.mxu0 0.0
    %5222 = vmatpush2.msra.mxu0 0.0
    %5223 = vmatprep.subr.mxu0 0.0
    %5224 = vmatpush2.msra.mxu0 0.0
    %5225 = vmatprep.subr.mxu0 0.0
    %5226 = vmatpush2.msra.mxu0 0.0
    %5227 = vmatprep.subr.mxu0 0.0
    %5228 = vmatpush2.msra.mxu0 0.0
    %5229 = vmatprep.subr.mxu0 0.0
    %5230 = vmatpush2.msra.mxu0 0.0
    %5231 = vmatprep.subr.mxu0 0.0
    %5232 = vmatpush2.msra.mxu0 0.0
    %5233 = vmatprep.subr.mxu0 0.0
    %5234 = vmatpush2.msra.mxu0 0.0
    %5235 = vmatprep.subr.mxu0 0.0
    %5236 = vmatpush2.msra.mxu0 0.0
    %5237 = vmatprep.subr.mxu0 0.0
    %5238 = vmatpush2.msra.mxu0 0.0
    %5239 = vmatprep.subr.mxu0 0.0
    %5240 = vmatpush2.msra.mxu0 0.0
    %5241 = vmatprep.subr.mxu0 0.0
    %5242 = vmatpush2.msra.mxu0 0.0
    %5243 = vmatprep.subr.mxu0 0.0
    %5244 = vmatpush2.msra.mxu0 0.0
    %5245 = vmatprep.subr.mxu0 0.0
    %5246 = vmatpush2.msra.mxu0 0.0
    %5247 = vmatprep.subr.mxu0 0.0
    %5248 = vmatpush2.msra.mxu0 0.0
    %5249 = vmatprep.subr.mxu0 0.0
    %5250 = vmatpush2.msra.mxu0 0.0
    %5251 = vmatprep.mubr.f32.mxu0 0.0
    %v5252 = vand.u32 %v46, 4294901760
    %5253 = vmatmul.mubr.f32.gmra.mxu0 %v5252
    %v5254 = vpop.f32.mrf.mxu0
    %v5255 = vadd.f32 %v5136, %v5254
    %v5256 = vpop.f32.mrf.mxu0
    %5257 = vdwg.mxu0
    %5258 = vmatprep.subr.mxu0 0.0
    %v5259 = vand.u32 %v4703, 4294901760
    %5260 = vmatpush1.msra.mxu0 %v5259
    %5261 = vmatprep.subr.mxu0 0.0
    %v5262 = vand.u32 %v4702, 4294901760
    %5263 = vmatpush1.msra.mxu0 %v5262
    %5264 = vmatprep.subr.mxu0 0.0
    %v5265 = vand.u32 %v4701, 4294901760
    %5266 = vmatpush1.msra.mxu0 %v5265
    %5267 = vmatprep.subr.mxu0 0.0
    %v5268 = vand.u32 %v4700, 4294901760
    %5269 = vmatpush1.msra.mxu0 %v5268
    %5270 = vmatprep.subr.mxu0 0.0
    %v5271 = vand.u32 %v4699, 4294901760
    %5272 = vmatpush1.msra.mxu0 %v5271
    %5273 = vmatprep.subr.mxu0 0.0
    %v5274 = vand.u32 %v4698, 4294901760
    %5275 = vmatpush1.msra.mxu0 %v5274
    %5276 = vmatprep.subr.mxu0 0.0
    %v5277 = vand.u32 %v4697, 4294901760
    %5278 = vmatpush1.msra.mxu0 %v5277
    %5279 = vmatprep.subr.mxu0 0.0
    %v5280 = vand.u32 %v4696, 4294901760
    %5281 = vmatpush1.msra.mxu0 %v5280
    %5282 = vmatprep.subr.mxu0 0.0
    %v5283 = vand.u32 %v4695, 4294901760
    %5284 = vmatpush1.msra.mxu0 %v5283
    %5285 = vmatprep.subr.mxu0 0.0
    %v5286 = vand.u32 %v4694, 4294901760
    %5287 = vmatpush1.msra.mxu0 %v5286
    %5288 = vmatprep.subr.mxu0 0.0
    %v5289 = vand.u32 %v4693, 4294901760
    %5290 = vmatpush1.msra.mxu0 %v5289
    %5291 = vmatprep.subr.mxu0 0.0
    %v5292 = vand.u32 %v4692, 4294901760
    %5293 = vmatpush1.msra.mxu0 %v5292
    %5294 = vmatprep.subr.mxu0 0.0
    %v5295 = vand.u32 %v4691, 4294901760
    %5296 = vmatpush1.msra.mxu0 %v5295
    %5297 = vmatprep.subr.mxu0 0.0
    %v5298 = vand.u32 %v4690, 4294901760
    %5299 = vmatpush1.msra.mxu0 %v5298
    %5300 = vmatprep.subr.mxu0 0.0
    %v5301 = vand.u32 %v4689, 4294901760
    %5302 = vmatpush1.msra.mxu0 %v5301
    %5303 = vmatprep.subr.mxu0 0.0
    %v5304 = vand.u32 %v4688, 4294901760
    %5305 = vmatpush1.msra.mxu0 %v5304
    %5306 = vmatprep.subr.mxu0 0.0
    %5307 = vmatpush2.msra.mxu0 0.0
    %5308 = vmatprep.subr.mxu0 0.0
    %5309 = vmatpush2.msra.mxu0 0.0
    %5310 = vmatprep.subr.mxu0 0.0
    %5311 = vmatpush2.msra.mxu0 0.0
    %5312 = vmatprep.subr.mxu0 0.0
    %5313 = vmatpush2.msra.mxu0 0.0
    %5314 = vmatprep.subr.mxu0 0.0
    %5315 = vmatpush2.msra.mxu0 0.0
    %5316 = vmatprep.subr.mxu0 0.0
    %5317 = vmatpush2.msra.mxu0 0.0
    %5318 = vmatprep.subr.mxu0 0.0
    %5319 = vmatpush2.msra.mxu0 0.0
    %5320 = vmatprep.subr.mxu0 0.0
    %5321 = vmatpush2.msra.mxu0 0.0
    %5322 = vmatprep.subr.mxu0 0.0
    %5323 = vmatpush2.msra.mxu0 0.0
    %5324 = vmatprep.subr.mxu0 0.0
    %5325 = vmatpush2.msra.mxu0 0.0
    %5326 = vmatprep.subr.mxu0 0.0
    %5327 = vmatpush2.msra.mxu0 0.0
    %5328 = vmatprep.subr.mxu0 0.0
    %5329 = vmatpush2.msra.mxu0 0.0
    %5330 = vmatprep.subr.mxu0 0.0
    %5331 = vmatpush2.msra.mxu0 0.0
    %5332 = vmatprep.subr.mxu0 0.0
    %5333 = vmatpush2.msra.mxu0 0.0
    %5334 = vmatprep.subr.mxu0 0.0
    %5335 = vmatpush2.msra.mxu0 0.0
    %5336 = vmatprep.subr.mxu0 0.0
    %5337 = vmatpush2.msra.mxu0 0.0
    %5338 = vmatprep.mubr.f32.mxu0 0.0
    %v5339 = vand.u32 %v46, 4294901760
    %5340 = vmatmul.mubr.f32.gmra.mxu0 %v5339
    %v5341 = vpop.f32.mrf.mxu0
    %v5342 = vadd.f32 %v5255, %v5341
    %v5343 = vpop.f32.mrf.mxu0
    %5344 = vdwg.mxu0
    %v5345 = vmul.f32 %v5342, %v46
    %5346 = vadd.xlane.f32.xlu0 %v5345
    %v5347 = vpop.xlane.xlu0 %5346
    %v5348 = vmul.f32 %v5347, 0.5
    %v5349 = vadd.f32 %v5348, 103.84915
    %v5350 = vmin.f32 %v708, %v1371
    %v5351 = vmin.f32 %v2034, %v2697
    %v5352 = vmin.f32 %v3360, %v4023
    %v5353 = vmin.f32 %v4686, %v5349
    %v5354 = vmin.f32 %v5350, %v5351
    %v5355 = vmin.f32 %v5352, %v5353
    %v5356 = vmin.f32 %v5354, %v5355
    %vm5357 = vcmask 7168
    %5358 = vst.msk [vmem:[%s2] sm:$0xff] %vm5357, %v5356
    // Predicated region
    $region18: #{forward.1} parent=1 // pred_check
      _
    $region19: #{forward.1} parent=1 // pred_check_branch
      %5360 = sbr.rel (0) target = $region21
    $region20: #{forward.1} parent=1 // pred_region
      _
    $region21: #{forward.1} parent=1 // pred_fallthru
      _
    // Predicated region
    $region22: #{forward.1} parent=1 // pred_check
      _
    $region23: #{forward.1} parent=1 // pred_check_branch
      %5362 = sbr.rel (0) target = $region25
    $region24: #{forward.1} parent=1 // pred_region
      _
    $region25: #{forward.1} parent=1 // pred_fallthru
      _
    %5363 = vsyncpa [#allocation4], 1
    %5364 = vsyncpa [#allocation6], 1

</llo_original>
